<compile_context>
chip_gen: v5e
topology: v5e:2x2
jax: 0.10.0
libtpu: 0.0.40
codegen_flags: <defaults>
</compile_context>

<pallas_src>
import functools

import jax
import jax.numpy as jnp
from jax import lax
from jax.experimental import pallas as pl
from jax.experimental.pallas import tpu as pltpu


def _round_up(x: int, m: int) -> int:
    return (x + m - 1) // m * m


def _edge_score_kernel(bias_row, h_ref, src_ref, dst_ref, out_ref):
    """One grid step: score `te` edges.

    h_ref   : (Daug_p, Nsub_p) f32  VMEM-resident transposed node features;
              rows [0, D) hold h^T, row `bias_row` holds bias[nid[n]],
              all other rows are zero padding.
    src_ref : (1, te) int32  subgraph-local source node index per edge.
    dst_ref : (1, te) int32  subgraph-local destination node index per edge.
    out_ref : (1, te) f32    pair scores (lane-dense).
    """
    hT = h_ref[...]                                    # (Daug_p, Nsub_p)
    idx_s = src_ref[...]                               # (1, te) int32
    idx_d = dst_ref[...]

    n_pad = hT.shape[1]
    # One-hot selection matrices: nodes on sublanes, edges on lanes.
    node_ids = lax.broadcasted_iota(jnp.int32, (n_pad, idx_s.shape[1]), 0)
    oh_s = (node_ids == idx_s).astype(jnp.float32)     # (Nsub_p, te)
    oh_d = (node_ids == idx_d).astype(jnp.float32)

    # In-kernel gather on the MXU: column e of hs/hd is h_aug[src[e]] /
    # h_aug[dst[e]], hidden dim on sublanes, edges on lanes.
    hs = jnp.dot(hT, oh_s, precision=lax.Precision.HIGHEST,
                 preferred_element_type=jnp.float32)   # (Daug_p, te)
    hd = jnp.dot(hT, oh_d, precision=lax.Precision.HIGHEST,
                 preferred_element_type=jnp.float32)

    # Per-edge dot product on the VPU (sublane reduction, lane-dense result).
    bs = hs[bias_row:bias_row + 1, :]                  # (1, te) = bias[nid[src]]
    bd = hd[bias_row:bias_row + 1, :]                  # (1, te) = bias[nid[dst]]
    full = jnp.sum(hs * hd, axis=0, keepdims=True)     # = <h_s, h_d> + bs*bd
    out_ref[...] = (full - bs * bd + bs + bd).astype(out_ref.dtype)


def item_to_item_score(h, bias, src, dst, nid, *, edge_tile=1024):
    """Pallas equivalent of ItemToItemScorer.forward.

    h    : [N_sub, D]   hidden state of every node of the item-item pair graph
    bias : [N_full]     per-node bias over the full graph (nn.Parameter)
    src  : [E] int32    edge source node index (subgraph-local)
    dst  : [E] int32    edge destination node index (subgraph-local)
    nid  : [N_sub] i32  subgraph-local -> full-graph node id (dgl.NID)
    returns pair_score : [E, 1] float32
    """
    E = int(src.shape[0])
    N_sub, D = int(h.shape[0]), int(h.shape[1])
    f32 = jnp.float32

    # ---- VMEM-resident, bias-augmented, transposed node features -----------
    Dp = _round_up(max(D, 1), 8)          # keep the bias row sublane-aligned
    Daug_p = _round_up(Dp + 1, 8)
    Nsub_p = _round_up(N_sub, 128)

    b_node = bias[nid].astype(f32)                        # [N_sub]
    hT = jnp.zeros((Daug_p, Nsub_p), f32)
    hT = hT.at[:D, :N_sub].set(h.astype(f32).T)
    hT = hT.at[Dp, :N_sub].set(b_node)

    # ---- edge tiling: lane-dense (1, te) tiles, te a multiple of 128 --------
    te = max(128, min(_round_up(int(edge_tile), 128), _round_up(E, 128)))
    # Guarantee >= 2 grid steps when E allows so v7x's two TensorCores can
    # split the "parallel" axis; otherwise keep tiles as large as possible
    # (fewer per-step overheads, wider unmasked lane-dense stores).
    while te > 128 and -(-E // te) < 2:
        te = max(128, _round_up(te // 2, 128))
    grid_n = -(-E // te)
    e_pad = grid_n * te

    src_t = jnp.pad(src.astype(jnp.int32), (0, e_pad - E)).reshape(grid_n, 1, te)
    dst_t = jnp.pad(dst.astype(jnp.int32), (0, e_pad - E)).reshape(grid_n, 1, te)

    # ---- VMEM budget / scheduling hints -------------------------------------
    vmem_bytes = (2 * Daug_p * Nsub_p * 4        # resident hT (double-buffered)
                  + 2 * 2 * te * 4               # src/dst tiles x 2 buffers
                  + 2 * te * 4                   # output tiles x 2 buffers
                  + 2 * Nsub_p * te * 4          # one-hot temporaries
                  + 4 * Daug_p * te * 4)         # gathered hs/hd (+ slack)
    vmem_limit = int(min(max(2 * vmem_bytes, 32 * 1024 * 1024),
                         56 * 1024 * 1024))      # stay well under v7x's 64 MiB

    cost = pl.CostEstimate(
        flops=int(grid_n * (4 * Daug_p * Nsub_p * te + 3 * Daug_p * te)),
        transcendentals=0,
        bytes_accessed=int(Daug_p * Nsub_p * 4 + 3 * e_pad * 4),
    )

    out = pl.pallas_call(
        functools.partial(_edge_score_kernel, Dp),
        out_shape=jax.ShapeDtypeStruct((grid_n, 1, te), f32),
        grid_spec=pltpu.PrefetchScalarGridSpec(
            num_scalar_prefetch=0,
            grid=(grid_n,),
            in_specs=[
                pl.BlockSpec((Daug_p, Nsub_p), lambda i: (0, 0)),   # resident h^T
                pl.BlockSpec((None, 1, te), lambda i: (i, 0, 0)),   # src tile
                pl.BlockSpec((None, 1, te), lambda i: (i, 0, 0)),   # dst tile
            ],
            out_specs=pl.BlockSpec((None, 1, te), lambda i: (i, 0, 0)),
        ),
        compiler_params=pltpu.CompilerParams(
            dimension_semantics=("parallel",),
            vmem_limit_bytes=vmem_limit,
        ),
        cost_estimate=cost,
    )(hT, src_t, dst_t)

    # drop edge padding, restore fn.u_dot_v's keepdim last axis
    return out.reshape(-1)[:E][:, None]


if __name__ == "__main__":
    key = jax.random.PRNGKey(0)
    k_h, k_b, k_s, k_d, k_n = jax.random.split(key, 5)

    N_FULL = 256   # nodes in the full graph (size of the bias parameter)
    N_SUB = 64     # nodes in the sampled item-item pair graph
    D = 32         # hidden size
    E = 1000       # number of edges; deliberately NOT a multiple of the tile

    h = jax.random.normal(k_h, (N_SUB, D), dtype=jnp.float32)
    # __init__ uses nn.Parameter(torch.zeros(n_nodes)); small random values here
    # so the bias-add path is actually exercised.
    bias = 0.1 * jax.random.normal(k_b, (N_FULL,), dtype=jnp.float32)
    src = jax.random.randint(k_s, (E,), 0, N_SUB, dtype=jnp.int32)
    dst = jax.random.randint(k_d, (E,), 0, N_SUB, dtype=jnp.int32)
    # dgl.NID mapping: subgraph node index -> full-graph node id
    nid = jax.random.permutation(k_n, jnp.arange(N_FULL, dtype=jnp.int32))[:N_SUB]

    score = jax.jit(item_to_item_score)(h, bias, src, dst, nid)
    score = jax.block_until_ready(score)

    # pure-JAX reference
    ref = (jnp.sum(h[src] * h[dst], axis=-1, keepdims=True)
           + bias[nid[src]][:, None] + bias[nid[dst]][:, None])
    assert score.shape == (E, 1)
    max_err = float(jnp.max(jnp.abs(score - ref)))
    assert jnp.allclose(score, ref, atol=1e-3, rtol=1e-3), (
        f"mismatch vs reference (max abs err {max_err:.3e})")
    print("KERNEL_OK")
</pallas_src>

<mosaic_0001>
module attributes {stable_mosaic.version = 11 : i64} {
  func.func @_edge_score_kernel(%arg0: i32, %arg1: memref<40x128xf32, #tpu.memory_space<vmem>>, %arg2: memref<1x1x512xi32, #tpu.memory_space<vmem>>, %arg3: memref<1x1x512xi32, #tpu.memory_space<vmem>>, %arg4: memref<1x1x512xf32, #tpu.memory_space<vmem>>) attributes {dimension_semantics = [#tpu.dimension_semantics<parallel>], iteration_bounds = array<i64: 2>, scalar_prefetch = 0 : i64, scratch_operands = 0 : i64, tpu.core_type = #tpu.core_type<tc>, window_params = [{pipeline_mode = #tpu.pipeline_mode<synchronous>, transform_indices = @transform_0, window_bounds = array<i64: 40, 128>}, {transform_indices = @transform_1, window_bounds = array<i64: 1, 1, 512>}, {transform_indices = @transform_2, window_bounds = array<i64: 1, 1, 512>}, {transform_indices = @transform_3, window_bounds = array<i64: 1, 1, 512>}]} {
    %c0 = arith.constant 0 : index
    %c0_0 = arith.constant 0 : index
    %0 = vector.load %arg1[%c0, %c0_0] : memref<40x128xf32, #tpu.memory_space<vmem>>, vector<40x128xf32>
    %c0_1 = arith.constant 0 : index
    %c0_2 = arith.constant 0 : index
    %c0_3 = arith.constant 0 : index
    %1 = vector.load %arg2[%c0_1, %c0_2, %c0_3] : memref<1x1x512xi32, #tpu.memory_space<vmem>>, vector<1x1x512xi32>
    %2 = vector.shape_cast %1 : vector<1x1x512xi32> to vector<1x512xi32>
    %c0_4 = arith.constant 0 : index
    %c0_5 = arith.constant 0 : index
    %c0_6 = arith.constant 0 : index
    %3 = vector.load %arg3[%c0_4, %c0_5, %c0_6] : memref<1x1x512xi32, #tpu.memory_space<vmem>>, vector<1x1x512xi32>
    %4 = vector.shape_cast %3 : vector<1x1x512xi32> to vector<1x512xi32>
    %5 = tpu.iota {dimensions = array<i32: 0>} : vector<128x512xi32>
    %6 = vector.broadcast %2 : vector<1x512xi32> to vector<128x512xi32>
    %7 = arith.cmpi eq, %5, %6 : vector<128x512xi32>
    %8 = arith.extui %7 : vector<128x512xi1> to vector<128x512xi32>
    %9 = arith.sitofp %8 : vector<128x512xi32> to vector<128x512xf32>
    %10 = vector.broadcast %4 : vector<1x512xi32> to vector<128x512xi32>
    %11 = arith.cmpi eq, %5, %10 : vector<128x512xi32>
    %12 = arith.extui %11 : vector<128x512xi1> to vector<128x512xi32>
    %13 = arith.sitofp %12 : vector<128x512xi32> to vector<128x512xf32>
    %cst = arith.constant dense<0.000000e+00> : vector<40x512xf32>
    %14 = tpu.matmul %0, %9, %cst {dimension_numbers = #tpu.dot_dimension_numbers<[1], [0], [0], [1], [0, 0, 1, 1], [], []>, precision = #tpu.contract_precision<fp32>} : vector<40x128xf32>, vector<128x512xf32>, vector<40x512xf32> -> vector<40x512xf32>
    %cst_7 = arith.constant dense<0.000000e+00> : vector<40x512xf32>
    %15 = tpu.matmul %0, %13, %cst_7 {dimension_numbers = #tpu.dot_dimension_numbers<[1], [0], [0], [1], [0, 0, 1, 1], [], []>, precision = #tpu.contract_precision<fp32>} : vector<40x128xf32>, vector<128x512xf32>, vector<40x512xf32> -> vector<40x512xf32>
    %16 = vector.extract_strided_slice %14 {offsets = [32, 0], sizes = [1, 512], strides = [1, 1]} : vector<40x512xf32> to vector<1x512xf32>
    %17 = vector.extract_strided_slice %15 {offsets = [32, 0], sizes = [1, 512], strides = [1, 1]} : vector<40x512xf32> to vector<1x512xf32>
    %18 = arith.mulf %14, %15 : vector<40x512xf32>
    %cst_8 = arith.constant dense<0.000000e+00> : vector<512xf32>
    %19 = vector.multi_reduction <add>, %18, %cst_8 [0] : vector<40x512xf32> to vector<512xf32>
    %20 = vector.shape_cast %19 : vector<512xf32> to vector<1x512xf32>
    %21 = arith.mulf %16, %17 : vector<1x512xf32>
    %22 = arith.subf %20, %21 : vector<1x512xf32>
    %23 = arith.addf %22, %16 : vector<1x512xf32>
    %24 = arith.addf %23, %17 : vector<1x512xf32>
    %c0_9 = arith.constant 0 : index
    %c0_10 = arith.constant 0 : index
    %c0_11 = arith.constant 0 : index
    %25 = vector.load %arg4[%c0_9, %c0_10, %c0_11] : memref<1x1x512xf32, #tpu.memory_space<vmem>>, vector<1x1x512xf32>
    %26 = vector.shape_cast %25 : vector<1x1x512xf32> to vector<1x512xf32>
    %27 = vector.shape_cast %24 : vector<1x512xf32> to vector<1x1x512xf32>
    tpu.vector_store %arg4[%c0_9, %c0_10, %c0_11], %27 {strides = array<i32>} : memref<1x1x512xf32, #tpu.memory_space<vmem>>, vector<1x1x512xf32>,
    return
  }
  func.func @transform_0(%arg0: i32) -> (i32, i32) {
    %c0_i32 = arith.constant 0 : i32
    %c0_i32_0 = arith.constant 0 : i32
    %c0_i32_1 = arith.constant 0 : i32
    return %c0_i32, %c0_i32_0 : i32, i32
  }
  func.func @transform_1(%arg0: i32) -> (i32, i32, i32) {
    %c0_i32 = arith.constant 0 : i32
    %c0_i32_0 = arith.constant 0 : i32
    %c0_i32_1 = arith.constant 0 : i32
    return %arg0, %c0_i32, %c0_i32_0 : i32, i32, i32
  }
  func.func @transform_2(%arg0: i32) -> (i32, i32, i32) {
    %c0_i32 = arith.constant 0 : i32
    %c0_i32_0 = arith.constant 0 : i32
    %c0_i32_1 = arith.constant 0 : i32
    return %arg0, %c0_i32, %c0_i32_0 : i32, i32, i32
  }
  func.func @transform_3(%arg0: i32) -> (i32, i32, i32) {
    %c0_i32 = arith.constant 0 : i32
    %c0_i32_0 = arith.constant 0 : i32
    %c0_i32_1 = arith.constant 0 : i32
    return %arg0, %c0_i32, %c0_i32_0 : i32, i32, i32
  }
}

</mosaic_0001>

<llo_original>
// kernel: item_to_item_score.1
$region0: #{item_to_item_score.1}
  #allocation0 [shape = 'u32[]', space=smem, size = 0x4, offset = 0x4, fixed_abs, tag = 'smem constant byte address 0x4 - core index']
  #allocation1 [shape = 'u32[72,128]{1,0:T(1,128)}', space=vmem, size = 0x9000, scoped, tag = 'internal scratch']
  %s0 = inlined_call_operand.vmem [shape: f32[40,128], index: 0, kind: input, shape index: {}]
  %s1 = inlined_call_operand.vmem [shape: s32[2,1,512], index: 1, kind: input, shape index: {}]
  %s2 = inlined_call_operand.vmem [shape: s32[2,1,512], index: 2, kind: input, shape index: {}]
  %s3 = inlined_call_operand.hbm [shape: f32[2,1,512], index: 3, kind: output, shape index: {}]
  %s4 = sld [smem:[#allocation0]]
  $region45: #{item_to_item_score.1} parent=0
    _
  %s6 = ssub.s32 1, %s4
  %s7 = scalar_select 0, %s6, %s4
  $region1: #{item_to_item_score.1} parent=0
    #allocation2 [shape = 'u8[4096]{0}', space=vmem, size = 0x1000, scoped, tag = 'output window, operand 0']
    #allocation3 [shape = 's32[2]{0}', space=sflag, size = 0x8, scoped, tag = 'scoped memory for item_to_item_score.1']
    %8 = vsyncpa [#allocation3], 0
    %s9 = scalar_lea.sflag [#allocation3], 1
    %10 = vsyncpa %s9, 0
    loop: start=0, step=1, limit=4
    $region2: #{item_to_item_score.1} parent=1 // loop_pre_header
      _
    $region3: #{item_to_item_score.1} parent=1 // loop_header
      %s12 = sphi 0, %s16
      %p13 = scmp.ge.s32.totalorder %s12, 4
      %s20 = sphi 0, %s20
      %s22 = sphi 0, %s20
      %s23 = sphi 0, %s22
      %s37 = sphi 0, %s23
      %s43 = sphi 0, %s45
      %s46 = sphi 0, %s43
      %s47 = sphi 0, %s46
      %s63 = sphi 0, %s47
      %s69 = sphi 0, %s71
      %s72 = sphi 0, %s69
      %s73 = sphi 0, %s72
      %s89 = sphi 0, %s73
      %s95 = sphi 0, %s97
      %s98 = sphi 0, %s95
      %s99 = sphi 0, %s98
      %s115 = sphi 0, %s99
    $region4: #{item_to_item_score.1} parent=1 // loop_header_branch
      %15 = sbr.rel (%p13) target = $region8
    $region5: #{item_to_item_score.1} parent=1 // loop_body
      %s17 = ssub.s32 %s12, 1
      %s18 = ssub.s32 %s12, 2
      %s19 = sadd.s32 %s12, 1
      %s21 = sadd.s32 %s20, 1
      %p24 = scmp.eq.s32.totalorder %s12, 1
      %p25 = scmp.ne.s32.totalorder %s20, %s22
      %p26 = scmp.eq.s32.totalorder %s12, 0
      %p27 = por %p25, %p26
      %p28 = scmp.ne.s32.totalorder %s20, %s22
      %p29 = scmp.eq.s32.totalorder %s17, 1
      %p30 = por %p28, %p29
      %p31 = scmp.ne.s32.totalorder %s22, %s23
      %p32 = scmp.eq.s32.totalorder %s17, 0
      %p33 = por %p31, %p32
      %p34 = scmp.ne.s32.totalorder %s22, %s23
      %p35 = scmp.eq.s32.totalorder %s18, 1
      %p36 = por %p34, %p35
      %p38 = scmp.ne.s32.totalorder %s23, %s37
      %p39 = scmp.eq.s32.totalorder %s18, 0
      %p40 = por %p38, %p39
      %s41 = ssub.s32 %s12, %s19
      %p42 = scmp.eq.s32.totalorder %s41, 0
      %s44 = sadd.s32 %s43, 1
      %s45 = scalar_select %p42, %s43, %s44
      %p48 = pneg %p42
      %p49 = scmp.eq.s32.totalorder %s12, 1
      %p50 = por %p48, %p49
      %p51 = scmp.ne.s32.totalorder %s43, %s46
      %p52 = scmp.eq.s32.totalorder %s12, 0
      %p53 = por %p51, %p52
      %p54 = scmp.ne.s32.totalorder %s43, %s46
      %p55 = scmp.eq.s32.totalorder %s17, 1
      %p56 = por %p54, %p55
      %p57 = scmp.ne.s32.totalorder %s46, %s47
      %p58 = scmp.eq.s32.totalorder %s17, 0
      %p59 = por %p57, %p58
      %p60 = scmp.ne.s32.totalorder %s46, %s47
      %p61 = scmp.eq.s32.totalorder %s18, 1
      %p62 = por %p60, %p61
      %p64 = scmp.ne.s32.totalorder %s47, %s63
      %p65 = scmp.eq.s32.totalorder %s18, 0
      %p66 = por %p64, %p65
      %s67 = ssub.s32 %s12, %s19
      %p68 = scmp.eq.s32.totalorder %s67, 0
      %s70 = sadd.s32 %s69, 1
      %s71 = scalar_select %p68, %s69, %s70
      %p74 = pneg %p68
      %p75 = scmp.eq.s32.totalorder %s12, 1
      %p76 = por %p74, %p75
      %p77 = scmp.ne.s32.totalorder %s69, %s72
      %p78 = scmp.eq.s32.totalorder %s12, 0
      %p79 = por %p77, %p78
      %p80 = scmp.ne.s32.totalorder %s69, %s72
      %p81 = scmp.eq.s32.totalorder %s17, 1
      %p82 = por %p80, %p81
      %p83 = scmp.ne.s32.totalorder %s72, %s73
      %p84 = scmp.eq.s32.totalorder %s17, 0
      %p85 = por %p83, %p84
      %p86 = scmp.ne.s32.totalorder %s72, %s73
      %p87 = scmp.eq.s32.totalorder %s18, 1
      %p88 = por %p86, %p87
      %p90 = scmp.ne.s32.totalorder %s73, %s89
      %p91 = scmp.eq.s32.totalorder %s18, 0
      %p92 = por %p90, %p91
      %s93 = ssub.s32 %s12, %s19
      %p94 = scmp.eq.s32.totalorder %s93, 0
      %s96 = sadd.s32 %s95, 1
      %s97 = scalar_select %p94, %s95, %s96
      %p100 = pneg %p94
      %p101 = scmp.eq.s32.totalorder %s12, 1
      %p102 = por %p100, %p101
      %p103 = scmp.ne.s32.totalorder %s95, %s98
      %p104 = scmp.eq.s32.totalorder %s12, 0
      %p105 = por %p103, %p104
      %p106 = scmp.ne.s32.totalorder %s95, %s98
      %p107 = scmp.eq.s32.totalorder %s17, 1
      %p108 = por %p106, %p107
      %p109 = scmp.ne.s32.totalorder %s98, %s99
      %p110 = scmp.eq.s32.totalorder %s17, 0
      %p111 = por %p109, %p110
      %p112 = scmp.ne.s32.totalorder %s98, %s99
      %p113 = scmp.eq.s32.totalorder %s18, 1
      %p114 = por %p112, %p113
      %p116 = scmp.ne.s32.totalorder %s99, %s115
      %p117 = scmp.eq.s32.totalorder %s18, 0
      %p118 = por %p116, %p117
      %p119 = scmp.le.s32.totalorder 1, %s12
      %p120 = scmp.lt.s32.totalorder %s12, 3
      %p121 = pnand %p119, %p120
      %p122 = pneg %p121
      // Predicated region
      $region9: #{item_to_item_score.1} parent=5 // pred_check
        _
      $region10: #{item_to_item_score.1} parent=5 // pred_check_branch
        %124 = sbr.rel (%p121) target = $region12
      $region11: #{item_to_item_score.1} parent=5 // pred_region
        %s125 = ssub.s32 %s12, 1
        // Predicated region
        $region13: #{item_to_item_score.1} parent=11 // pred_check
          %p126 = pneg %p33
        $region14: #{item_to_item_score.1} parent=11 // pred_check_branch
          %128 = sbr.rel (%p126) target = $region16
        $region15: #{item_to_item_score.1} parent=11 // pred_region
          _
        $region16: #{item_to_item_score.1} parent=11 // pred_fallthru
          _
      $region12: #{item_to_item_score.1} parent=5 // pred_fallthru
        _
      %p129 = scmp.lt.s32.totalorder %s12, 2
      // Predicated region
      $region17: #{item_to_item_score.1} parent=5 // pred_check
        %p130 = pneg %p129
      $region18: #{item_to_item_score.1} parent=5 // pred_check_branch
        %132 = sbr.rel (%p130) target = $region20
      $region19: #{item_to_item_score.1} parent=5 // pred_region
        // Predicated region
        $region21: #{item_to_item_score.1} parent=19 // pred_check
          %p133 = pneg %p53
        $region22: #{item_to_item_score.1} parent=19 // pred_check_branch
          %135 = sbr.rel (%p133) target = $region24
        $region23: #{item_to_item_score.1} parent=19 // pred_region
          %p136 = scmp.lt.s32.totalorder %s12, 1
          %s137 = scalar_select %p136, %s12, 1
          %s138 = smul.addr %s137, 4
          %s139 = scalar_lea.vmem %s1, %s138
        $region24: #{item_to_item_score.1} parent=19 // pred_fallthru
          _
        // Predicated region
        $region25: #{item_to_item_score.1} parent=19 // pred_check
          %p140 = pneg %p79
        $region26: #{item_to_item_score.1} parent=19 // pred_check_branch
          %142 = sbr.rel (%p140) target = $region28
        $region27: #{item_to_item_score.1} parent=19 // pred_region
          %p143 = scmp.lt.s32.totalorder %s12, 1
          %s144 = scalar_select %p143, %s12, 1
          %s145 = smul.addr %s144, 4
          %s146 = scalar_lea.vmem %s2, %s145
        $region28: #{item_to_item_score.1} parent=19 // pred_fallthru
          _
      $region20: #{item_to_item_score.1} parent=5 // pred_fallthru
        _
      %p147 = scmp.le.s32.totalorder 1, %s12
      %p148 = scmp.lt.s32.totalorder %s12, 3
      %p149 = pnand %p147, %p148
      %p150 = pneg %p149
      // Predicated region
      $region29: #{item_to_item_score.1} parent=5 // pred_check
        _
      $region30: #{item_to_item_score.1} parent=5 // pred_check_branch
        %152 = sbr.rel (%p149) target = $region32
      $region31: #{item_to_item_score.1} parent=5 // pred_region
        %s153 = ssub.s32 %s12, 1
        %p154 = pneg %p33
        %p155 = pneg %p30
        %p156 = scmp.lt.s32.totalorder %s17, 1
        %s157 = scalar_select %p156, %s17, 1
        %s158 = smul.addr %s157, 4
        %s159 = scalar_lea.vmem %s1, %s158
        %p160 = pneg %p59
        %p161 = pneg %p56
        %p162 = scmp.lt.s32.totalorder %s17, 1
        %s163 = scalar_select %p162, %s17, 1
        %s164 = smul.addr %s163, 4
        %s165 = scalar_lea.vmem %s2, %s164
        %p166 = pneg %p85
        %p167 = pneg %p82
        %p168 = pneg %p111
        %p169 = pneg %p108
        %s170 = sand.u32 %s98, 1
        %s171 = scalar_lea.sflag [#allocation3], %s170
        %s172 = sand.u32 %s98, 1
        %s173 = smul.addr %s172, 4
        %s174 = scalar_lea.vmem [#allocation2], %s173
        %p175 = scmp.lt.s32.totalorder %s17, 1
        %s176 = scalar_select %p175, %s17, 1
        %s177 = smul.addr %s176, 4
        %s178 = scalar_lea.vmem %s1, %s177
        %p179 = scmp.lt.s32.totalorder %s17, 1
        %s180 = scalar_select %p179, %s17, 1
        %s181 = smul.addr %s180, 4
        %s182 = scalar_lea.vmem %s2, %s181
        %v183 = vld [vmem:[%s0] sm:$0xff]
        %v184 = vld [vmem:[%s0 + $0x8] sm:$0xff]
        %v185 = vld [vmem:[%s0 + $0x10] sm:$0xff]
        %v186 = vld [vmem:[%s0 + $0x18] sm:$0xff]
        %v187 = vld [vmem:[%s0 + $0x20] sm:$0xff]
        %v188 = vld [vmem:[%s178] sm:$0xf]
        %v189 = vld [vmem:[%s182] sm:$0xf]
        %v190 = vlaneseq
        %v191 = vshrl.u32 %v190, 7
        %v192 = vadd.s32 %v191, 8
        %v193 = vadd.s32 %v191, 16
        %v194 = vadd.s32 %v191, 24
        %v195 = vadd.s32 %v191, 32
        %v196 = vadd.s32 %v191, 40
        %v197 = vadd.s32 %v191, 48
        %v198 = vadd.s32 %v191, 56
        %v199 = vadd.s32 %v191, 64
        %v200 = vadd.s32 %v191, 72
        %v201 = vadd.s32 %v191, 80
        %v202 = vadd.s32 %v191, 88
        %v203 = vadd.s32 %v191, 96
        %v204 = vadd.s32 %v191, 104
        %v205 = vadd.s32 %v191, 112
        %v206 = vadd.s32 %v191, 120
        %v207 = vperm.slane %v188, 0
        %v208 = vperm.slane %v188, 1
        %v209 = vperm.slane %v188, 2
        %v210 = vperm.slane %v188, 3
        %vm211 = vcmp.eq.s32.totalorder %v191, %v207
        %vm212 = vcmp.eq.s32.totalorder %v191, %v208
        %vm213 = vcmp.eq.s32.totalorder %v191, %v209
        %vm214 = vcmp.eq.s32.totalorder %v191, %v210
        %vm215 = vcmp.eq.s32.totalorder %v192, %v207
        %vm216 = vcmp.eq.s32.totalorder %v192, %v208
        %vm217 = vcmp.eq.s32.totalorder %v192, %v209
        %vm218 = vcmp.eq.s32.totalorder %v192, %v210
        %vm219 = vcmp.eq.s32.totalorder %v193, %v207
        %vm220 = vcmp.eq.s32.totalorder %v193, %v208
        %vm221 = vcmp.eq.s32.totalorder %v193, %v209
        %vm222 = vcmp.eq.s32.totalorder %v193, %v210
        %vm223 = vcmp.eq.s32.totalorder %v194, %v207
        %vm224 = vcmp.eq.s32.totalorder %v194, %v208
        %vm225 = vcmp.eq.s32.totalorder %v194, %v209
        %vm226 = vcmp.eq.s32.totalorder %v194, %v210
        %vm227 = vcmp.eq.s32.totalorder %v195, %v207
        %vm228 = vcmp.eq.s32.totalorder %v195, %v208
        %vm229 = vcmp.eq.s32.totalorder %v195, %v209
        %vm230 = vcmp.eq.s32.totalorder %v195, %v210
        %vm231 = vcmp.eq.s32.totalorder %v196, %v207
        %vm232 = vcmp.eq.s32.totalorder %v196, %v208
        %vm233 = vcmp.eq.s32.totalorder %v196, %v209
        %vm234 = vcmp.eq.s32.totalorder %v196, %v210
        %vm235 = vcmp.eq.s32.totalorder %v197, %v207
        %vm236 = vcmp.eq.s32.totalorder %v197, %v208
        %vm237 = vcmp.eq.s32.totalorder %v197, %v209
        %vm238 = vcmp.eq.s32.totalorder %v197, %v210
        %vm239 = vcmp.eq.s32.totalorder %v198, %v207
        %vm240 = vcmp.eq.s32.totalorder %v198, %v208
        %vm241 = vcmp.eq.s32.totalorder %v198, %v209
        %vm242 = vcmp.eq.s32.totalorder %v198, %v210
        %vm243 = vcmp.eq.s32.totalorder %v199, %v207
        %vm244 = vcmp.eq.s32.totalorder %v199, %v208
        %vm245 = vcmp.eq.s32.totalorder %v199, %v209
        %vm246 = vcmp.eq.s32.totalorder %v199, %v210
        %vm247 = vcmp.eq.s32.totalorder %v200, %v207
        %vm248 = vcmp.eq.s32.totalorder %v200, %v208
        %vm249 = vcmp.eq.s32.totalorder %v200, %v209
        %vm250 = vcmp.eq.s32.totalorder %v200, %v210
        %vm251 = vcmp.eq.s32.totalorder %v201, %v207
        %vm252 = vcmp.eq.s32.totalorder %v201, %v208
        %vm253 = vcmp.eq.s32.totalorder %v201, %v209
        %vm254 = vcmp.eq.s32.totalorder %v201, %v210
        %vm255 = vcmp.eq.s32.totalorder %v202, %v207
        %vm256 = vcmp.eq.s32.totalorder %v202, %v208
        %vm257 = vcmp.eq.s32.totalorder %v202, %v209
        %vm258 = vcmp.eq.s32.totalorder %v202, %v210
        %vm259 = vcmp.eq.s32.totalorder %v203, %v207
        %vm260 = vcmp.eq.s32.totalorder %v203, %v208
        %vm261 = vcmp.eq.s32.totalorder %v203, %v209
        %vm262 = vcmp.eq.s32.totalorder %v203, %v210
        %vm263 = vcmp.eq.s32.totalorder %v204, %v207
        %vm264 = vcmp.eq.s32.totalorder %v204, %v208
        %vm265 = vcmp.eq.s32.totalorder %v204, %v209
        %vm266 = vcmp.eq.s32.totalorder %v204, %v210
        %vm267 = vcmp.eq.s32.totalorder %v205, %v207
        %vm268 = vcmp.eq.s32.totalorder %v205, %v208
        %vm269 = vcmp.eq.s32.totalorder %v205, %v209
        %vm270 = vcmp.eq.s32.totalorder %v205, %v210
        %vm271 = vcmp.eq.s32.totalorder %v206, %v207
        %vm272 = vcmp.eq.s32.totalorder %v206, %v208
        %vm273 = vcmp.eq.s32.totalorder %v206, %v209
        %vm274 = vcmp.eq.s32.totalorder %v206, %v210
        %v275 = vsel %vm211, 1, 0
        %v276 = vsel %vm212, 1, 0
        %v277 = vsel %vm213, 1, 0
        %v278 = vsel %vm214, 1, 0
        %v279 = vsel %vm215, 1, 0
        %v280 = vsel %vm216, 1, 0
        %v281 = vsel %vm217, 1, 0
        %v282 = vsel %vm218, 1, 0
        %v283 = vsel %vm219, 1, 0
        %v284 = vsel %vm220, 1, 0
        %v285 = vsel %vm221, 1, 0
        %v286 = vsel %vm222, 1, 0
        %v287 = vsel %vm223, 1, 0
        %v288 = vsel %vm224, 1, 0
        %v289 = vsel %vm225, 1, 0
        %v290 = vsel %vm226, 1, 0
        %v291 = vsel %vm227, 1, 0
        %v292 = vsel %vm228, 1, 0
        %v293 = vsel %vm229, 1, 0
        %v294 = vsel %vm230, 1, 0
        %v295 = vsel %vm231, 1, 0
        %v296 = vsel %vm232, 1, 0
        %v297 = vsel %vm233, 1, 0
        %v298 = vsel %vm234, 1, 0
        %v299 = vsel %vm235, 1, 0
        %v300 = vsel %vm236, 1, 0
        %v301 = vsel %vm237, 1, 0
        %v302 = vsel %vm238, 1, 0
        %v303 = vsel %vm239, 1, 0
        %v304 = vsel %vm240, 1, 0
        %v305 = vsel %vm241, 1, 0
        %v306 = vsel %vm242, 1, 0
        %v307 = vsel %vm243, 1, 0
        %v308 = vsel %vm244, 1, 0
        %v309 = vsel %vm245, 1, 0
        %v310 = vsel %vm246, 1, 0
        %v311 = vsel %vm247, 1, 0
        %v312 = vsel %vm248, 1, 0
        %v313 = vsel %vm249, 1, 0
        %v314 = vsel %vm250, 1, 0
        %v315 = vsel %vm251, 1, 0
        %v316 = vsel %vm252, 1, 0
        %v317 = vsel %vm253, 1, 0
        %v318 = vsel %vm254, 1, 0
        %v319 = vsel %vm255, 1, 0
        %v320 = vsel %vm256, 1, 0
        %v321 = vsel %vm257, 1, 0
        %v322 = vsel %vm258, 1, 0
        %v323 = vsel %vm259, 1, 0
        %v324 = vsel %vm260, 1, 0
        %v325 = vsel %vm261, 1, 0
        %v326 = vsel %vm262, 1, 0
        %v327 = vsel %vm263, 1, 0
        %v328 = vsel %vm264, 1, 0
        %v329 = vsel %vm265, 1, 0
        %v330 = vsel %vm266, 1, 0
        %v331 = vsel %vm267, 1, 0
        %v332 = vsel %vm268, 1, 0
        %v333 = vsel %vm269, 1, 0
        %v334 = vsel %vm270, 1, 0
        %v335 = vsel %vm271, 1, 0
        %v336 = vsel %vm272, 1, 0
        %v337 = vsel %vm273, 1, 0
        %v338 = vsel %vm274, 1, 0
        %v339 = vcvt.s32.f32 %v275
        %v340 = vcvt.s32.f32 %v276
        %v341 = vcvt.s32.f32 %v277
        %v342 = vcvt.s32.f32 %v278
        %v343 = vcvt.s32.f32 %v279
        %v344 = vcvt.s32.f32 %v280
        %v345 = vcvt.s32.f32 %v281
        %v346 = vcvt.s32.f32 %v282
        %v347 = vcvt.s32.f32 %v283
        %v348 = vcvt.s32.f32 %v284
        %v349 = vcvt.s32.f32 %v285
        %v350 = vcvt.s32.f32 %v286
        %v351 = vcvt.s32.f32 %v287
        %v352 = vcvt.s32.f32 %v288
        %v353 = vcvt.s32.f32 %v289
        %v354 = vcvt.s32.f32 %v290
        %v355 = vcvt.s32.f32 %v291
        %v356 = vcvt.s32.f32 %v292
        %v357 = vcvt.s32.f32 %v293
        %v358 = vcvt.s32.f32 %v294
        %v359 = vcvt.s32.f32 %v295
        %v360 = vcvt.s32.f32 %v296
        %v361 = vcvt.s32.f32 %v297
        %v362 = vcvt.s32.f32 %v298
        %v363 = vcvt.s32.f32 %v299
        %v364 = vcvt.s32.f32 %v300
        %v365 = vcvt.s32.f32 %v301
        %v366 = vcvt.s32.f32 %v302
        %v367 = vcvt.s32.f32 %v303
        %v368 = vcvt.s32.f32 %v304
        %v369 = vcvt.s32.f32 %v305
        %v370 = vcvt.s32.f32 %v306
        %v371 = vcvt.s32.f32 %v307
        %v372 = vcvt.s32.f32 %v308
        %v373 = vcvt.s32.f32 %v309
        %v374 = vcvt.s32.f32 %v310
        %v375 = vcvt.s32.f32 %v311
        %v376 = vcvt.s32.f32 %v312
        %v377 = vcvt.s32.f32 %v313
        %v378 = vcvt.s32.f32 %v314
        %v379 = vcvt.s32.f32 %v315
        %v380 = vcvt.s32.f32 %v316
        %v381 = vcvt.s32.f32 %v317
        %v382 = vcvt.s32.f32 %v318
        %v383 = vcvt.s32.f32 %v319
        %v384 = vcvt.s32.f32 %v320
        %v385 = vcvt.s32.f32 %v321
        %v386 = vcvt.s32.f32 %v322
        %v387 = vcvt.s32.f32 %v323
        %v388 = vcvt.s32.f32 %v324
        %v389 = vcvt.s32.f32 %v325
        %v390 = vcvt.s32.f32 %v326
        %v391 = vcvt.s32.f32 %v327
        %v392 = vcvt.s32.f32 %v328
        %v393 = vcvt.s32.f32 %v329
        %v394 = vcvt.s32.f32 %v330
        %v395 = vcvt.s32.f32 %v331
        %v396 = vcvt.s32.f32 %v332
        %v397 = vcvt.s32.f32 %v333
        %v398 = vcvt.s32.f32 %v334
        %v399 = vcvt.s32.f32 %v335
        %v400 = vcvt.s32.f32 %v336
        %v401 = vcvt.s32.f32 %v337
        %v402 = vcvt.s32.f32 %v338
        %v403 = vperm.slane %v189, 0
        %v404 = vperm.slane %v189, 1
        %v405 = vperm.slane %v189, 2
        %v406 = vperm.slane %v189, 3
        %vm407 = vcmp.eq.s32.totalorder %v191, %v403
        %vm408 = vcmp.eq.s32.totalorder %v191, %v404
        %vm409 = vcmp.eq.s32.totalorder %v191, %v405
        %vm410 = vcmp.eq.s32.totalorder %v191, %v406
        %vm411 = vcmp.eq.s32.totalorder %v192, %v403
        %vm412 = vcmp.eq.s32.totalorder %v192, %v404
        %vm413 = vcmp.eq.s32.totalorder %v192, %v405
        %vm414 = vcmp.eq.s32.totalorder %v192, %v406
        %vm415 = vcmp.eq.s32.totalorder %v193, %v403
        %vm416 = vcmp.eq.s32.totalorder %v193, %v404
        %vm417 = vcmp.eq.s32.totalorder %v193, %v405
        %vm418 = vcmp.eq.s32.totalorder %v193, %v406
        %vm419 = vcmp.eq.s32.totalorder %v194, %v403
        %vm420 = vcmp.eq.s32.totalorder %v194, %v404
        %vm421 = vcmp.eq.s32.totalorder %v194, %v405
        %vm422 = vcmp.eq.s32.totalorder %v194, %v406
        %vm423 = vcmp.eq.s32.totalorder %v195, %v403
        %vm424 = vcmp.eq.s32.totalorder %v195, %v404
        %vm425 = vcmp.eq.s32.totalorder %v195, %v405
        %vm426 = vcmp.eq.s32.totalorder %v195, %v406
        %vm427 = vcmp.eq.s32.totalorder %v196, %v403
        %vm428 = vcmp.eq.s32.totalorder %v196, %v404
        %vm429 = vcmp.eq.s32.totalorder %v196, %v405
        %vm430 = vcmp.eq.s32.totalorder %v196, %v406
        %vm431 = vcmp.eq.s32.totalorder %v197, %v403
        %vm432 = vcmp.eq.s32.totalorder %v197, %v404
        %vm433 = vcmp.eq.s32.totalorder %v197, %v405
        %vm434 = vcmp.eq.s32.totalorder %v197, %v406
        %vm435 = vcmp.eq.s32.totalorder %v198, %v403
        %vm436 = vcmp.eq.s32.totalorder %v198, %v404
        %vm437 = vcmp.eq.s32.totalorder %v198, %v405
        %vm438 = vcmp.eq.s32.totalorder %v198, %v406
        %vm439 = vcmp.eq.s32.totalorder %v199, %v403
        %vm440 = vcmp.eq.s32.totalorder %v199, %v404
        %vm441 = vcmp.eq.s32.totalorder %v199, %v405
        %vm442 = vcmp.eq.s32.totalorder %v199, %v406
        %vm443 = vcmp.eq.s32.totalorder %v200, %v403
        %vm444 = vcmp.eq.s32.totalorder %v200, %v404
        %vm445 = vcmp.eq.s32.totalorder %v200, %v405
        %vm446 = vcmp.eq.s32.totalorder %v200, %v406
        %vm447 = vcmp.eq.s32.totalorder %v201, %v403
        %vm448 = vcmp.eq.s32.totalorder %v201, %v404
        %vm449 = vcmp.eq.s32.totalorder %v201, %v405
        %vm450 = vcmp.eq.s32.totalorder %v201, %v406
        %vm451 = vcmp.eq.s32.totalorder %v202, %v403
        %vm452 = vcmp.eq.s32.totalorder %v202, %v404
        %vm453 = vcmp.eq.s32.totalorder %v202, %v405
        %vm454 = vcmp.eq.s32.totalorder %v202, %v406
        %vm455 = vcmp.eq.s32.totalorder %v203, %v403
        %vm456 = vcmp.eq.s32.totalorder %v203, %v404
        %vm457 = vcmp.eq.s32.totalorder %v203, %v405
        %vm458 = vcmp.eq.s32.totalorder %v203, %v406
        %vm459 = vcmp.eq.s32.totalorder %v204, %v403
        %vm460 = vcmp.eq.s32.totalorder %v204, %v404
        %vm461 = vcmp.eq.s32.totalorder %v204, %v405
        %vm462 = vcmp.eq.s32.totalorder %v204, %v406
        %vm463 = vcmp.eq.s32.totalorder %v205, %v403
        %vm464 = vcmp.eq.s32.totalorder %v205, %v404
        %vm465 = vcmp.eq.s32.totalorder %v205, %v405
        %vm466 = vcmp.eq.s32.totalorder %v205, %v406
        %vm467 = vcmp.eq.s32.totalorder %v206, %v403
        %vm468 = vcmp.eq.s32.totalorder %v206, %v404
        %vm469 = vcmp.eq.s32.totalorder %v206, %v405
        %vm470 = vcmp.eq.s32.totalorder %v206, %v406
        %v471 = vsel %vm407, 1, 0
        %v472 = vsel %vm408, 1, 0
        %v473 = vsel %vm409, 1, 0
        %v474 = vsel %vm410, 1, 0
        %v475 = vsel %vm411, 1, 0
        %v476 = vsel %vm412, 1, 0
        %v477 = vsel %vm413, 1, 0
        %v478 = vsel %vm414, 1, 0
        %v479 = vsel %vm415, 1, 0
        %v480 = vsel %vm416, 1, 0
        %v481 = vsel %vm417, 1, 0
        %v482 = vsel %vm418, 1, 0
        %v483 = vsel %vm419, 1, 0
        %v484 = vsel %vm420, 1, 0
        %v485 = vsel %vm421, 1, 0
        %v486 = vsel %vm422, 1, 0
        %v487 = vsel %vm423, 1, 0
        %v488 = vsel %vm424, 1, 0
        %v489 = vsel %vm425, 1, 0
        %v490 = vsel %vm426, 1, 0
        %v491 = vsel %vm427, 1, 0
        %v492 = vsel %vm428, 1, 0
        %v493 = vsel %vm429, 1, 0
        %v494 = vsel %vm430, 1, 0
        %v495 = vsel %vm431, 1, 0
        %v496 = vsel %vm432, 1, 0
        %v497 = vsel %vm433, 1, 0
        %v498 = vsel %vm434, 1, 0
        %v499 = vsel %vm435, 1, 0
        %v500 = vsel %vm436, 1, 0
        %v501 = vsel %vm437, 1, 0
        %v502 = vsel %vm438, 1, 0
        %v503 = vsel %vm439, 1, 0
        %v504 = vsel %vm440, 1, 0
        %v505 = vsel %vm441, 1, 0
        %v506 = vsel %vm442, 1, 0
        %v507 = vsel %vm443, 1, 0
        %v508 = vsel %vm444, 1, 0
        %v509 = vsel %vm445, 1, 0
        %v510 = vsel %vm446, 1, 0
        %v511 = vsel %vm447, 1, 0
        %v512 = vsel %vm448, 1, 0
        %v513 = vsel %vm449, 1, 0
        %v514 = vsel %vm450, 1, 0
        %v515 = vsel %vm451, 1, 0
        %v516 = vsel %vm452, 1, 0
        %v517 = vsel %vm453, 1, 0
        %v518 = vsel %vm454, 1, 0
        %v519 = vsel %vm455, 1, 0
        %v520 = vsel %vm456, 1, 0
        %v521 = vsel %vm457, 1, 0
        %v522 = vsel %vm458, 1, 0
        %v523 = vsel %vm459, 1, 0
        %v524 = vsel %vm460, 1, 0
        %v525 = vsel %vm461, 1, 0
        %v526 = vsel %vm462, 1, 0
        %v527 = vsel %vm463, 1, 0
        %v528 = vsel %vm464, 1, 0
        %v529 = vsel %vm465, 1, 0
        %v530 = vsel %vm466, 1, 0
        %v531 = vsel %vm467, 1, 0
        %v532 = vsel %vm468, 1, 0
        %v533 = vsel %vm469, 1, 0
        %v534 = vsel %vm470, 1, 0
        %v535 = vcvt.s32.f32 %v471
        %v536 = vcvt.s32.f32 %v472
        %v537 = vcvt.s32.f32 %v473
        %v538 = vcvt.s32.f32 %v474
        %v539 = vcvt.s32.f32 %v475
        %v540 = vcvt.s32.f32 %v476
        %v541 = vcvt.s32.f32 %v477
        %v542 = vcvt.s32.f32 %v478
        %v543 = vcvt.s32.f32 %v479
        %v544 = vcvt.s32.f32 %v480
        %v545 = vcvt.s32.f32 %v481
        %v546 = vcvt.s32.f32 %v482
        %v547 = vcvt.s32.f32 %v483
        %v548 = vcvt.s32.f32 %v484
        %v549 = vcvt.s32.f32 %v485
        %v550 = vcvt.s32.f32 %v486
        %v551 = vcvt.s32.f32 %v487
        %v552 = vcvt.s32.f32 %v488
        %v553 = vcvt.s32.f32 %v489
        %v554 = vcvt.s32.f32 %v490
        %v555 = vcvt.s32.f32 %v491
        %v556 = vcvt.s32.f32 %v492
        %v557 = vcvt.s32.f32 %v493
        %v558 = vcvt.s32.f32 %v494
        %v559 = vcvt.s32.f32 %v495
        %v560 = vcvt.s32.f32 %v496
        %v561 = vcvt.s32.f32 %v497
        %v562 = vcvt.s32.f32 %v498
        %v563 = vcvt.s32.f32 %v499
        %v564 = vcvt.s32.f32 %v500
        %v565 = vcvt.s32.f32 %v501
        %v566 = vcvt.s32.f32 %v502
        %v567 = vcvt.s32.f32 %v503
        %v568 = vcvt.s32.f32 %v504
        %v569 = vcvt.s32.f32 %v505
        %v570 = vcvt.s32.f32 %v506
        %v571 = vcvt.s32.f32 %v507
        %v572 = vcvt.s32.f32 %v508
        %v573 = vcvt.s32.f32 %v509
        %v574 = vcvt.s32.f32 %v510
        %v575 = vcvt.s32.f32 %v511
        %v576 = vcvt.s32.f32 %v512
        %v577 = vcvt.s32.f32 %v513
        %v578 = vcvt.s32.f32 %v514
        %v579 = vcvt.s32.f32 %v515
        %v580 = vcvt.s32.f32 %v516
        %v581 = vcvt.s32.f32 %v517
        %v582 = vcvt.s32.f32 %v518
        %v583 = vcvt.s32.f32 %v519
        %v584 = vcvt.s32.f32 %v520
        %v585 = vcvt.s32.f32 %v521
        %v586 = vcvt.s32.f32 %v522
        %v587 = vcvt.s32.f32 %v523
        %v588 = vcvt.s32.f32 %v524
        %v589 = vcvt.s32.f32 %v525
        %v590 = vcvt.s32.f32 %v526
        %v591 = vcvt.s32.f32 %v527
        %v592 = vcvt.s32.f32 %v528
        %v593 = vcvt.s32.f32 %v529
        %v594 = vcvt.s32.f32 %v530
        %v595 = vcvt.s32.f32 %v531
        %v596 = vcvt.s32.f32 %v532
        %v597 = vcvt.s32.f32 %v533
        %v598 = vcvt.s32.f32 %v534
        %v599 = vand.u32 %v399, 4294901760
        %600 = vmatpush.msra.mxu0 %v599
        %v601 = vand.u32 %v395, 4294901760
        %602 = vmatpush.msra.mxu0 %v601
        %v603 = vand.u32 %v391, 4294901760
        %604 = vmatpush.msra.mxu0 %v603
        %v605 = vand.u32 %v387, 4294901760
        %606 = vmatpush.msra.mxu0 %v605
        %v607 = vand.u32 %v383, 4294901760
        %608 = vmatpush.msra.mxu0 %v607
        %v609 = vand.u32 %v379, 4294901760
        %610 = vmatpush.msra.mxu0 %v609
        %v611 = vand.u32 %v375, 4294901760
        %612 = vmatpush.msra.mxu0 %v611
        %v613 = vand.u32 %v371, 4294901760
        %614 = vmatpush.msra.mxu0 %v613
        %v615 = vand.u32 %v367, 4294901760
        %616 = vmatpush.msra.mxu0 %v615
        %v617 = vand.u32 %v363, 4294901760
        %618 = vmatpush.msra.mxu0 %v617
        %v619 = vand.u32 %v359, 4294901760
        %620 = vmatpush.msra.mxu0 %v619
        %v621 = vand.u32 %v355, 4294901760
        %622 = vmatpush.msra.mxu0 %v621
        %v623 = vand.u32 %v351, 4294901760
        %624 = vmatpush.msra.mxu0 %v623
        %v625 = vand.u32 %v347, 4294901760
        %626 = vmatpush.msra.mxu0 %v625
        %v627 = vand.u32 %v343, 4294901760
        %628 = vmatpush.msra.mxu0 %v627
        %v629 = vand.u32 %v339, 4294901760
        %630 = vmatpush.msra.mxu0 %v629
        %v631 = vand.u32 %v183, 4294901760
        %v632 = vsub.f32 %v183, %v631
        %v633 = vand.u32 %v632, 4294901760
        %v634 = vsub.f32 %v632, %v633
        %v635 = vand.u32 %v634, 4294901760
        %636 = vmatmul.f32.gmra.mxu0 %v635
        %v637 = vpop.f32.mrf.mxu0
        %v638 = vadd.f32 0.0, %v637
        %v639 = vand.u32 %v184, 4294901760
        %v640 = vsub.f32 %v184, %v639
        %v641 = vand.u32 %v640, 4294901760
        %v642 = vsub.f32 %v640, %v641
        %v643 = vand.u32 %v642, 4294901760
        %644 = vmatmul.f32.gmra.mxu0 %v643
        %v645 = vpop.f32.mrf.mxu0
        %v646 = vadd.f32 0.0, %v645
        %v647 = vand.u32 %v185, 4294901760
        %v648 = vsub.f32 %v185, %v647
        %v649 = vand.u32 %v648, 4294901760
        %v650 = vsub.f32 %v648, %v649
        %v651 = vand.u32 %v650, 4294901760
        %652 = vmatmul.f32.gmra.mxu0 %v651
        %v653 = vpop.f32.mrf.mxu0
        %v654 = vadd.f32 0.0, %v653
        %v655 = vand.u32 %v186, 4294901760
        %v656 = vsub.f32 %v186, %v655
        %v657 = vand.u32 %v656, 4294901760
        %v658 = vsub.f32 %v656, %v657
        %v659 = vand.u32 %v658, 4294901760
        %660 = vmatmul.f32.gmra.mxu0 %v659
        %v661 = vpop.f32.mrf.mxu0
        %v662 = vadd.f32 0.0, %v661
        %v663 = vand.u32 %v187, 4294901760
        %v664 = vsub.f32 %v187, %v663
        %v665 = vand.u32 %v664, 4294901760
        %v666 = vsub.f32 %v664, %v665
        %v667 = vand.u32 %v666, 4294901760
        %668 = vmatmul.f32.gmra.mxu0 %v667
        %v669 = vpop.f32.mrf.mxu0
        %v670 = vadd.f32 0.0, %v669
        %671 = vdwg.mxu0
        %v672 = vand.u32 %v399, 4294901760
        %v673 = vsub.f32 %v399, %v672
        %v674 = vand.u32 %v673, 4294901760
        %v675 = vsub.f32 %v673, %v674
        %v676 = vand.u32 %v675, 4294901760
        %677 = vmatpush.msra.mxu0 %v676
        %v678 = vand.u32 %v395, 4294901760
        %v679 = vsub.f32 %v395, %v678
        %v680 = vand.u32 %v679, 4294901760
        %v681 = vsub.f32 %v679, %v680
        %v682 = vand.u32 %v681, 4294901760
        %683 = vmatpush.msra.mxu0 %v682
        %v684 = vand.u32 %v391, 4294901760
        %v685 = vsub.f32 %v391, %v684
        %v686 = vand.u32 %v685, 4294901760
        %v687 = vsub.f32 %v685, %v686
        %v688 = vand.u32 %v687, 4294901760
        %689 = vmatpush.msra.mxu0 %v688
        %v690 = vand.u32 %v387, 4294901760
        %v691 = vsub.f32 %v387, %v690
        %v692 = vand.u32 %v691, 4294901760
        %v693 = vsub.f32 %v691, %v692
        %v694 = vand.u32 %v693, 4294901760
        %695 = vmatpush.msra.mxu0 %v694
        %v696 = vand.u32 %v383, 4294901760
        %v697 = vsub.f32 %v383, %v696
        %v698 = vand.u32 %v697, 4294901760
        %v699 = vsub.f32 %v697, %v698
        %v700 = vand.u32 %v699, 4294901760
        %701 = vmatpush.msra.mxu0 %v700
        %v702 = vand.u32 %v379, 4294901760
        %v703 = vsub.f32 %v379, %v702
        %v704 = vand.u32 %v703, 4294901760
        %v705 = vsub.f32 %v703, %v704
        %v706 = vand.u32 %v705, 4294901760
        %707 = vmatpush.msra.mxu0 %v706
        %v708 = vand.u32 %v375, 4294901760
        %v709 = vsub.f32 %v375, %v708
        %v710 = vand.u32 %v709, 4294901760
        %v711 = vsub.f32 %v709, %v710
        %v712 = vand.u32 %v711, 4294901760
        %713 = vmatpush.msra.mxu0 %v712
        %v714 = vand.u32 %v371, 4294901760
        %v715 = vsub.f32 %v371, %v714
        %v716 = vand.u32 %v715, 4294901760
        %v717 = vsub.f32 %v715, %v716
        %v718 = vand.u32 %v717, 4294901760
        %719 = vmatpush.msra.mxu0 %v718
        %v720 = vand.u32 %v367, 4294901760
        %v721 = vsub.f32 %v367, %v720
        %v722 = vand.u32 %v721, 4294901760
        %v723 = vsub.f32 %v721, %v722
        %v724 = vand.u32 %v723, 4294901760
        %725 = vmatpush.msra.mxu0 %v724
        %v726 = vand.u32 %v363, 4294901760
        %v727 = vsub.f32 %v363, %v726
        %v728 = vand.u32 %v727, 4294901760
        %v729 = vsub.f32 %v727, %v728
        %v730 = vand.u32 %v729, 4294901760
        %731 = vmatpush.msra.mxu0 %v730
        %v732 = vand.u32 %v359, 4294901760
        %v733 = vsub.f32 %v359, %v732
        %v734 = vand.u32 %v733, 4294901760
        %v735 = vsub.f32 %v733, %v734
        %v736 = vand.u32 %v735, 4294901760
        %737 = vmatpush.msra.mxu0 %v736
        %v738 = vand.u32 %v355, 4294901760
        %v739 = vsub.f32 %v355, %v738
        %v740 = vand.u32 %v739, 4294901760
        %v741 = vsub.f32 %v739, %v740
        %v742 = vand.u32 %v741, 4294901760
        %743 = vmatpush.msra.mxu0 %v742
        %v744 = vand.u32 %v351, 4294901760
        %v745 = vsub.f32 %v351, %v744
        %v746 = vand.u32 %v745, 4294901760
        %v747 = vsub.f32 %v745, %v746
        %v748 = vand.u32 %v747, 4294901760
        %749 = vmatpush.msra.mxu0 %v748
        %v750 = vand.u32 %v347, 4294901760
        %v751 = vsub.f32 %v347, %v750
        %v752 = vand.u32 %v751, 4294901760
        %v753 = vsub.f32 %v751, %v752
        %v754 = vand.u32 %v753, 4294901760
        %755 = vmatpush.msra.mxu0 %v754
        %v756 = vand.u32 %v343, 4294901760
        %v757 = vsub.f32 %v343, %v756
        %v758 = vand.u32 %v757, 4294901760
        %v759 = vsub.f32 %v757, %v758
        %v760 = vand.u32 %v759, 4294901760
        %761 = vmatpush.msra.mxu0 %v760
        %v762 = vand.u32 %v339, 4294901760
        %v763 = vsub.f32 %v339, %v762
        %v764 = vand.u32 %v763, 4294901760
        %v765 = vsub.f32 %v763, %v764
        %v766 = vand.u32 %v765, 4294901760
        %767 = vmatpush.msra.mxu0 %v766
        %v768 = vand.u32 %v183, 4294901760
        %769 = vmatmul.f32.gmra.mxu0 %v768
        %v770 = vpop.f32.mrf.mxu0
        %v771 = vadd.f32 %v638, %v770
        %v772 = vand.u32 %v184, 4294901760
        %773 = vmatmul.f32.gmra.mxu0 %v772
        %v774 = vpop.f32.mrf.mxu0
        %v775 = vadd.f32 %v646, %v774
        %v776 = vand.u32 %v185, 4294901760
        %777 = vmatmul.f32.gmra.mxu0 %v776
        %v778 = vpop.f32.mrf.mxu0
        %v779 = vadd.f32 %v654, %v778
        %v780 = vand.u32 %v186, 4294901760
        %781 = vmatmul.f32.gmra.mxu0 %v780
        %v782 = vpop.f32.mrf.mxu0
        %v783 = vadd.f32 %v662, %v782
        %v784 = vand.u32 %v187, 4294901760
        %785 = vmatmul.f32.gmra.mxu0 %v784
        %v786 = vpop.f32.mrf.mxu0
        %v787 = vadd.f32 %v670, %v786
        %788 = vdwg.mxu0
        %v789 = vand.u32 %v399, 4294901760
        %v790 = vsub.f32 %v399, %v789
        %791 = vmatpush.msra.mxu0 %v790
        %v792 = vand.u32 %v395, 4294901760
        %v793 = vsub.f32 %v395, %v792
        %794 = vmatpush.msra.mxu0 %v793
        %v795 = vand.u32 %v391, 4294901760
        %v796 = vsub.f32 %v391, %v795
        %797 = vmatpush.msra.mxu0 %v796
        %v798 = vand.u32 %v387, 4294901760
        %v799 = vsub.f32 %v387, %v798
        %800 = vmatpush.msra.mxu0 %v799
        %v801 = vand.u32 %v383, 4294901760
        %v802 = vsub.f32 %v383, %v801
        %803 = vmatpush.msra.mxu0 %v802
        %v804 = vand.u32 %v379, 4294901760
        %v805 = vsub.f32 %v379, %v804
        %806 = vmatpush.msra.mxu0 %v805
        %v807 = vand.u32 %v375, 4294901760
        %v808 = vsub.f32 %v375, %v807
        %809 = vmatpush.msra.mxu0 %v808
        %v810 = vand.u32 %v371, 4294901760
        %v811 = vsub.f32 %v371, %v810
        %812 = vmatpush.msra.mxu0 %v811
        %v813 = vand.u32 %v367, 4294901760
        %v814 = vsub.f32 %v367, %v813
        %815 = vmatpush.msra.mxu0 %v814
        %v816 = vand.u32 %v363, 4294901760
        %v817 = vsub.f32 %v363, %v816
        %818 = vmatpush.msra.mxu0 %v817
        %v819 = vand.u32 %v359, 4294901760
        %v820 = vsub.f32 %v359, %v819
        %821 = vmatpush.msra.mxu0 %v820
        %v822 = vand.u32 %v355, 4294901760
        %v823 = vsub.f32 %v355, %v822
        %824 = vmatpush.msra.mxu0 %v823
        %v825 = vand.u32 %v351, 4294901760
        %v826 = vsub.f32 %v351, %v825
        %827 = vmatpush.msra.mxu0 %v826
        %v828 = vand.u32 %v347, 4294901760
        %v829 = vsub.f32 %v347, %v828
        %830 = vmatpush.msra.mxu0 %v829
        %v831 = vand.u32 %v343, 4294901760
        %v832 = vsub.f32 %v343, %v831
        %833 = vmatpush.msra.mxu0 %v832
        %v834 = vand.u32 %v339, 4294901760
        %v835 = vsub.f32 %v339, %v834
        %836 = vmatpush.msra.mxu0 %v835
        %v837 = vand.u32 %v183, 4294901760
        %v838 = vsub.f32 %v183, %v837
        %839 = vmatmul.f32.gmra.mxu0 %v838
        %v840 = vpop.f32.mrf.mxu0
        %v841 = vadd.f32 %v771, %v840
        %v842 = vand.u32 %v184, 4294901760
        %v843 = vsub.f32 %v184, %v842
        %844 = vmatmul.f32.gmra.mxu0 %v843
        %v845 = vpop.f32.mrf.mxu0
        %v846 = vadd.f32 %v775, %v845
        %v847 = vand.u32 %v185, 4294901760
        %v848 = vsub.f32 %v185, %v847
        %849 = vmatmul.f32.gmra.mxu0 %v848
        %v850 = vpop.f32.mrf.mxu0
        %v851 = vadd.f32 %v779, %v850
        %v852 = vand.u32 %v186, 4294901760
        %v853 = vsub.f32 %v186, %v852
        %854 = vmatmul.f32.gmra.mxu0 %v853
        %v855 = vpop.f32.mrf.mxu0
        %v856 = vadd.f32 %v783, %v855
        %v857 = vand.u32 %v187, 4294901760
        %v858 = vsub.f32 %v187, %v857
        %859 = vmatmul.f32.gmra.mxu0 %v858
        %v860 = vpop.f32.mrf.mxu0
        %v861 = vadd.f32 %v787, %v860
        %862 = vdwg.mxu0
        %v863 = vand.u32 %v399, 4294901760
        %864 = vmatpush.msra.mxu0 %v863
        %v865 = vand.u32 %v395, 4294901760
        %866 = vmatpush.msra.mxu0 %v865
        %v867 = vand.u32 %v391, 4294901760
        %868 = vmatpush.msra.mxu0 %v867
        %v869 = vand.u32 %v387, 4294901760
        %870 = vmatpush.msra.mxu0 %v869
        %v871 = vand.u32 %v383, 4294901760
        %872 = vmatpush.msra.mxu0 %v871
        %v873 = vand.u32 %v379, 4294901760
        %874 = vmatpush.msra.mxu0 %v873
        %v875 = vand.u32 %v375, 4294901760
        %876 = vmatpush.msra.mxu0 %v875
        %v877 = vand.u32 %v371, 4294901760
        %878 = vmatpush.msra.mxu0 %v877
        %v879 = vand.u32 %v367, 4294901760
        %880 = vmatpush.msra.mxu0 %v879
        %v881 = vand.u32 %v363, 4294901760
        %882 = vmatpush.msra.mxu0 %v881
        %v883 = vand.u32 %v359, 4294901760
        %884 = vmatpush.msra.mxu0 %v883
        %v885 = vand.u32 %v355, 4294901760
        %886 = vmatpush.msra.mxu0 %v885
        %v887 = vand.u32 %v351, 4294901760
        %888 = vmatpush.msra.mxu0 %v887
        %v889 = vand.u32 %v347, 4294901760
        %890 = vmatpush.msra.mxu0 %v889
        %v891 = vand.u32 %v343, 4294901760
        %892 = vmatpush.msra.mxu0 %v891
        %v893 = vand.u32 %v339, 4294901760
        %894 = vmatpush.msra.mxu0 %v893
        %v895 = vand.u32 %v183, 4294901760
        %v896 = vsub.f32 %v183, %v895
        %v897 = vand.u32 %v896, 4294901760
        %898 = vmatmul.f32.gmra.mxu0 %v897
        %v899 = vpop.f32.mrf.mxu0
        %v900 = vadd.f32 %v841, %v899
        %v901 = vand.u32 %v184, 4294901760
        %v902 = vsub.f32 %v184, %v901
        %v903 = vand.u32 %v902, 4294901760
        %904 = vmatmul.f32.gmra.mxu0 %v903
        %v905 = vpop.f32.mrf.mxu0
        %v906 = vadd.f32 %v846, %v905
        %v907 = vand.u32 %v185, 4294901760
        %v908 = vsub.f32 %v185, %v907
        %v909 = vand.u32 %v908, 4294901760
        %910 = vmatmul.f32.gmra.mxu0 %v909
        %v911 = vpop.f32.mrf.mxu0
        %v912 = vadd.f32 %v851, %v911
        %v913 = vand.u32 %v186, 4294901760
        %v914 = vsub.f32 %v186, %v913
        %v915 = vand.u32 %v914, 4294901760
        %916 = vmatmul.f32.gmra.mxu0 %v915
        %v917 = vpop.f32.mrf.mxu0
        %v918 = vadd.f32 %v856, %v917
        %v919 = vand.u32 %v187, 4294901760
        %v920 = vsub.f32 %v187, %v919
        %v921 = vand.u32 %v920, 4294901760
        %922 = vmatmul.f32.gmra.mxu0 %v921
        %v923 = vpop.f32.mrf.mxu0
        %v924 = vadd.f32 %v861, %v923
        %925 = vdwg.mxu0
        %v926 = vand.u32 %v399, 4294901760
        %v927 = vsub.f32 %v399, %v926
        %v928 = vand.u32 %v927, 4294901760
        %929 = vmatpush.msra.mxu0 %v928
        %v930 = vand.u32 %v395, 4294901760
        %v931 = vsub.f32 %v395, %v930
        %v932 = vand.u32 %v931, 4294901760
        %933 = vmatpush.msra.mxu0 %v932
        %v934 = vand.u32 %v391, 4294901760
        %v935 = vsub.f32 %v391, %v934
        %v936 = vand.u32 %v935, 4294901760
        %937 = vmatpush.msra.mxu0 %v936
        %v938 = vand.u32 %v387, 4294901760
        %v939 = vsub.f32 %v387, %v938
        %v940 = vand.u32 %v939, 4294901760
        %941 = vmatpush.msra.mxu0 %v940
        %v942 = vand.u32 %v383, 4294901760
        %v943 = vsub.f32 %v383, %v942
        %v944 = vand.u32 %v943, 4294901760
        %945 = vmatpush.msra.mxu0 %v944
        %v946 = vand.u32 %v379, 4294901760
        %v947 = vsub.f32 %v379, %v946
        %v948 = vand.u32 %v947, 4294901760
        %949 = vmatpush.msra.mxu0 %v948
        %v950 = vand.u32 %v375, 4294901760
        %v951 = vsub.f32 %v375, %v950
        %v952 = vand.u32 %v951, 4294901760
        %953 = vmatpush.msra.mxu0 %v952
        %v954 = vand.u32 %v371, 4294901760
        %v955 = vsub.f32 %v371, %v954
        %v956 = vand.u32 %v955, 4294901760
        %957 = vmatpush.msra.mxu0 %v956
        %v958 = vand.u32 %v367, 4294901760
        %v959 = vsub.f32 %v367, %v958
        %v960 = vand.u32 %v959, 4294901760
        %961 = vmatpush.msra.mxu0 %v960
        %v962 = vand.u32 %v363, 4294901760
        %v963 = vsub.f32 %v363, %v962
        %v964 = vand.u32 %v963, 4294901760
        %965 = vmatpush.msra.mxu0 %v964
        %v966 = vand.u32 %v359, 4294901760
        %v967 = vsub.f32 %v359, %v966
        %v968 = vand.u32 %v967, 4294901760
        %969 = vmatpush.msra.mxu0 %v968
        %v970 = vand.u32 %v355, 4294901760
        %v971 = vsub.f32 %v355, %v970
        %v972 = vand.u32 %v971, 4294901760
        %973 = vmatpush.msra.mxu0 %v972
        %v974 = vand.u32 %v351, 4294901760
        %v975 = vsub.f32 %v351, %v974
        %v976 = vand.u32 %v975, 4294901760
        %977 = vmatpush.msra.mxu0 %v976
        %v978 = vand.u32 %v347, 4294901760
        %v979 = vsub.f32 %v347, %v978
        %v980 = vand.u32 %v979, 4294901760
        %981 = vmatpush.msra.mxu0 %v980
        %v982 = vand.u32 %v343, 4294901760
        %v983 = vsub.f32 %v343, %v982
        %v984 = vand.u32 %v983, 4294901760
        %985 = vmatpush.msra.mxu0 %v984
        %v986 = vand.u32 %v339, 4294901760
        %v987 = vsub.f32 %v339, %v986
        %v988 = vand.u32 %v987, 4294901760
        %989 = vmatpush.msra.mxu0 %v988
        %v990 = vand.u32 %v183, 4294901760
        %991 = vmatmul.f32.gmra.mxu0 %v990
        %v992 = vpop.f32.mrf.mxu0
        %v993 = vadd.f32 %v900, %v992
        %v994 = vand.u32 %v184, 4294901760
        %995 = vmatmul.f32.gmra.mxu0 %v994
        %v996 = vpop.f32.mrf.mxu0
        %v997 = vadd.f32 %v906, %v996
        %v998 = vand.u32 %v185, 4294901760
        %999 = vmatmul.f32.gmra.mxu0 %v998
        %v1000 = vpop.f32.mrf.mxu0
        %v1001 = vadd.f32 %v912, %v1000
        %v1002 = vand.u32 %v186, 4294901760
        %1003 = vmatmul.f32.gmra.mxu0 %v1002
        %v1004 = vpop.f32.mrf.mxu0
        %v1005 = vadd.f32 %v918, %v1004
        %v1006 = vand.u32 %v187, 4294901760
        %1007 = vmatmul.f32.gmra.mxu0 %v1006
        %v1008 = vpop.f32.mrf.mxu0
        %v1009 = vadd.f32 %v924, %v1008
        %1010 = vdwg.mxu0
        %v1011 = vand.u32 %v399, 4294901760
        %1012 = vmatpush.msra.mxu0 %v1011
        %v1013 = vand.u32 %v395, 4294901760
        %1014 = vmatpush.msra.mxu0 %v1013
        %v1015 = vand.u32 %v391, 4294901760
        %1016 = vmatpush.msra.mxu0 %v1015
        %v1017 = vand.u32 %v387, 4294901760
        %1018 = vmatpush.msra.mxu0 %v1017
        %v1019 = vand.u32 %v383, 4294901760
        %1020 = vmatpush.msra.mxu0 %v1019
        %v1021 = vand.u32 %v379, 4294901760
        %1022 = vmatpush.msra.mxu0 %v1021
        %v1023 = vand.u32 %v375, 4294901760
        %1024 = vmatpush.msra.mxu0 %v1023
        %v1025 = vand.u32 %v371, 4294901760
        %1026 = vmatpush.msra.mxu0 %v1025
        %v1027 = vand.u32 %v367, 4294901760
        %1028 = vmatpush.msra.mxu0 %v1027
        %v1029 = vand.u32 %v363, 4294901760
        %1030 = vmatpush.msra.mxu0 %v1029
        %v1031 = vand.u32 %v359, 4294901760
        %1032 = vmatpush.msra.mxu0 %v1031
        %v1033 = vand.u32 %v355, 4294901760
        %1034 = vmatpush.msra.mxu0 %v1033
        %v1035 = vand.u32 %v351, 4294901760
        %1036 = vmatpush.msra.mxu0 %v1035
        %v1037 = vand.u32 %v347, 4294901760
        %1038 = vmatpush.msra.mxu0 %v1037
        %v1039 = vand.u32 %v343, 4294901760
        %1040 = vmatpush.msra.mxu0 %v1039
        %v1041 = vand.u32 %v339, 4294901760
        %1042 = vmatpush.msra.mxu0 %v1041
        %v1043 = vand.u32 %v183, 4294901760
        %1044 = vmatmul.f32.gmra.mxu0 %v1043
        %v1045 = vpop.f32.mrf.mxu0
        %v1046 = vadd.f32 %v993, %v1045
        %v1047 = vand.u32 %v184, 4294901760
        %1048 = vmatmul.f32.gmra.mxu0 %v1047
        %v1049 = vpop.f32.mrf.mxu0
        %v1050 = vadd.f32 %v997, %v1049
        %v1051 = vand.u32 %v185, 4294901760
        %1052 = vmatmul.f32.gmra.mxu0 %v1051
        %v1053 = vpop.f32.mrf.mxu0
        %v1054 = vadd.f32 %v1001, %v1053
        %v1055 = vand.u32 %v186, 4294901760
        %1056 = vmatmul.f32.gmra.mxu0 %v1055
        %v1057 = vpop.f32.mrf.mxu0
        %v1058 = vadd.f32 %v1005, %v1057
        %v1059 = vand.u32 %v187, 4294901760
        %1060 = vmatmul.f32.gmra.mxu0 %v1059
        %v1061 = vpop.f32.mrf.mxu0
        %v1062 = vadd.f32 %v1009, %v1061
        %1063 = vdwg.mxu0
        %v1064 = vand.u32 %v400, 4294901760
        %1065 = vmatpush.msra.mxu0 %v1064
        %v1066 = vand.u32 %v396, 4294901760
        %1067 = vmatpush.msra.mxu0 %v1066
        %v1068 = vand.u32 %v392, 4294901760
        %1069 = vmatpush.msra.mxu0 %v1068
        %v1070 = vand.u32 %v388, 4294901760
        %1071 = vmatpush.msra.mxu0 %v1070
        %v1072 = vand.u32 %v384, 4294901760
        %1073 = vmatpush.msra.mxu0 %v1072
        %v1074 = vand.u32 %v380, 4294901760
        %1075 = vmatpush.msra.mxu0 %v1074
        %v1076 = vand.u32 %v376, 4294901760
        %1077 = vmatpush.msra.mxu0 %v1076
        %v1078 = vand.u32 %v372, 4294901760
        %1079 = vmatpush.msra.mxu0 %v1078
        %v1080 = vand.u32 %v368, 4294901760
        %1081 = vmatpush.msra.mxu0 %v1080
        %v1082 = vand.u32 %v364, 4294901760
        %1083 = vmatpush.msra.mxu0 %v1082
        %v1084 = vand.u32 %v360, 4294901760
        %1085 = vmatpush.msra.mxu0 %v1084
        %v1086 = vand.u32 %v356, 4294901760
        %1087 = vmatpush.msra.mxu0 %v1086
        %v1088 = vand.u32 %v352, 4294901760
        %1089 = vmatpush.msra.mxu0 %v1088
        %v1090 = vand.u32 %v348, 4294901760
        %1091 = vmatpush.msra.mxu0 %v1090
        %v1092 = vand.u32 %v344, 4294901760
        %1093 = vmatpush.msra.mxu0 %v1092
        %v1094 = vand.u32 %v340, 4294901760
        %1095 = vmatpush.msra.mxu0 %v1094
        %v1096 = vand.u32 %v183, 4294901760
        %v1097 = vsub.f32 %v183, %v1096
        %v1098 = vand.u32 %v1097, 4294901760
        %v1099 = vsub.f32 %v1097, %v1098
        %v1100 = vand.u32 %v1099, 4294901760
        %1101 = vmatmul.f32.gmra.mxu0 %v1100
        %v1102 = vpop.f32.mrf.mxu0
        %v1103 = vadd.f32 0.0, %v1102
        %v1104 = vand.u32 %v184, 4294901760
        %v1105 = vsub.f32 %v184, %v1104
        %v1106 = vand.u32 %v1105, 4294901760
        %v1107 = vsub.f32 %v1105, %v1106
        %v1108 = vand.u32 %v1107, 4294901760
        %1109 = vmatmul.f32.gmra.mxu0 %v1108
        %v1110 = vpop.f32.mrf.mxu0
        %v1111 = vadd.f32 0.0, %v1110
        %v1112 = vand.u32 %v185, 4294901760
        %v1113 = vsub.f32 %v185, %v1112
        %v1114 = vand.u32 %v1113, 4294901760
        %v1115 = vsub.f32 %v1113, %v1114
        %v1116 = vand.u32 %v1115, 4294901760
        %1117 = vmatmul.f32.gmra.mxu0 %v1116
        %v1118 = vpop.f32.mrf.mxu0
        %v1119 = vadd.f32 0.0, %v1118
        %v1120 = vand.u32 %v186, 4294901760
        %v1121 = vsub.f32 %v186, %v1120
        %v1122 = vand.u32 %v1121, 4294901760
        %v1123 = vsub.f32 %v1121, %v1122
        %v1124 = vand.u32 %v1123, 4294901760
        %1125 = vmatmul.f32.gmra.mxu0 %v1124
        %v1126 = vpop.f32.mrf.mxu0
        %v1127 = vadd.f32 0.0, %v1126
        %v1128 = vand.u32 %v187, 4294901760
        %v1129 = vsub.f32 %v187, %v1128
        %v1130 = vand.u32 %v1129, 4294901760
        %v1131 = vsub.f32 %v1129, %v1130
        %v1132 = vand.u32 %v1131, 4294901760
        %1133 = vmatmul.f32.gmra.mxu0 %v1132
        %v1134 = vpop.f32.mrf.mxu0
        %v1135 = vadd.f32 0.0, %v1134
        %1136 = vdwg.mxu0
        %v1137 = vand.u32 %v400, 4294901760
        %v1138 = vsub.f32 %v400, %v1137
        %v1139 = vand.u32 %v1138, 4294901760
        %v1140 = vsub.f32 %v1138, %v1139
        %v1141 = vand.u32 %v1140, 4294901760
        %1142 = vmatpush.msra.mxu0 %v1141
        %v1143 = vand.u32 %v396, 4294901760
        %v1144 = vsub.f32 %v396, %v1143
        %v1145 = vand.u32 %v1144, 4294901760
        %v1146 = vsub.f32 %v1144, %v1145
        %v1147 = vand.u32 %v1146, 4294901760
        %1148 = vmatpush.msra.mxu0 %v1147
        %v1149 = vand.u32 %v392, 4294901760
        %v1150 = vsub.f32 %v392, %v1149
        %v1151 = vand.u32 %v1150, 4294901760
        %v1152 = vsub.f32 %v1150, %v1151
        %v1153 = vand.u32 %v1152, 4294901760
        %1154 = vmatpush.msra.mxu0 %v1153
        %v1155 = vand.u32 %v388, 4294901760
        %v1156 = vsub.f32 %v388, %v1155
        %v1157 = vand.u32 %v1156, 4294901760
        %v1158 = vsub.f32 %v1156, %v1157
        %v1159 = vand.u32 %v1158, 4294901760
        %1160 = vmatpush.msra.mxu0 %v1159
        %v1161 = vand.u32 %v384, 4294901760
        %v1162 = vsub.f32 %v384, %v1161
        %v1163 = vand.u32 %v1162, 4294901760
        %v1164 = vsub.f32 %v1162, %v1163
        %v1165 = vand.u32 %v1164, 4294901760
        %1166 = vmatpush.msra.mxu0 %v1165
        %v1167 = vand.u32 %v380, 4294901760
        %v1168 = vsub.f32 %v380, %v1167
        %v1169 = vand.u32 %v1168, 4294901760
        %v1170 = vsub.f32 %v1168, %v1169
        %v1171 = vand.u32 %v1170, 4294901760
        %1172 = vmatpush.msra.mxu0 %v1171
        %v1173 = vand.u32 %v376, 4294901760
        %v1174 = vsub.f32 %v376, %v1173
        %v1175 = vand.u32 %v1174, 4294901760
        %v1176 = vsub.f32 %v1174, %v1175
        %v1177 = vand.u32 %v1176, 4294901760
        %1178 = vmatpush.msra.mxu0 %v1177
        %v1179 = vand.u32 %v372, 4294901760
        %v1180 = vsub.f32 %v372, %v1179
        %v1181 = vand.u32 %v1180, 4294901760
        %v1182 = vsub.f32 %v1180, %v1181
        %v1183 = vand.u32 %v1182, 4294901760
        %1184 = vmatpush.msra.mxu0 %v1183
        %v1185 = vand.u32 %v368, 4294901760
        %v1186 = vsub.f32 %v368, %v1185
        %v1187 = vand.u32 %v1186, 4294901760
        %v1188 = vsub.f32 %v1186, %v1187
        %v1189 = vand.u32 %v1188, 4294901760
        %1190 = vmatpush.msra.mxu0 %v1189
        %v1191 = vand.u32 %v364, 4294901760
        %v1192 = vsub.f32 %v364, %v1191
        %v1193 = vand.u32 %v1192, 4294901760
        %v1194 = vsub.f32 %v1192, %v1193
        %v1195 = vand.u32 %v1194, 4294901760
        %1196 = vmatpush.msra.mxu0 %v1195
        %v1197 = vand.u32 %v360, 4294901760
        %v1198 = vsub.f32 %v360, %v1197
        %v1199 = vand.u32 %v1198, 4294901760
        %v1200 = vsub.f32 %v1198, %v1199
        %v1201 = vand.u32 %v1200, 4294901760
        %1202 = vmatpush.msra.mxu0 %v1201
        %v1203 = vand.u32 %v356, 4294901760
        %v1204 = vsub.f32 %v356, %v1203
        %v1205 = vand.u32 %v1204, 4294901760
        %v1206 = vsub.f32 %v1204, %v1205
        %v1207 = vand.u32 %v1206, 4294901760
        %1208 = vmatpush.msra.mxu0 %v1207
        %v1209 = vand.u32 %v352, 4294901760
        %v1210 = vsub.f32 %v352, %v1209
        %v1211 = vand.u32 %v1210, 4294901760
        %v1212 = vsub.f32 %v1210, %v1211
        %v1213 = vand.u32 %v1212, 4294901760
        %1214 = vmatpush.msra.mxu0 %v1213
        %v1215 = vand.u32 %v348, 4294901760
        %v1216 = vsub.f32 %v348, %v1215
        %v1217 = vand.u32 %v1216, 4294901760
        %v1218 = vsub.f32 %v1216, %v1217
        %v1219 = vand.u32 %v1218, 4294901760
        %1220 = vmatpush.msra.mxu0 %v1219
        %v1221 = vand.u32 %v344, 4294901760
        %v1222 = vsub.f32 %v344, %v1221
        %v1223 = vand.u32 %v1222, 4294901760
        %v1224 = vsub.f32 %v1222, %v1223
        %v1225 = vand.u32 %v1224, 4294901760
        %1226 = vmatpush.msra.mxu0 %v1225
        %v1227 = vand.u32 %v340, 4294901760
        %v1228 = vsub.f32 %v340, %v1227
        %v1229 = vand.u32 %v1228, 4294901760
        %v1230 = vsub.f32 %v1228, %v1229
        %v1231 = vand.u32 %v1230, 4294901760
        %1232 = vmatpush.msra.mxu0 %v1231
        %v1233 = vand.u32 %v183, 4294901760
        %1234 = vmatmul.f32.gmra.mxu0 %v1233
        %v1235 = vpop.f32.mrf.mxu0
        %v1236 = vadd.f32 %v1103, %v1235
        %v1237 = vand.u32 %v184, 4294901760
        %1238 = vmatmul.f32.gmra.mxu0 %v1237
        %v1239 = vpop.f32.mrf.mxu0
        %v1240 = vadd.f32 %v1111, %v1239
        %v1241 = vand.u32 %v185, 4294901760
        %1242 = vmatmul.f32.gmra.mxu0 %v1241
        %v1243 = vpop.f32.mrf.mxu0
        %v1244 = vadd.f32 %v1119, %v1243
        %v1245 = vand.u32 %v186, 4294901760
        %1246 = vmatmul.f32.gmra.mxu0 %v1245
        %v1247 = vpop.f32.mrf.mxu0
        %v1248 = vadd.f32 %v1127, %v1247
        %v1249 = vand.u32 %v187, 4294901760
        %1250 = vmatmul.f32.gmra.mxu0 %v1249
        %v1251 = vpop.f32.mrf.mxu0
        %v1252 = vadd.f32 %v1135, %v1251
        %1253 = vdwg.mxu0
        %v1254 = vand.u32 %v400, 4294901760
        %v1255 = vsub.f32 %v400, %v1254
        %1256 = vmatpush.msra.mxu0 %v1255
        %v1257 = vand.u32 %v396, 4294901760
        %v1258 = vsub.f32 %v396, %v1257
        %1259 = vmatpush.msra.mxu0 %v1258
        %v1260 = vand.u32 %v392, 4294901760
        %v1261 = vsub.f32 %v392, %v1260
        %1262 = vmatpush.msra.mxu0 %v1261
        %v1263 = vand.u32 %v388, 4294901760
        %v1264 = vsub.f32 %v388, %v1263
        %1265 = vmatpush.msra.mxu0 %v1264
        %v1266 = vand.u32 %v384, 4294901760
        %v1267 = vsub.f32 %v384, %v1266
        %1268 = vmatpush.msra.mxu0 %v1267
        %v1269 = vand.u32 %v380, 4294901760
        %v1270 = vsub.f32 %v380, %v1269
        %1271 = vmatpush.msra.mxu0 %v1270
        %v1272 = vand.u32 %v376, 4294901760
        %v1273 = vsub.f32 %v376, %v1272
        %1274 = vmatpush.msra.mxu0 %v1273
        %v1275 = vand.u32 %v372, 4294901760
        %v1276 = vsub.f32 %v372, %v1275
        %1277 = vmatpush.msra.mxu0 %v1276
        %v1278 = vand.u32 %v368, 4294901760
        %v1279 = vsub.f32 %v368, %v1278
        %1280 = vmatpush.msra.mxu0 %v1279
        %v1281 = vand.u32 %v364, 4294901760
        %v1282 = vsub.f32 %v364, %v1281
        %1283 = vmatpush.msra.mxu0 %v1282
        %v1284 = vand.u32 %v360, 4294901760
        %v1285 = vsub.f32 %v360, %v1284
        %1286 = vmatpush.msra.mxu0 %v1285
        %v1287 = vand.u32 %v356, 4294901760
        %v1288 = vsub.f32 %v356, %v1287
        %1289 = vmatpush.msra.mxu0 %v1288
        %v1290 = vand.u32 %v352, 4294901760
        %v1291 = vsub.f32 %v352, %v1290
        %1292 = vmatpush.msra.mxu0 %v1291
        %v1293 = vand.u32 %v348, 4294901760
        %v1294 = vsub.f32 %v348, %v1293
        %1295 = vmatpush.msra.mxu0 %v1294
        %v1296 = vand.u32 %v344, 4294901760
        %v1297 = vsub.f32 %v344, %v1296
        %1298 = vmatpush.msra.mxu0 %v1297
        %v1299 = vand.u32 %v340, 4294901760
        %v1300 = vsub.f32 %v340, %v1299
        %1301 = vmatpush.msra.mxu0 %v1300
        %v1302 = vand.u32 %v183, 4294901760
        %v1303 = vsub.f32 %v183, %v1302
        %1304 = vmatmul.f32.gmra.mxu0 %v1303
        %v1305 = vpop.f32.mrf.mxu0
        %v1306 = vadd.f32 %v1236, %v1305
        %v1307 = vand.u32 %v184, 4294901760
        %v1308 = vsub.f32 %v184, %v1307
        %1309 = vmatmul.f32.gmra.mxu0 %v1308
        %v1310 = vpop.f32.mrf.mxu0
        %v1311 = vadd.f32 %v1240, %v1310
        %v1312 = vand.u32 %v185, 4294901760
        %v1313 = vsub.f32 %v185, %v1312
        %1314 = vmatmul.f32.gmra.mxu0 %v1313
        %v1315 = vpop.f32.mrf.mxu0
        %v1316 = vadd.f32 %v1244, %v1315
        %v1317 = vand.u32 %v186, 4294901760
        %v1318 = vsub.f32 %v186, %v1317
        %1319 = vmatmul.f32.gmra.mxu0 %v1318
        %v1320 = vpop.f32.mrf.mxu0
        %v1321 = vadd.f32 %v1248, %v1320
        %v1322 = vand.u32 %v187, 4294901760
        %v1323 = vsub.f32 %v187, %v1322
        %1324 = vmatmul.f32.gmra.mxu0 %v1323
        %v1325 = vpop.f32.mrf.mxu0
        %v1326 = vadd.f32 %v1252, %v1325
        %1327 = vdwg.mxu0
        %v1328 = vand.u32 %v400, 4294901760
        %1329 = vmatpush.msra.mxu0 %v1328
        %v1330 = vand.u32 %v396, 4294901760
        %1331 = vmatpush.msra.mxu0 %v1330
        %v1332 = vand.u32 %v392, 4294901760
        %1333 = vmatpush.msra.mxu0 %v1332
        %v1334 = vand.u32 %v388, 4294901760
        %1335 = vmatpush.msra.mxu0 %v1334
        %v1336 = vand.u32 %v384, 4294901760
        %1337 = vmatpush.msra.mxu0 %v1336
        %v1338 = vand.u32 %v380, 4294901760
        %1339 = vmatpush.msra.mxu0 %v1338
        %v1340 = vand.u32 %v376, 4294901760
        %1341 = vmatpush.msra.mxu0 %v1340
        %v1342 = vand.u32 %v372, 4294901760
        %1343 = vmatpush.msra.mxu0 %v1342
        %v1344 = vand.u32 %v368, 4294901760
        %1345 = vmatpush.msra.mxu0 %v1344
        %v1346 = vand.u32 %v364, 4294901760
        %1347 = vmatpush.msra.mxu0 %v1346
        %v1348 = vand.u32 %v360, 4294901760
        %1349 = vmatpush.msra.mxu0 %v1348
        %v1350 = vand.u32 %v356, 4294901760
        %1351 = vmatpush.msra.mxu0 %v1350
        %v1352 = vand.u32 %v352, 4294901760
        %1353 = vmatpush.msra.mxu0 %v1352
        %v1354 = vand.u32 %v348, 4294901760
        %1355 = vmatpush.msra.mxu0 %v1354
        %v1356 = vand.u32 %v344, 4294901760
        %1357 = vmatpush.msra.mxu0 %v1356
        %v1358 = vand.u32 %v340, 4294901760
        %1359 = vmatpush.msra.mxu0 %v1358
        %v1360 = vand.u32 %v183, 4294901760
        %v1361 = vsub.f32 %v183, %v1360
        %v1362 = vand.u32 %v1361, 4294901760
        %1363 = vmatmul.f32.gmra.mxu0 %v1362
        %v1364 = vpop.f32.mrf.mxu0
        %v1365 = vadd.f32 %v1306, %v1364
        %v1366 = vand.u32 %v184, 4294901760
        %v1367 = vsub.f32 %v184, %v1366
        %v1368 = vand.u32 %v1367, 4294901760
        %1369 = vmatmul.f32.gmra.mxu0 %v1368
        %v1370 = vpop.f32.mrf.mxu0
        %v1371 = vadd.f32 %v1311, %v1370
        %v1372 = vand.u32 %v185, 4294901760
        %v1373 = vsub.f32 %v185, %v1372
        %v1374 = vand.u32 %v1373, 4294901760
        %1375 = vmatmul.f32.gmra.mxu0 %v1374
        %v1376 = vpop.f32.mrf.mxu0
        %v1377 = vadd.f32 %v1316, %v1376
        %v1378 = vand.u32 %v186, 4294901760
        %v1379 = vsub.f32 %v186, %v1378
        %v1380 = vand.u32 %v1379, 4294901760
        %1381 = vmatmul.f32.gmra.mxu0 %v1380
        %v1382 = vpop.f32.mrf.mxu0
        %v1383 = vadd.f32 %v1321, %v1382
        %v1384 = vand.u32 %v187, 4294901760
        %v1385 = vsub.f32 %v187, %v1384
        %v1386 = vand.u32 %v1385, 4294901760
        %1387 = vmatmul.f32.gmra.mxu0 %v1386
        %v1388 = vpop.f32.mrf.mxu0
        %v1389 = vadd.f32 %v1326, %v1388
        %1390 = vdwg.mxu0
        %v1391 = vand.u32 %v400, 4294901760
        %v1392 = vsub.f32 %v400, %v1391
        %v1393 = vand.u32 %v1392, 4294901760
        %1394 = vmatpush.msra.mxu0 %v1393
        %v1395 = vand.u32 %v396, 4294901760
        %v1396 = vsub.f32 %v396, %v1395
        %v1397 = vand.u32 %v1396, 4294901760
        %1398 = vmatpush.msra.mxu0 %v1397
        %v1399 = vand.u32 %v392, 4294901760
        %v1400 = vsub.f32 %v392, %v1399
        %v1401 = vand.u32 %v1400, 4294901760
        %1402 = vmatpush.msra.mxu0 %v1401
        %v1403 = vand.u32 %v388, 4294901760
        %v1404 = vsub.f32 %v388, %v1403
        %v1405 = vand.u32 %v1404, 4294901760
        %1406 = vmatpush.msra.mxu0 %v1405
        %v1407 = vand.u32 %v384, 4294901760
        %v1408 = vsub.f32 %v384, %v1407
        %v1409 = vand.u32 %v1408, 4294901760
        %1410 = vmatpush.msra.mxu0 %v1409
        %v1411 = vand.u32 %v380, 4294901760
        %v1412 = vsub.f32 %v380, %v1411
        %v1413 = vand.u32 %v1412, 4294901760
        %1414 = vmatpush.msra.mxu0 %v1413
        %v1415 = vand.u32 %v376, 4294901760
        %v1416 = vsub.f32 %v376, %v1415
        %v1417 = vand.u32 %v1416, 4294901760
        %1418 = vmatpush.msra.mxu0 %v1417
        %v1419 = vand.u32 %v372, 4294901760
        %v1420 = vsub.f32 %v372, %v1419
        %v1421 = vand.u32 %v1420, 4294901760
        %1422 = vmatpush.msra.mxu0 %v1421
        %v1423 = vand.u32 %v368, 4294901760
        %v1424 = vsub.f32 %v368, %v1423
        %v1425 = vand.u32 %v1424, 4294901760
        %1426 = vmatpush.msra.mxu0 %v1425
        %v1427 = vand.u32 %v364, 4294901760
        %v1428 = vsub.f32 %v364, %v1427
        %v1429 = vand.u32 %v1428, 4294901760
        %1430 = vmatpush.msra.mxu0 %v1429
        %v1431 = vand.u32 %v360, 4294901760
        %v1432 = vsub.f32 %v360, %v1431
        %v1433 = vand.u32 %v1432, 4294901760
        %1434 = vmatpush.msra.mxu0 %v1433
        %v1435 = vand.u32 %v356, 4294901760
        %v1436 = vsub.f32 %v356, %v1435
        %v1437 = vand.u32 %v1436, 4294901760
        %1438 = vmatpush.msra.mxu0 %v1437
        %v1439 = vand.u32 %v352, 4294901760
        %v1440 = vsub.f32 %v352, %v1439
        %v1441 = vand.u32 %v1440, 4294901760
        %1442 = vmatpush.msra.mxu0 %v1441
        %v1443 = vand.u32 %v348, 4294901760
        %v1444 = vsub.f32 %v348, %v1443
        %v1445 = vand.u32 %v1444, 4294901760
        %1446 = vmatpush.msra.mxu0 %v1445
        %v1447 = vand.u32 %v344, 4294901760
        %v1448 = vsub.f32 %v344, %v1447
        %v1449 = vand.u32 %v1448, 4294901760
        %1450 = vmatpush.msra.mxu0 %v1449
        %v1451 = vand.u32 %v340, 4294901760
        %v1452 = vsub.f32 %v340, %v1451
        %v1453 = vand.u32 %v1452, 4294901760
        %1454 = vmatpush.msra.mxu0 %v1453
        %v1455 = vand.u32 %v183, 4294901760
        %1456 = vmatmul.f32.gmra.mxu0 %v1455
        %v1457 = vpop.f32.mrf.mxu0
        %v1458 = vadd.f32 %v1365, %v1457
        %v1459 = vand.u32 %v184, 4294901760
        %1460 = vmatmul.f32.gmra.mxu0 %v1459
        %v1461 = vpop.f32.mrf.mxu0
        %v1462 = vadd.f32 %v1371, %v1461
        %v1463 = vand.u32 %v185, 4294901760
        %1464 = vmatmul.f32.gmra.mxu0 %v1463
        %v1465 = vpop.f32.mrf.mxu0
        %v1466 = vadd.f32 %v1377, %v1465
        %v1467 = vand.u32 %v186, 4294901760
        %1468 = vmatmul.f32.gmra.mxu0 %v1467
        %v1469 = vpop.f32.mrf.mxu0
        %v1470 = vadd.f32 %v1383, %v1469
        %v1471 = vand.u32 %v187, 4294901760
        %1472 = vmatmul.f32.gmra.mxu0 %v1471
        %v1473 = vpop.f32.mrf.mxu0
        %v1474 = vadd.f32 %v1389, %v1473
        %1475 = vdwg.mxu0
        %v1476 = vand.u32 %v400, 4294901760
        %1477 = vmatpush.msra.mxu0 %v1476
        %v1478 = vand.u32 %v396, 4294901760
        %1479 = vmatpush.msra.mxu0 %v1478
        %v1480 = vand.u32 %v392, 4294901760
        %1481 = vmatpush.msra.mxu0 %v1480
        %v1482 = vand.u32 %v388, 4294901760
        %1483 = vmatpush.msra.mxu0 %v1482
        %v1484 = vand.u32 %v384, 4294901760
        %1485 = vmatpush.msra.mxu0 %v1484
        %v1486 = vand.u32 %v380, 4294901760
        %1487 = vmatpush.msra.mxu0 %v1486
        %v1488 = vand.u32 %v376, 4294901760
        %1489 = vmatpush.msra.mxu0 %v1488
        %v1490 = vand.u32 %v372, 4294901760
        %1491 = vmatpush.msra.mxu0 %v1490
        %v1492 = vand.u32 %v368, 4294901760
        %1493 = vmatpush.msra.mxu0 %v1492
        %v1494 = vand.u32 %v364, 4294901760
        %1495 = vmatpush.msra.mxu0 %v1494
        %v1496 = vand.u32 %v360, 4294901760
        %1497 = vmatpush.msra.mxu0 %v1496
        %v1498 = vand.u32 %v356, 4294901760
        %1499 = vmatpush.msra.mxu0 %v1498
        %v1500 = vand.u32 %v352, 4294901760
        %1501 = vmatpush.msra.mxu0 %v1500
        %v1502 = vand.u32 %v348, 4294901760
        %1503 = vmatpush.msra.mxu0 %v1502
        %v1504 = vand.u32 %v344, 4294901760
        %1505 = vmatpush.msra.mxu0 %v1504
        %v1506 = vand.u32 %v340, 4294901760
        %1507 = vmatpush.msra.mxu0 %v1506
        %v1508 = vand.u32 %v183, 4294901760
        %1509 = vmatmul.f32.gmra.mxu0 %v1508
        %v1510 = vpop.f32.mrf.mxu0
        %v1511 = vadd.f32 %v1458, %v1510
        %v1512 = vand.u32 %v184, 4294901760
        %1513 = vmatmul.f32.gmra.mxu0 %v1512
        %v1514 = vpop.f32.mrf.mxu0
        %v1515 = vadd.f32 %v1462, %v1514
        %v1516 = vand.u32 %v185, 4294901760
        %1517 = vmatmul.f32.gmra.mxu0 %v1516
        %v1518 = vpop.f32.mrf.mxu0
        %v1519 = vadd.f32 %v1466, %v1518
        %v1520 = vand.u32 %v186, 4294901760
        %1521 = vmatmul.f32.gmra.mxu0 %v1520
        %v1522 = vpop.f32.mrf.mxu0
        %v1523 = vadd.f32 %v1470, %v1522
        %v1524 = vand.u32 %v187, 4294901760
        %1525 = vmatmul.f32.gmra.mxu0 %v1524
        %v1526 = vpop.f32.mrf.mxu0
        %v1527 = vadd.f32 %v1474, %v1526
        %1528 = vdwg.mxu0
        %v1529 = vand.u32 %v401, 4294901760
        %1530 = vmatpush.msra.mxu0 %v1529
        %v1531 = vand.u32 %v397, 4294901760
        %1532 = vmatpush.msra.mxu0 %v1531
        %v1533 = vand.u32 %v393, 4294901760
        %1534 = vmatpush.msra.mxu0 %v1533
        %v1535 = vand.u32 %v389, 4294901760
        %1536 = vmatpush.msra.mxu0 %v1535
        %v1537 = vand.u32 %v385, 4294901760
        %1538 = vmatpush.msra.mxu0 %v1537
        %v1539 = vand.u32 %v381, 4294901760
        %1540 = vmatpush.msra.mxu0 %v1539
        %v1541 = vand.u32 %v377, 4294901760
        %1542 = vmatpush.msra.mxu0 %v1541
        %v1543 = vand.u32 %v373, 4294901760
        %1544 = vmatpush.msra.mxu0 %v1543
        %v1545 = vand.u32 %v369, 4294901760
        %1546 = vmatpush.msra.mxu0 %v1545
        %v1547 = vand.u32 %v365, 4294901760
        %1548 = vmatpush.msra.mxu0 %v1547
        %v1549 = vand.u32 %v361, 4294901760
        %1550 = vmatpush.msra.mxu0 %v1549
        %v1551 = vand.u32 %v357, 4294901760
        %1552 = vmatpush.msra.mxu0 %v1551
        %v1553 = vand.u32 %v353, 4294901760
        %1554 = vmatpush.msra.mxu0 %v1553
        %v1555 = vand.u32 %v349, 4294901760
        %1556 = vmatpush.msra.mxu0 %v1555
        %v1557 = vand.u32 %v345, 4294901760
        %1558 = vmatpush.msra.mxu0 %v1557
        %v1559 = vand.u32 %v341, 4294901760
        %1560 = vmatpush.msra.mxu0 %v1559
        %v1561 = vand.u32 %v183, 4294901760
        %v1562 = vsub.f32 %v183, %v1561
        %v1563 = vand.u32 %v1562, 4294901760
        %v1564 = vsub.f32 %v1562, %v1563
        %v1565 = vand.u32 %v1564, 4294901760
        %1566 = vmatmul.f32.gmra.mxu0 %v1565
        %v1567 = vpop.f32.mrf.mxu0
        %v1568 = vadd.f32 0.0, %v1567
        %v1569 = vand.u32 %v184, 4294901760
        %v1570 = vsub.f32 %v184, %v1569
        %v1571 = vand.u32 %v1570, 4294901760
        %v1572 = vsub.f32 %v1570, %v1571
        %v1573 = vand.u32 %v1572, 4294901760
        %1574 = vmatmul.f32.gmra.mxu0 %v1573
        %v1575 = vpop.f32.mrf.mxu0
        %v1576 = vadd.f32 0.0, %v1575
        %v1577 = vand.u32 %v185, 4294901760
        %v1578 = vsub.f32 %v185, %v1577
        %v1579 = vand.u32 %v1578, 4294901760
        %v1580 = vsub.f32 %v1578, %v1579
        %v1581 = vand.u32 %v1580, 4294901760
        %1582 = vmatmul.f32.gmra.mxu0 %v1581
        %v1583 = vpop.f32.mrf.mxu0
        %v1584 = vadd.f32 0.0, %v1583
        %v1585 = vand.u32 %v186, 4294901760
        %v1586 = vsub.f32 %v186, %v1585
        %v1587 = vand.u32 %v1586, 4294901760
        %v1588 = vsub.f32 %v1586, %v1587
        %v1589 = vand.u32 %v1588, 4294901760
        %1590 = vmatmul.f32.gmra.mxu0 %v1589
        %v1591 = vpop.f32.mrf.mxu0
        %v1592 = vadd.f32 0.0, %v1591
        %v1593 = vand.u32 %v187, 4294901760
        %v1594 = vsub.f32 %v187, %v1593
        %v1595 = vand.u32 %v1594, 4294901760
        %v1596 = vsub.f32 %v1594, %v1595
        %v1597 = vand.u32 %v1596, 4294901760
        %1598 = vmatmul.f32.gmra.mxu0 %v1597
        %v1599 = vpop.f32.mrf.mxu0
        %v1600 = vadd.f32 0.0, %v1599
        %1601 = vdwg.mxu0
        %v1602 = vand.u32 %v401, 4294901760
        %v1603 = vsub.f32 %v401, %v1602
        %v1604 = vand.u32 %v1603, 4294901760
        %v1605 = vsub.f32 %v1603, %v1604
        %v1606 = vand.u32 %v1605, 4294901760
        %1607 = vmatpush.msra.mxu0 %v1606
        %v1608 = vand.u32 %v397, 4294901760
        %v1609 = vsub.f32 %v397, %v1608
        %v1610 = vand.u32 %v1609, 4294901760
        %v1611 = vsub.f32 %v1609, %v1610
        %v1612 = vand.u32 %v1611, 4294901760
        %1613 = vmatpush.msra.mxu0 %v1612
        %v1614 = vand.u32 %v393, 4294901760
        %v1615 = vsub.f32 %v393, %v1614
        %v1616 = vand.u32 %v1615, 4294901760
        %v1617 = vsub.f32 %v1615, %v1616
        %v1618 = vand.u32 %v1617, 4294901760
        %1619 = vmatpush.msra.mxu0 %v1618
        %v1620 = vand.u32 %v389, 4294901760
        %v1621 = vsub.f32 %v389, %v1620
        %v1622 = vand.u32 %v1621, 4294901760
        %v1623 = vsub.f32 %v1621, %v1622
        %v1624 = vand.u32 %v1623, 4294901760
        %1625 = vmatpush.msra.mxu0 %v1624
        %v1626 = vand.u32 %v385, 4294901760
        %v1627 = vsub.f32 %v385, %v1626
        %v1628 = vand.u32 %v1627, 4294901760
        %v1629 = vsub.f32 %v1627, %v1628
        %v1630 = vand.u32 %v1629, 4294901760
        %1631 = vmatpush.msra.mxu0 %v1630
        %v1632 = vand.u32 %v381, 4294901760
        %v1633 = vsub.f32 %v381, %v1632
        %v1634 = vand.u32 %v1633, 4294901760
        %v1635 = vsub.f32 %v1633, %v1634
        %v1636 = vand.u32 %v1635, 4294901760
        %1637 = vmatpush.msra.mxu0 %v1636
        %v1638 = vand.u32 %v377, 4294901760
        %v1639 = vsub.f32 %v377, %v1638
        %v1640 = vand.u32 %v1639, 4294901760
        %v1641 = vsub.f32 %v1639, %v1640
        %v1642 = vand.u32 %v1641, 4294901760
        %1643 = vmatpush.msra.mxu0 %v1642
        %v1644 = vand.u32 %v373, 4294901760
        %v1645 = vsub.f32 %v373, %v1644
        %v1646 = vand.u32 %v1645, 4294901760
        %v1647 = vsub.f32 %v1645, %v1646
        %v1648 = vand.u32 %v1647, 4294901760
        %1649 = vmatpush.msra.mxu0 %v1648
        %v1650 = vand.u32 %v369, 4294901760
        %v1651 = vsub.f32 %v369, %v1650
        %v1652 = vand.u32 %v1651, 4294901760
        %v1653 = vsub.f32 %v1651, %v1652
        %v1654 = vand.u32 %v1653, 4294901760
        %1655 = vmatpush.msra.mxu0 %v1654
        %v1656 = vand.u32 %v365, 4294901760
        %v1657 = vsub.f32 %v365, %v1656
        %v1658 = vand.u32 %v1657, 4294901760
        %v1659 = vsub.f32 %v1657, %v1658
        %v1660 = vand.u32 %v1659, 4294901760
        %1661 = vmatpush.msra.mxu0 %v1660
        %v1662 = vand.u32 %v361, 4294901760
        %v1663 = vsub.f32 %v361, %v1662
        %v1664 = vand.u32 %v1663, 4294901760
        %v1665 = vsub.f32 %v1663, %v1664
        %v1666 = vand.u32 %v1665, 4294901760
        %1667 = vmatpush.msra.mxu0 %v1666
        %v1668 = vand.u32 %v357, 4294901760
        %v1669 = vsub.f32 %v357, %v1668
        %v1670 = vand.u32 %v1669, 4294901760
        %v1671 = vsub.f32 %v1669, %v1670
        %v1672 = vand.u32 %v1671, 4294901760
        %1673 = vmatpush.msra.mxu0 %v1672
        %v1674 = vand.u32 %v353, 4294901760
        %v1675 = vsub.f32 %v353, %v1674
        %v1676 = vand.u32 %v1675, 4294901760
        %v1677 = vsub.f32 %v1675, %v1676
        %v1678 = vand.u32 %v1677, 4294901760
        %1679 = vmatpush.msra.mxu0 %v1678
        %v1680 = vand.u32 %v349, 4294901760
        %v1681 = vsub.f32 %v349, %v1680
        %v1682 = vand.u32 %v1681, 4294901760
        %v1683 = vsub.f32 %v1681, %v1682
        %v1684 = vand.u32 %v1683, 4294901760
        %1685 = vmatpush.msra.mxu0 %v1684
        %v1686 = vand.u32 %v345, 4294901760
        %v1687 = vsub.f32 %v345, %v1686
        %v1688 = vand.u32 %v1687, 4294901760
        %v1689 = vsub.f32 %v1687, %v1688
        %v1690 = vand.u32 %v1689, 4294901760
        %1691 = vmatpush.msra.mxu0 %v1690
        %v1692 = vand.u32 %v341, 4294901760
        %v1693 = vsub.f32 %v341, %v1692
        %v1694 = vand.u32 %v1693, 4294901760
        %v1695 = vsub.f32 %v1693, %v1694
        %v1696 = vand.u32 %v1695, 4294901760
        %1697 = vmatpush.msra.mxu0 %v1696
        %v1698 = vand.u32 %v183, 4294901760
        %1699 = vmatmul.f32.gmra.mxu0 %v1698
        %v1700 = vpop.f32.mrf.mxu0
        %v1701 = vadd.f32 %v1568, %v1700
        %v1702 = vand.u32 %v184, 4294901760
        %1703 = vmatmul.f32.gmra.mxu0 %v1702
        %v1704 = vpop.f32.mrf.mxu0
        %v1705 = vadd.f32 %v1576, %v1704
        %v1706 = vand.u32 %v185, 4294901760
        %1707 = vmatmul.f32.gmra.mxu0 %v1706
        %v1708 = vpop.f32.mrf.mxu0
        %v1709 = vadd.f32 %v1584, %v1708
        %v1710 = vand.u32 %v186, 4294901760
        %1711 = vmatmul.f32.gmra.mxu0 %v1710
        %v1712 = vpop.f32.mrf.mxu0
        %v1713 = vadd.f32 %v1592, %v1712
        %v1714 = vand.u32 %v187, 4294901760
        %1715 = vmatmul.f32.gmra.mxu0 %v1714
        %v1716 = vpop.f32.mrf.mxu0
        %v1717 = vadd.f32 %v1600, %v1716
        %1718 = vdwg.mxu0
        %v1719 = vand.u32 %v401, 4294901760
        %v1720 = vsub.f32 %v401, %v1719
        %1721 = vmatpush.msra.mxu0 %v1720
        %v1722 = vand.u32 %v397, 4294901760
        %v1723 = vsub.f32 %v397, %v1722
        %1724 = vmatpush.msra.mxu0 %v1723
        %v1725 = vand.u32 %v393, 4294901760
        %v1726 = vsub.f32 %v393, %v1725
        %1727 = vmatpush.msra.mxu0 %v1726
        %v1728 = vand.u32 %v389, 4294901760
        %v1729 = vsub.f32 %v389, %v1728
        %1730 = vmatpush.msra.mxu0 %v1729
        %v1731 = vand.u32 %v385, 4294901760
        %v1732 = vsub.f32 %v385, %v1731
        %1733 = vmatpush.msra.mxu0 %v1732
        %v1734 = vand.u32 %v381, 4294901760
        %v1735 = vsub.f32 %v381, %v1734
        %1736 = vmatpush.msra.mxu0 %v1735
        %v1737 = vand.u32 %v377, 4294901760
        %v1738 = vsub.f32 %v377, %v1737
        %1739 = vmatpush.msra.mxu0 %v1738
        %v1740 = vand.u32 %v373, 4294901760
        %v1741 = vsub.f32 %v373, %v1740
        %1742 = vmatpush.msra.mxu0 %v1741
        %v1743 = vand.u32 %v369, 4294901760
        %v1744 = vsub.f32 %v369, %v1743
        %1745 = vmatpush.msra.mxu0 %v1744
        %v1746 = vand.u32 %v365, 4294901760
        %v1747 = vsub.f32 %v365, %v1746
        %1748 = vmatpush.msra.mxu0 %v1747
        %v1749 = vand.u32 %v361, 4294901760
        %v1750 = vsub.f32 %v361, %v1749
        %1751 = vmatpush.msra.mxu0 %v1750
        %v1752 = vand.u32 %v357, 4294901760
        %v1753 = vsub.f32 %v357, %v1752
        %1754 = vmatpush.msra.mxu0 %v1753
        %v1755 = vand.u32 %v353, 4294901760
        %v1756 = vsub.f32 %v353, %v1755
        %1757 = vmatpush.msra.mxu0 %v1756
        %v1758 = vand.u32 %v349, 4294901760
        %v1759 = vsub.f32 %v349, %v1758
        %1760 = vmatpush.msra.mxu0 %v1759
        %v1761 = vand.u32 %v345, 4294901760
        %v1762 = vsub.f32 %v345, %v1761
        %1763 = vmatpush.msra.mxu0 %v1762
        %v1764 = vand.u32 %v341, 4294901760
        %v1765 = vsub.f32 %v341, %v1764
        %1766 = vmatpush.msra.mxu0 %v1765
        %v1767 = vand.u32 %v183, 4294901760
        %v1768 = vsub.f32 %v183, %v1767
        %1769 = vmatmul.f32.gmra.mxu0 %v1768
        %v1770 = vpop.f32.mrf.mxu0
        %v1771 = vadd.f32 %v1701, %v1770
        %v1772 = vand.u32 %v184, 4294901760
        %v1773 = vsub.f32 %v184, %v1772
        %1774 = vmatmul.f32.gmra.mxu0 %v1773
        %v1775 = vpop.f32.mrf.mxu0
        %v1776 = vadd.f32 %v1705, %v1775
        %v1777 = vand.u32 %v185, 4294901760
        %v1778 = vsub.f32 %v185, %v1777
        %1779 = vmatmul.f32.gmra.mxu0 %v1778
        %v1780 = vpop.f32.mrf.mxu0
        %v1781 = vadd.f32 %v1709, %v1780
        %v1782 = vand.u32 %v186, 4294901760
        %v1783 = vsub.f32 %v186, %v1782
        %1784 = vmatmul.f32.gmra.mxu0 %v1783
        %v1785 = vpop.f32.mrf.mxu0
        %v1786 = vadd.f32 %v1713, %v1785
        %v1787 = vand.u32 %v187, 4294901760
        %v1788 = vsub.f32 %v187, %v1787
        %1789 = vmatmul.f32.gmra.mxu0 %v1788
        %v1790 = vpop.f32.mrf.mxu0
        %v1791 = vadd.f32 %v1717, %v1790
        %1792 = vdwg.mxu0
        %v1793 = vand.u32 %v401, 4294901760
        %1794 = vmatpush.msra.mxu0 %v1793
        %v1795 = vand.u32 %v397, 4294901760
        %1796 = vmatpush.msra.mxu0 %v1795
        %v1797 = vand.u32 %v393, 4294901760
        %1798 = vmatpush.msra.mxu0 %v1797
        %v1799 = vand.u32 %v389, 4294901760
        %1800 = vmatpush.msra.mxu0 %v1799
        %v1801 = vand.u32 %v385, 4294901760
        %1802 = vmatpush.msra.mxu0 %v1801
        %v1803 = vand.u32 %v381, 4294901760
        %1804 = vmatpush.msra.mxu0 %v1803
        %v1805 = vand.u32 %v377, 4294901760
        %1806 = vmatpush.msra.mxu0 %v1805
        %v1807 = vand.u32 %v373, 4294901760
        %1808 = vmatpush.msra.mxu0 %v1807
        %v1809 = vand.u32 %v369, 4294901760
        %1810 = vmatpush.msra.mxu0 %v1809
        %v1811 = vand.u32 %v365, 4294901760
        %1812 = vmatpush.msra.mxu0 %v1811
        %v1813 = vand.u32 %v361, 4294901760
        %1814 = vmatpush.msra.mxu0 %v1813
        %v1815 = vand.u32 %v357, 4294901760
        %1816 = vmatpush.msra.mxu0 %v1815
        %v1817 = vand.u32 %v353, 4294901760
        %1818 = vmatpush.msra.mxu0 %v1817
        %v1819 = vand.u32 %v349, 4294901760
        %1820 = vmatpush.msra.mxu0 %v1819
        %v1821 = vand.u32 %v345, 4294901760
        %1822 = vmatpush.msra.mxu0 %v1821
        %v1823 = vand.u32 %v341, 4294901760
        %1824 = vmatpush.msra.mxu0 %v1823
        %v1825 = vand.u32 %v183, 4294901760
        %v1826 = vsub.f32 %v183, %v1825
        %v1827 = vand.u32 %v1826, 4294901760
        %1828 = vmatmul.f32.gmra.mxu0 %v1827
        %v1829 = vpop.f32.mrf.mxu0
        %v1830 = vadd.f32 %v1771, %v1829
        %v1831 = vand.u32 %v184, 4294901760
        %v1832 = vsub.f32 %v184, %v1831
        %v1833 = vand.u32 %v1832, 4294901760
        %1834 = vmatmul.f32.gmra.mxu0 %v1833
        %v1835 = vpop.f32.mrf.mxu0
        %v1836 = vadd.f32 %v1776, %v1835
        %v1837 = vand.u32 %v185, 4294901760
        %v1838 = vsub.f32 %v185, %v1837
        %v1839 = vand.u32 %v1838, 4294901760
        %1840 = vmatmul.f32.gmra.mxu0 %v1839
        %v1841 = vpop.f32.mrf.mxu0
        %v1842 = vadd.f32 %v1781, %v1841
        %v1843 = vand.u32 %v186, 4294901760
        %v1844 = vsub.f32 %v186, %v1843
        %v1845 = vand.u32 %v1844, 4294901760
        %1846 = vmatmul.f32.gmra.mxu0 %v1845
        %v1847 = vpop.f32.mrf.mxu0
        %v1848 = vadd.f32 %v1786, %v1847
        %v1849 = vand.u32 %v187, 4294901760
        %v1850 = vsub.f32 %v187, %v1849
        %v1851 = vand.u32 %v1850, 4294901760
        %1852 = vmatmul.f32.gmra.mxu0 %v1851
        %v1853 = vpop.f32.mrf.mxu0
        %v1854 = vadd.f32 %v1791, %v1853
        %1855 = vdwg.mxu0
        %v1856 = vand.u32 %v401, 4294901760
        %v1857 = vsub.f32 %v401, %v1856
        %v1858 = vand.u32 %v1857, 4294901760
        %1859 = vmatpush.msra.mxu0 %v1858
        %v1860 = vand.u32 %v397, 4294901760
        %v1861 = vsub.f32 %v397, %v1860
        %v1862 = vand.u32 %v1861, 4294901760
        %1863 = vmatpush.msra.mxu0 %v1862
        %v1864 = vand.u32 %v393, 4294901760
        %v1865 = vsub.f32 %v393, %v1864
        %v1866 = vand.u32 %v1865, 4294901760
        %1867 = vmatpush.msra.mxu0 %v1866
        %v1868 = vand.u32 %v389, 4294901760
        %v1869 = vsub.f32 %v389, %v1868
        %v1870 = vand.u32 %v1869, 4294901760
        %1871 = vmatpush.msra.mxu0 %v1870
        %v1872 = vand.u32 %v385, 4294901760
        %v1873 = vsub.f32 %v385, %v1872
        %v1874 = vand.u32 %v1873, 4294901760
        %1875 = vmatpush.msra.mxu0 %v1874
        %v1876 = vand.u32 %v381, 4294901760
        %v1877 = vsub.f32 %v381, %v1876
        %v1878 = vand.u32 %v1877, 4294901760
        %1879 = vmatpush.msra.mxu0 %v1878
        %v1880 = vand.u32 %v377, 4294901760
        %v1881 = vsub.f32 %v377, %v1880
        %v1882 = vand.u32 %v1881, 4294901760
        %1883 = vmatpush.msra.mxu0 %v1882
        %v1884 = vand.u32 %v373, 4294901760
        %v1885 = vsub.f32 %v373, %v1884
        %v1886 = vand.u32 %v1885, 4294901760
        %1887 = vmatpush.msra.mxu0 %v1886
        %v1888 = vand.u32 %v369, 4294901760
        %v1889 = vsub.f32 %v369, %v1888
        %v1890 = vand.u32 %v1889, 4294901760
        %1891 = vmatpush.msra.mxu0 %v1890
        %v1892 = vand.u32 %v365, 4294901760
        %v1893 = vsub.f32 %v365, %v1892
        %v1894 = vand.u32 %v1893, 4294901760
        %1895 = vmatpush.msra.mxu0 %v1894
        %v1896 = vand.u32 %v361, 4294901760
        %v1897 = vsub.f32 %v361, %v1896
        %v1898 = vand.u32 %v1897, 4294901760
        %1899 = vmatpush.msra.mxu0 %v1898
        %v1900 = vand.u32 %v357, 4294901760
        %v1901 = vsub.f32 %v357, %v1900
        %v1902 = vand.u32 %v1901, 4294901760
        %1903 = vmatpush.msra.mxu0 %v1902
        %v1904 = vand.u32 %v353, 4294901760
        %v1905 = vsub.f32 %v353, %v1904
        %v1906 = vand.u32 %v1905, 4294901760
        %1907 = vmatpush.msra.mxu0 %v1906
        %v1908 = vand.u32 %v349, 4294901760
        %v1909 = vsub.f32 %v349, %v1908
        %v1910 = vand.u32 %v1909, 4294901760
        %1911 = vmatpush.msra.mxu0 %v1910
        %v1912 = vand.u32 %v345, 4294901760
        %v1913 = vsub.f32 %v345, %v1912
        %v1914 = vand.u32 %v1913, 4294901760
        %1915 = vmatpush.msra.mxu0 %v1914
        %v1916 = vand.u32 %v341, 4294901760
        %v1917 = vsub.f32 %v341, %v1916
        %v1918 = vand.u32 %v1917, 4294901760
        %1919 = vmatpush.msra.mxu0 %v1918
        %v1920 = vand.u32 %v183, 4294901760
        %1921 = vmatmul.f32.gmra.mxu0 %v1920
        %v1922 = vpop.f32.mrf.mxu0
        %v1923 = vadd.f32 %v1830, %v1922
        %v1924 = vand.u32 %v184, 4294901760
        %1925 = vmatmul.f32.gmra.mxu0 %v1924
        %v1926 = vpop.f32.mrf.mxu0
        %v1927 = vadd.f32 %v1836, %v1926
        %v1928 = vand.u32 %v185, 4294901760
        %1929 = vmatmul.f32.gmra.mxu0 %v1928
        %v1930 = vpop.f32.mrf.mxu0
        %v1931 = vadd.f32 %v1842, %v1930
        %v1932 = vand.u32 %v186, 4294901760
        %1933 = vmatmul.f32.gmra.mxu0 %v1932
        %v1934 = vpop.f32.mrf.mxu0
        %v1935 = vadd.f32 %v1848, %v1934
        %v1936 = vand.u32 %v187, 4294901760
        %1937 = vmatmul.f32.gmra.mxu0 %v1936
        %v1938 = vpop.f32.mrf.mxu0
        %v1939 = vadd.f32 %v1854, %v1938
        %1940 = vdwg.mxu0
        %v1941 = vand.u32 %v401, 4294901760
        %1942 = vmatpush.msra.mxu0 %v1941
        %v1943 = vand.u32 %v397, 4294901760
        %1944 = vmatpush.msra.mxu0 %v1943
        %v1945 = vand.u32 %v393, 4294901760
        %1946 = vmatpush.msra.mxu0 %v1945
        %v1947 = vand.u32 %v389, 4294901760
        %1948 = vmatpush.msra.mxu0 %v1947
        %v1949 = vand.u32 %v385, 4294901760
        %1950 = vmatpush.msra.mxu0 %v1949
        %v1951 = vand.u32 %v381, 4294901760
        %1952 = vmatpush.msra.mxu0 %v1951
        %v1953 = vand.u32 %v377, 4294901760
        %1954 = vmatpush.msra.mxu0 %v1953
        %v1955 = vand.u32 %v373, 4294901760
        %1956 = vmatpush.msra.mxu0 %v1955
        %v1957 = vand.u32 %v369, 4294901760
        %1958 = vmatpush.msra.mxu0 %v1957
        %v1959 = vand.u32 %v365, 4294901760
        %1960 = vmatpush.msra.mxu0 %v1959
        %v1961 = vand.u32 %v361, 4294901760
        %1962 = vmatpush.msra.mxu0 %v1961
        %v1963 = vand.u32 %v357, 4294901760
        %1964 = vmatpush.msra.mxu0 %v1963
        %v1965 = vand.u32 %v353, 4294901760
        %1966 = vmatpush.msra.mxu0 %v1965
        %v1967 = vand.u32 %v349, 4294901760
        %1968 = vmatpush.msra.mxu0 %v1967
        %v1969 = vand.u32 %v345, 4294901760
        %1970 = vmatpush.msra.mxu0 %v1969
        %v1971 = vand.u32 %v341, 4294901760
        %1972 = vmatpush.msra.mxu0 %v1971
        %v1973 = vand.u32 %v183, 4294901760
        %1974 = vmatmul.f32.gmra.mxu0 %v1973
        %v1975 = vpop.f32.mrf.mxu0
        %v1976 = vadd.f32 %v1923, %v1975
        %v1977 = vand.u32 %v184, 4294901760
        %1978 = vmatmul.f32.gmra.mxu0 %v1977
        %v1979 = vpop.f32.mrf.mxu0
        %v1980 = vadd.f32 %v1927, %v1979
        %v1981 = vand.u32 %v185, 4294901760
        %1982 = vmatmul.f32.gmra.mxu0 %v1981
        %v1983 = vpop.f32.mrf.mxu0
        %v1984 = vadd.f32 %v1931, %v1983
        %v1985 = vand.u32 %v186, 4294901760
        %1986 = vmatmul.f32.gmra.mxu0 %v1985
        %v1987 = vpop.f32.mrf.mxu0
        %v1988 = vadd.f32 %v1935, %v1987
        %v1989 = vand.u32 %v187, 4294901760
        %1990 = vmatmul.f32.gmra.mxu0 %v1989
        %v1991 = vpop.f32.mrf.mxu0
        %v1992 = vadd.f32 %v1939, %v1991
        %1993 = vdwg.mxu0
        %v1994 = vand.u32 %v402, 4294901760
        %1995 = vmatpush.msra.mxu0 %v1994
        %v1996 = vand.u32 %v398, 4294901760
        %1997 = vmatpush.msra.mxu0 %v1996
        %v1998 = vand.u32 %v394, 4294901760
        %1999 = vmatpush.msra.mxu0 %v1998
        %v2000 = vand.u32 %v390, 4294901760
        %2001 = vmatpush.msra.mxu0 %v2000
        %v2002 = vand.u32 %v386, 4294901760
        %2003 = vmatpush.msra.mxu0 %v2002
        %v2004 = vand.u32 %v382, 4294901760
        %2005 = vmatpush.msra.mxu0 %v2004
        %v2006 = vand.u32 %v378, 4294901760
        %2007 = vmatpush.msra.mxu0 %v2006
        %v2008 = vand.u32 %v374, 4294901760
        %2009 = vmatpush.msra.mxu0 %v2008
        %v2010 = vand.u32 %v370, 4294901760
        %2011 = vmatpush.msra.mxu0 %v2010
        %v2012 = vand.u32 %v366, 4294901760
        %2013 = vmatpush.msra.mxu0 %v2012
        %v2014 = vand.u32 %v362, 4294901760
        %2015 = vmatpush.msra.mxu0 %v2014
        %v2016 = vand.u32 %v358, 4294901760
        %2017 = vmatpush.msra.mxu0 %v2016
        %v2018 = vand.u32 %v354, 4294901760
        %2019 = vmatpush.msra.mxu0 %v2018
        %v2020 = vand.u32 %v350, 4294901760
        %2021 = vmatpush.msra.mxu0 %v2020
        %v2022 = vand.u32 %v346, 4294901760
        %2023 = vmatpush.msra.mxu0 %v2022
        %v2024 = vand.u32 %v342, 4294901760
        %2025 = vmatpush.msra.mxu0 %v2024
        %v2026 = vand.u32 %v183, 4294901760
        %v2027 = vsub.f32 %v183, %v2026
        %v2028 = vand.u32 %v2027, 4294901760
        %v2029 = vsub.f32 %v2027, %v2028
        %v2030 = vand.u32 %v2029, 4294901760
        %2031 = vmatmul.f32.gmra.mxu0 %v2030
        %v2032 = vpop.f32.mrf.mxu0
        %v2033 = vadd.f32 0.0, %v2032
        %v2034 = vand.u32 %v184, 4294901760
        %v2035 = vsub.f32 %v184, %v2034
        %v2036 = vand.u32 %v2035, 4294901760
        %v2037 = vsub.f32 %v2035, %v2036
        %v2038 = vand.u32 %v2037, 4294901760
        %2039 = vmatmul.f32.gmra.mxu0 %v2038
        %v2040 = vpop.f32.mrf.mxu0
        %v2041 = vadd.f32 0.0, %v2040
        %v2042 = vand.u32 %v185, 4294901760
        %v2043 = vsub.f32 %v185, %v2042
        %v2044 = vand.u32 %v2043, 4294901760
        %v2045 = vsub.f32 %v2043, %v2044
        %v2046 = vand.u32 %v2045, 4294901760
        %2047 = vmatmul.f32.gmra.mxu0 %v2046
        %v2048 = vpop.f32.mrf.mxu0
        %v2049 = vadd.f32 0.0, %v2048
        %v2050 = vand.u32 %v186, 4294901760
        %v2051 = vsub.f32 %v186, %v2050
        %v2052 = vand.u32 %v2051, 4294901760
        %v2053 = vsub.f32 %v2051, %v2052
        %v2054 = vand.u32 %v2053, 4294901760
        %2055 = vmatmul.f32.gmra.mxu0 %v2054
        %v2056 = vpop.f32.mrf.mxu0
        %v2057 = vadd.f32 0.0, %v2056
        %v2058 = vand.u32 %v187, 4294901760
        %v2059 = vsub.f32 %v187, %v2058
        %v2060 = vand.u32 %v2059, 4294901760
        %v2061 = vsub.f32 %v2059, %v2060
        %v2062 = vand.u32 %v2061, 4294901760
        %2063 = vmatmul.f32.gmra.mxu0 %v2062
        %v2064 = vpop.f32.mrf.mxu0
        %v2065 = vadd.f32 0.0, %v2064
        %2066 = vdwg.mxu0
        %v2067 = vand.u32 %v402, 4294901760
        %v2068 = vsub.f32 %v402, %v2067
        %v2069 = vand.u32 %v2068, 4294901760
        %v2070 = vsub.f32 %v2068, %v2069
        %v2071 = vand.u32 %v2070, 4294901760
        %2072 = vmatpush.msra.mxu0 %v2071
        %v2073 = vand.u32 %v398, 4294901760
        %v2074 = vsub.f32 %v398, %v2073
        %v2075 = vand.u32 %v2074, 4294901760
        %v2076 = vsub.f32 %v2074, %v2075
        %v2077 = vand.u32 %v2076, 4294901760
        %2078 = vmatpush.msra.mxu0 %v2077
        %v2079 = vand.u32 %v394, 4294901760
        %v2080 = vsub.f32 %v394, %v2079
        %v2081 = vand.u32 %v2080, 4294901760
        %v2082 = vsub.f32 %v2080, %v2081
        %v2083 = vand.u32 %v2082, 4294901760
        %2084 = vmatpush.msra.mxu0 %v2083
        %v2085 = vand.u32 %v390, 4294901760
        %v2086 = vsub.f32 %v390, %v2085
        %v2087 = vand.u32 %v2086, 4294901760
        %v2088 = vsub.f32 %v2086, %v2087
        %v2089 = vand.u32 %v2088, 4294901760
        %2090 = vmatpush.msra.mxu0 %v2089
        %v2091 = vand.u32 %v386, 4294901760
        %v2092 = vsub.f32 %v386, %v2091
        %v2093 = vand.u32 %v2092, 4294901760
        %v2094 = vsub.f32 %v2092, %v2093
        %v2095 = vand.u32 %v2094, 4294901760
        %2096 = vmatpush.msra.mxu0 %v2095
        %v2097 = vand.u32 %v382, 4294901760
        %v2098 = vsub.f32 %v382, %v2097
        %v2099 = vand.u32 %v2098, 4294901760
        %v2100 = vsub.f32 %v2098, %v2099
        %v2101 = vand.u32 %v2100, 4294901760
        %2102 = vmatpush.msra.mxu0 %v2101
        %v2103 = vand.u32 %v378, 4294901760
        %v2104 = vsub.f32 %v378, %v2103
        %v2105 = vand.u32 %v2104, 4294901760
        %v2106 = vsub.f32 %v2104, %v2105
        %v2107 = vand.u32 %v2106, 4294901760
        %2108 = vmatpush.msra.mxu0 %v2107
        %v2109 = vand.u32 %v374, 4294901760
        %v2110 = vsub.f32 %v374, %v2109
        %v2111 = vand.u32 %v2110, 4294901760
        %v2112 = vsub.f32 %v2110, %v2111
        %v2113 = vand.u32 %v2112, 4294901760
        %2114 = vmatpush.msra.mxu0 %v2113
        %v2115 = vand.u32 %v370, 4294901760
        %v2116 = vsub.f32 %v370, %v2115
        %v2117 = vand.u32 %v2116, 4294901760
        %v2118 = vsub.f32 %v2116, %v2117
        %v2119 = vand.u32 %v2118, 4294901760
        %2120 = vmatpush.msra.mxu0 %v2119
        %v2121 = vand.u32 %v366, 4294901760
        %v2122 = vsub.f32 %v366, %v2121
        %v2123 = vand.u32 %v2122, 4294901760
        %v2124 = vsub.f32 %v2122, %v2123
        %v2125 = vand.u32 %v2124, 4294901760
        %2126 = vmatpush.msra.mxu0 %v2125
        %v2127 = vand.u32 %v362, 4294901760
        %v2128 = vsub.f32 %v362, %v2127
        %v2129 = vand.u32 %v2128, 4294901760
        %v2130 = vsub.f32 %v2128, %v2129
        %v2131 = vand.u32 %v2130, 4294901760
        %2132 = vmatpush.msra.mxu0 %v2131
        %v2133 = vand.u32 %v358, 4294901760
        %v2134 = vsub.f32 %v358, %v2133
        %v2135 = vand.u32 %v2134, 4294901760
        %v2136 = vsub.f32 %v2134, %v2135
        %v2137 = vand.u32 %v2136, 4294901760
        %2138 = vmatpush.msra.mxu0 %v2137
        %v2139 = vand.u32 %v354, 4294901760
        %v2140 = vsub.f32 %v354, %v2139
        %v2141 = vand.u32 %v2140, 4294901760
        %v2142 = vsub.f32 %v2140, %v2141
        %v2143 = vand.u32 %v2142, 4294901760
        %2144 = vmatpush.msra.mxu0 %v2143
        %v2145 = vand.u32 %v350, 4294901760
        %v2146 = vsub.f32 %v350, %v2145
        %v2147 = vand.u32 %v2146, 4294901760
        %v2148 = vsub.f32 %v2146, %v2147
        %v2149 = vand.u32 %v2148, 4294901760
        %2150 = vmatpush.msra.mxu0 %v2149
        %v2151 = vand.u32 %v346, 4294901760
        %v2152 = vsub.f32 %v346, %v2151
        %v2153 = vand.u32 %v2152, 4294901760
        %v2154 = vsub.f32 %v2152, %v2153
        %v2155 = vand.u32 %v2154, 4294901760
        %2156 = vmatpush.msra.mxu0 %v2155
        %v2157 = vand.u32 %v342, 4294901760
        %v2158 = vsub.f32 %v342, %v2157
        %v2159 = vand.u32 %v2158, 4294901760
        %v2160 = vsub.f32 %v2158, %v2159
        %v2161 = vand.u32 %v2160, 4294901760
        %2162 = vmatpush.msra.mxu0 %v2161
        %v2163 = vand.u32 %v183, 4294901760
        %2164 = vmatmul.f32.gmra.mxu0 %v2163
        %v2165 = vpop.f32.mrf.mxu0
        %v2166 = vadd.f32 %v2033, %v2165
        %v2167 = vand.u32 %v184, 4294901760
        %2168 = vmatmul.f32.gmra.mxu0 %v2167
        %v2169 = vpop.f32.mrf.mxu0
        %v2170 = vadd.f32 %v2041, %v2169
        %v2171 = vand.u32 %v185, 4294901760
        %2172 = vmatmul.f32.gmra.mxu0 %v2171
        %v2173 = vpop.f32.mrf.mxu0
        %v2174 = vadd.f32 %v2049, %v2173
        %v2175 = vand.u32 %v186, 4294901760
        %2176 = vmatmul.f32.gmra.mxu0 %v2175
        %v2177 = vpop.f32.mrf.mxu0
        %v2178 = vadd.f32 %v2057, %v2177
        %v2179 = vand.u32 %v187, 4294901760
        %2180 = vmatmul.f32.gmra.mxu0 %v2179
        %v2181 = vpop.f32.mrf.mxu0
        %v2182 = vadd.f32 %v2065, %v2181
        %2183 = vdwg.mxu0
        %v2184 = vand.u32 %v402, 4294901760
        %v2185 = vsub.f32 %v402, %v2184
        %2186 = vmatpush.msra.mxu0 %v2185
        %v2187 = vand.u32 %v398, 4294901760
        %v2188 = vsub.f32 %v398, %v2187
        %2189 = vmatpush.msra.mxu0 %v2188
        %v2190 = vand.u32 %v394, 4294901760
        %v2191 = vsub.f32 %v394, %v2190
        %2192 = vmatpush.msra.mxu0 %v2191
        %v2193 = vand.u32 %v390, 4294901760
        %v2194 = vsub.f32 %v390, %v2193
        %2195 = vmatpush.msra.mxu0 %v2194
        %v2196 = vand.u32 %v386, 4294901760
        %v2197 = vsub.f32 %v386, %v2196
        %2198 = vmatpush.msra.mxu0 %v2197
        %v2199 = vand.u32 %v382, 4294901760
        %v2200 = vsub.f32 %v382, %v2199
        %2201 = vmatpush.msra.mxu0 %v2200
        %v2202 = vand.u32 %v378, 4294901760
        %v2203 = vsub.f32 %v378, %v2202
        %2204 = vmatpush.msra.mxu0 %v2203
        %v2205 = vand.u32 %v374, 4294901760
        %v2206 = vsub.f32 %v374, %v2205
        %2207 = vmatpush.msra.mxu0 %v2206
        %v2208 = vand.u32 %v370, 4294901760
        %v2209 = vsub.f32 %v370, %v2208
        %2210 = vmatpush.msra.mxu0 %v2209
        %v2211 = vand.u32 %v366, 4294901760
        %v2212 = vsub.f32 %v366, %v2211
        %2213 = vmatpush.msra.mxu0 %v2212
        %v2214 = vand.u32 %v362, 4294901760
        %v2215 = vsub.f32 %v362, %v2214
        %2216 = vmatpush.msra.mxu0 %v2215
        %v2217 = vand.u32 %v358, 4294901760
        %v2218 = vsub.f32 %v358, %v2217
        %2219 = vmatpush.msra.mxu0 %v2218
        %v2220 = vand.u32 %v354, 4294901760
        %v2221 = vsub.f32 %v354, %v2220
        %2222 = vmatpush.msra.mxu0 %v2221
        %v2223 = vand.u32 %v350, 4294901760
        %v2224 = vsub.f32 %v350, %v2223
        %2225 = vmatpush.msra.mxu0 %v2224
        %v2226 = vand.u32 %v346, 4294901760
        %v2227 = vsub.f32 %v346, %v2226
        %2228 = vmatpush.msra.mxu0 %v2227
        %v2229 = vand.u32 %v342, 4294901760
        %v2230 = vsub.f32 %v342, %v2229
        %2231 = vmatpush.msra.mxu0 %v2230
        %v2232 = vand.u32 %v183, 4294901760
        %v2233 = vsub.f32 %v183, %v2232
        %2234 = vmatmul.f32.gmra.mxu0 %v2233
        %v2235 = vpop.f32.mrf.mxu0
        %v2236 = vadd.f32 %v2166, %v2235
        %v2237 = vand.u32 %v184, 4294901760
        %v2238 = vsub.f32 %v184, %v2237
        %2239 = vmatmul.f32.gmra.mxu0 %v2238
        %v2240 = vpop.f32.mrf.mxu0
        %v2241 = vadd.f32 %v2170, %v2240
        %v2242 = vand.u32 %v185, 4294901760
        %v2243 = vsub.f32 %v185, %v2242
        %2244 = vmatmul.f32.gmra.mxu0 %v2243
        %v2245 = vpop.f32.mrf.mxu0
        %v2246 = vadd.f32 %v2174, %v2245
        %v2247 = vand.u32 %v186, 4294901760
        %v2248 = vsub.f32 %v186, %v2247
        %2249 = vmatmul.f32.gmra.mxu0 %v2248
        %v2250 = vpop.f32.mrf.mxu0
        %v2251 = vadd.f32 %v2178, %v2250
        %v2252 = vand.u32 %v187, 4294901760
        %v2253 = vsub.f32 %v187, %v2252
        %2254 = vmatmul.f32.gmra.mxu0 %v2253
        %v2255 = vpop.f32.mrf.mxu0
        %v2256 = vadd.f32 %v2182, %v2255
        %2257 = vdwg.mxu0
        %v2258 = vand.u32 %v402, 4294901760
        %2259 = vmatpush.msra.mxu0 %v2258
        %v2260 = vand.u32 %v398, 4294901760
        %2261 = vmatpush.msra.mxu0 %v2260
        %v2262 = vand.u32 %v394, 4294901760
        %2263 = vmatpush.msra.mxu0 %v2262
        %v2264 = vand.u32 %v390, 4294901760
        %2265 = vmatpush.msra.mxu0 %v2264
        %v2266 = vand.u32 %v386, 4294901760
        %2267 = vmatpush.msra.mxu0 %v2266
        %v2268 = vand.u32 %v382, 4294901760
        %2269 = vmatpush.msra.mxu0 %v2268
        %v2270 = vand.u32 %v378, 4294901760
        %2271 = vmatpush.msra.mxu0 %v2270
        %v2272 = vand.u32 %v374, 4294901760
        %2273 = vmatpush.msra.mxu0 %v2272
        %v2274 = vand.u32 %v370, 4294901760
        %2275 = vmatpush.msra.mxu0 %v2274
        %v2276 = vand.u32 %v366, 4294901760
        %2277 = vmatpush.msra.mxu0 %v2276
        %v2278 = vand.u32 %v362, 4294901760
        %2279 = vmatpush.msra.mxu0 %v2278
        %v2280 = vand.u32 %v358, 4294901760
        %2281 = vmatpush.msra.mxu0 %v2280
        %v2282 = vand.u32 %v354, 4294901760
        %2283 = vmatpush.msra.mxu0 %v2282
        %v2284 = vand.u32 %v350, 4294901760
        %2285 = vmatpush.msra.mxu0 %v2284
        %v2286 = vand.u32 %v346, 4294901760
        %2287 = vmatpush.msra.mxu0 %v2286
        %v2288 = vand.u32 %v342, 4294901760
        %2289 = vmatpush.msra.mxu0 %v2288
        %v2290 = vand.u32 %v183, 4294901760
        %v2291 = vsub.f32 %v183, %v2290
        %v2292 = vand.u32 %v2291, 4294901760
        %2293 = vmatmul.f32.gmra.mxu0 %v2292
        %v2294 = vpop.f32.mrf.mxu0
        %v2295 = vadd.f32 %v2236, %v2294
        %v2296 = vand.u32 %v184, 4294901760
        %v2297 = vsub.f32 %v184, %v2296
        %v2298 = vand.u32 %v2297, 4294901760
        %2299 = vmatmul.f32.gmra.mxu0 %v2298
        %v2300 = vpop.f32.mrf.mxu0
        %v2301 = vadd.f32 %v2241, %v2300
        %v2302 = vand.u32 %v185, 4294901760
        %v2303 = vsub.f32 %v185, %v2302
        %v2304 = vand.u32 %v2303, 4294901760
        %2305 = vmatmul.f32.gmra.mxu0 %v2304
        %v2306 = vpop.f32.mrf.mxu0
        %v2307 = vadd.f32 %v2246, %v2306
        %v2308 = vand.u32 %v186, 4294901760
        %v2309 = vsub.f32 %v186, %v2308
        %v2310 = vand.u32 %v2309, 4294901760
        %2311 = vmatmul.f32.gmra.mxu0 %v2310
        %v2312 = vpop.f32.mrf.mxu0
        %v2313 = vadd.f32 %v2251, %v2312
        %v2314 = vand.u32 %v187, 4294901760
        %v2315 = vsub.f32 %v187, %v2314
        %v2316 = vand.u32 %v2315, 4294901760
        %2317 = vmatmul.f32.gmra.mxu0 %v2316
        %v2318 = vpop.f32.mrf.mxu0
        %v2319 = vadd.f32 %v2256, %v2318
        %2320 = vdwg.mxu0
        %v2321 = vand.u32 %v402, 4294901760
        %v2322 = vsub.f32 %v402, %v2321
        %v2323 = vand.u32 %v2322, 4294901760
        %2324 = vmatpush.msra.mxu0 %v2323
        %v2325 = vand.u32 %v398, 4294901760
        %v2326 = vsub.f32 %v398, %v2325
        %v2327 = vand.u32 %v2326, 4294901760
        %2328 = vmatpush.msra.mxu0 %v2327
        %v2329 = vand.u32 %v394, 4294901760
        %v2330 = vsub.f32 %v394, %v2329
        %v2331 = vand.u32 %v2330, 4294901760
        %2332 = vmatpush.msra.mxu0 %v2331
        %v2333 = vand.u32 %v390, 4294901760
        %v2334 = vsub.f32 %v390, %v2333
        %v2335 = vand.u32 %v2334, 4294901760
        %2336 = vmatpush.msra.mxu0 %v2335
        %v2337 = vand.u32 %v386, 4294901760
        %v2338 = vsub.f32 %v386, %v2337
        %v2339 = vand.u32 %v2338, 4294901760
        %2340 = vmatpush.msra.mxu0 %v2339
        %v2341 = vand.u32 %v382, 4294901760
        %v2342 = vsub.f32 %v382, %v2341
        %v2343 = vand.u32 %v2342, 4294901760
        %2344 = vmatpush.msra.mxu0 %v2343
        %v2345 = vand.u32 %v378, 4294901760
        %v2346 = vsub.f32 %v378, %v2345
        %v2347 = vand.u32 %v2346, 4294901760
        %2348 = vmatpush.msra.mxu0 %v2347
        %v2349 = vand.u32 %v374, 4294901760
        %v2350 = vsub.f32 %v374, %v2349
        %v2351 = vand.u32 %v2350, 4294901760
        %2352 = vmatpush.msra.mxu0 %v2351
        %v2353 = vand.u32 %v370, 4294901760
        %v2354 = vsub.f32 %v370, %v2353
        %v2355 = vand.u32 %v2354, 4294901760
        %2356 = vmatpush.msra.mxu0 %v2355
        %v2357 = vand.u32 %v366, 4294901760
        %v2358 = vsub.f32 %v366, %v2357
        %v2359 = vand.u32 %v2358, 4294901760
        %2360 = vmatpush.msra.mxu0 %v2359
        %v2361 = vand.u32 %v362, 4294901760
        %v2362 = vsub.f32 %v362, %v2361
        %v2363 = vand.u32 %v2362, 4294901760
        %2364 = vmatpush.msra.mxu0 %v2363
        %v2365 = vand.u32 %v358, 4294901760
        %v2366 = vsub.f32 %v358, %v2365
        %v2367 = vand.u32 %v2366, 4294901760
        %2368 = vmatpush.msra.mxu0 %v2367
        %v2369 = vand.u32 %v354, 4294901760
        %v2370 = vsub.f32 %v354, %v2369
        %v2371 = vand.u32 %v2370, 4294901760
        %2372 = vmatpush.msra.mxu0 %v2371
        %v2373 = vand.u32 %v350, 4294901760
        %v2374 = vsub.f32 %v350, %v2373
        %v2375 = vand.u32 %v2374, 4294901760
        %2376 = vmatpush.msra.mxu0 %v2375
        %v2377 = vand.u32 %v346, 4294901760
        %v2378 = vsub.f32 %v346, %v2377
        %v2379 = vand.u32 %v2378, 4294901760
        %2380 = vmatpush.msra.mxu0 %v2379
        %v2381 = vand.u32 %v342, 4294901760
        %v2382 = vsub.f32 %v342, %v2381
        %v2383 = vand.u32 %v2382, 4294901760
        %2384 = vmatpush.msra.mxu0 %v2383
        %v2385 = vand.u32 %v183, 4294901760
        %2386 = vmatmul.f32.gmra.mxu0 %v2385
        %v2387 = vpop.f32.mrf.mxu0
        %v2388 = vadd.f32 %v2295, %v2387
        %v2389 = vand.u32 %v184, 4294901760
        %2390 = vmatmul.f32.gmra.mxu0 %v2389
        %v2391 = vpop.f32.mrf.mxu0
        %v2392 = vadd.f32 %v2301, %v2391
        %v2393 = vand.u32 %v185, 4294901760
        %2394 = vmatmul.f32.gmra.mxu0 %v2393
        %v2395 = vpop.f32.mrf.mxu0
        %v2396 = vadd.f32 %v2307, %v2395
        %v2397 = vand.u32 %v186, 4294901760
        %2398 = vmatmul.f32.gmra.mxu0 %v2397
        %v2399 = vpop.f32.mrf.mxu0
        %v2400 = vadd.f32 %v2313, %v2399
        %v2401 = vand.u32 %v187, 4294901760
        %2402 = vmatmul.f32.gmra.mxu0 %v2401
        %v2403 = vpop.f32.mrf.mxu0
        %v2404 = vadd.f32 %v2319, %v2403
        %2405 = vdwg.mxu0
        %v2406 = vand.u32 %v402, 4294901760
        %2407 = vmatpush.msra.mxu0 %v2406
        %v2408 = vand.u32 %v398, 4294901760
        %2409 = vmatpush.msra.mxu0 %v2408
        %v2410 = vand.u32 %v394, 4294901760
        %2411 = vmatpush.msra.mxu0 %v2410
        %v2412 = vand.u32 %v390, 4294901760
        %2413 = vmatpush.msra.mxu0 %v2412
        %v2414 = vand.u32 %v386, 4294901760
        %2415 = vmatpush.msra.mxu0 %v2414
        %v2416 = vand.u32 %v382, 4294901760
        %2417 = vmatpush.msra.mxu0 %v2416
        %v2418 = vand.u32 %v378, 4294901760
        %2419 = vmatpush.msra.mxu0 %v2418
        %v2420 = vand.u32 %v374, 4294901760
        %2421 = vmatpush.msra.mxu0 %v2420
        %v2422 = vand.u32 %v370, 4294901760
        %2423 = vmatpush.msra.mxu0 %v2422
        %v2424 = vand.u32 %v366, 4294901760
        %2425 = vmatpush.msra.mxu0 %v2424
        %v2426 = vand.u32 %v362, 4294901760
        %2427 = vmatpush.msra.mxu0 %v2426
        %v2428 = vand.u32 %v358, 4294901760
        %2429 = vmatpush.msra.mxu0 %v2428
        %v2430 = vand.u32 %v354, 4294901760
        %2431 = vmatpush.msra.mxu0 %v2430
        %v2432 = vand.u32 %v350, 4294901760
        %2433 = vmatpush.msra.mxu0 %v2432
        %v2434 = vand.u32 %v346, 4294901760
        %2435 = vmatpush.msra.mxu0 %v2434
        %v2436 = vand.u32 %v342, 4294901760
        %2437 = vmatpush.msra.mxu0 %v2436
        %v2438 = vand.u32 %v183, 4294901760
        %2439 = vmatmul.f32.gmra.mxu0 %v2438
        %v2440 = vpop.f32.mrf.mxu0
        %v2441 = vadd.f32 %v2388, %v2440
        %v2442 = vand.u32 %v184, 4294901760
        %2443 = vmatmul.f32.gmra.mxu0 %v2442
        %v2444 = vpop.f32.mrf.mxu0
        %v2445 = vadd.f32 %v2392, %v2444
        %v2446 = vand.u32 %v185, 4294901760
        %2447 = vmatmul.f32.gmra.mxu0 %v2446
        %v2448 = vpop.f32.mrf.mxu0
        %v2449 = vadd.f32 %v2396, %v2448
        %v2450 = vand.u32 %v186, 4294901760
        %2451 = vmatmul.f32.gmra.mxu0 %v2450
        %v2452 = vpop.f32.mrf.mxu0
        %v2453 = vadd.f32 %v2400, %v2452
        %v2454 = vand.u32 %v187, 4294901760
        %2455 = vmatmul.f32.gmra.mxu0 %v2454
        %v2456 = vpop.f32.mrf.mxu0
        %v2457 = vadd.f32 %v2404, %v2456
        %2458 = vdwg.mxu0
        %v2459 = vand.u32 %v595, 4294901760
        %2460 = vmatpush.msra.mxu0 %v2459
        %v2461 = vand.u32 %v591, 4294901760
        %2462 = vmatpush.msra.mxu0 %v2461
        %v2463 = vand.u32 %v587, 4294901760
        %2464 = vmatpush.msra.mxu0 %v2463
        %v2465 = vand.u32 %v583, 4294901760
        %2466 = vmatpush.msra.mxu0 %v2465
        %v2467 = vand.u32 %v579, 4294901760
        %2468 = vmatpush.msra.mxu0 %v2467
        %v2469 = vand.u32 %v575, 4294901760
        %2470 = vmatpush.msra.mxu0 %v2469
        %v2471 = vand.u32 %v571, 4294901760
        %2472 = vmatpush.msra.mxu0 %v2471
        %v2473 = vand.u32 %v567, 4294901760
        %2474 = vmatpush.msra.mxu0 %v2473
        %v2475 = vand.u32 %v563, 4294901760
        %2476 = vmatpush.msra.mxu0 %v2475
        %v2477 = vand.u32 %v559, 4294901760
        %2478 = vmatpush.msra.mxu0 %v2477
        %v2479 = vand.u32 %v555, 4294901760
        %2480 = vmatpush.msra.mxu0 %v2479
        %v2481 = vand.u32 %v551, 4294901760
        %2482 = vmatpush.msra.mxu0 %v2481
        %v2483 = vand.u32 %v547, 4294901760
        %2484 = vmatpush.msra.mxu0 %v2483
        %v2485 = vand.u32 %v543, 4294901760
        %2486 = vmatpush.msra.mxu0 %v2485
        %v2487 = vand.u32 %v539, 4294901760
        %2488 = vmatpush.msra.mxu0 %v2487
        %v2489 = vand.u32 %v535, 4294901760
        %2490 = vmatpush.msra.mxu0 %v2489
        %v2491 = vand.u32 %v183, 4294901760
        %v2492 = vsub.f32 %v183, %v2491
        %v2493 = vand.u32 %v2492, 4294901760
        %v2494 = vsub.f32 %v2492, %v2493
        %v2495 = vand.u32 %v2494, 4294901760
        %2496 = vmatmul.f32.gmra.mxu0 %v2495
        %v2497 = vpop.f32.mrf.mxu0
        %v2498 = vadd.f32 0.0, %v2497
        %v2499 = vand.u32 %v184, 4294901760
        %v2500 = vsub.f32 %v184, %v2499
        %v2501 = vand.u32 %v2500, 4294901760
        %v2502 = vsub.f32 %v2500, %v2501
        %v2503 = vand.u32 %v2502, 4294901760
        %2504 = vmatmul.f32.gmra.mxu0 %v2503
        %v2505 = vpop.f32.mrf.mxu0
        %v2506 = vadd.f32 0.0, %v2505
        %v2507 = vand.u32 %v185, 4294901760
        %v2508 = vsub.f32 %v185, %v2507
        %v2509 = vand.u32 %v2508, 4294901760
        %v2510 = vsub.f32 %v2508, %v2509
        %v2511 = vand.u32 %v2510, 4294901760
        %2512 = vmatmul.f32.gmra.mxu0 %v2511
        %v2513 = vpop.f32.mrf.mxu0
        %v2514 = vadd.f32 0.0, %v2513
        %v2515 = vand.u32 %v186, 4294901760
        %v2516 = vsub.f32 %v186, %v2515
        %v2517 = vand.u32 %v2516, 4294901760
        %v2518 = vsub.f32 %v2516, %v2517
        %v2519 = vand.u32 %v2518, 4294901760
        %2520 = vmatmul.f32.gmra.mxu0 %v2519
        %v2521 = vpop.f32.mrf.mxu0
        %v2522 = vadd.f32 0.0, %v2521
        %v2523 = vand.u32 %v187, 4294901760
        %v2524 = vsub.f32 %v187, %v2523
        %v2525 = vand.u32 %v2524, 4294901760
        %v2526 = vsub.f32 %v2524, %v2525
        %v2527 = vand.u32 %v2526, 4294901760
        %2528 = vmatmul.f32.gmra.mxu0 %v2527
        %v2529 = vpop.f32.mrf.mxu0
        %v2530 = vadd.f32 0.0, %v2529
        %2531 = vdwg.mxu0
        %v2532 = vand.u32 %v595, 4294901760
        %v2533 = vsub.f32 %v595, %v2532
        %v2534 = vand.u32 %v2533, 4294901760
        %v2535 = vsub.f32 %v2533, %v2534
        %v2536 = vand.u32 %v2535, 4294901760
        %2537 = vmatpush.msra.mxu0 %v2536
        %v2538 = vand.u32 %v591, 4294901760
        %v2539 = vsub.f32 %v591, %v2538
        %v2540 = vand.u32 %v2539, 4294901760
        %v2541 = vsub.f32 %v2539, %v2540
        %v2542 = vand.u32 %v2541, 4294901760
        %2543 = vmatpush.msra.mxu0 %v2542
        %v2544 = vand.u32 %v587, 4294901760
        %v2545 = vsub.f32 %v587, %v2544
        %v2546 = vand.u32 %v2545, 4294901760
        %v2547 = vsub.f32 %v2545, %v2546
        %v2548 = vand.u32 %v2547, 4294901760
        %2549 = vmatpush.msra.mxu0 %v2548
        %v2550 = vand.u32 %v583, 4294901760
        %v2551 = vsub.f32 %v583, %v2550
        %v2552 = vand.u32 %v2551, 4294901760
        %v2553 = vsub.f32 %v2551, %v2552
        %v2554 = vand.u32 %v2553, 4294901760
        %2555 = vmatpush.msra.mxu0 %v2554
        %v2556 = vand.u32 %v579, 4294901760
        %v2557 = vsub.f32 %v579, %v2556
        %v2558 = vand.u32 %v2557, 4294901760
        %v2559 = vsub.f32 %v2557, %v2558
        %v2560 = vand.u32 %v2559, 4294901760
        %2561 = vmatpush.msra.mxu0 %v2560
        %v2562 = vand.u32 %v575, 4294901760
        %v2563 = vsub.f32 %v575, %v2562
        %v2564 = vand.u32 %v2563, 4294901760
        %v2565 = vsub.f32 %v2563, %v2564
        %v2566 = vand.u32 %v2565, 4294901760
        %2567 = vmatpush.msra.mxu0 %v2566
        %v2568 = vand.u32 %v571, 4294901760
        %v2569 = vsub.f32 %v571, %v2568
        %v2570 = vand.u32 %v2569, 4294901760
        %v2571 = vsub.f32 %v2569, %v2570
        %v2572 = vand.u32 %v2571, 4294901760
        %2573 = vmatpush.msra.mxu0 %v2572
        %v2574 = vand.u32 %v567, 4294901760
        %v2575 = vsub.f32 %v567, %v2574
        %v2576 = vand.u32 %v2575, 4294901760
        %v2577 = vsub.f32 %v2575, %v2576
        %v2578 = vand.u32 %v2577, 4294901760
        %2579 = vmatpush.msra.mxu0 %v2578
        %v2580 = vand.u32 %v563, 4294901760
        %v2581 = vsub.f32 %v563, %v2580
        %v2582 = vand.u32 %v2581, 4294901760
        %v2583 = vsub.f32 %v2581, %v2582
        %v2584 = vand.u32 %v2583, 4294901760
        %2585 = vmatpush.msra.mxu0 %v2584
        %v2586 = vand.u32 %v559, 4294901760
        %v2587 = vsub.f32 %v559, %v2586
        %v2588 = vand.u32 %v2587, 4294901760
        %v2589 = vsub.f32 %v2587, %v2588
        %v2590 = vand.u32 %v2589, 4294901760
        %2591 = vmatpush.msra.mxu0 %v2590
        %v2592 = vand.u32 %v555, 4294901760
        %v2593 = vsub.f32 %v555, %v2592
        %v2594 = vand.u32 %v2593, 4294901760
        %v2595 = vsub.f32 %v2593, %v2594
        %v2596 = vand.u32 %v2595, 4294901760
        %2597 = vmatpush.msra.mxu0 %v2596
        %v2598 = vand.u32 %v551, 4294901760
        %v2599 = vsub.f32 %v551, %v2598
        %v2600 = vand.u32 %v2599, 4294901760
        %v2601 = vsub.f32 %v2599, %v2600
        %v2602 = vand.u32 %v2601, 4294901760
        %2603 = vmatpush.msra.mxu0 %v2602
        %v2604 = vand.u32 %v547, 4294901760
        %v2605 = vsub.f32 %v547, %v2604
        %v2606 = vand.u32 %v2605, 4294901760
        %v2607 = vsub.f32 %v2605, %v2606
        %v2608 = vand.u32 %v2607, 4294901760
        %2609 = vmatpush.msra.mxu0 %v2608
        %v2610 = vand.u32 %v543, 4294901760
        %v2611 = vsub.f32 %v543, %v2610
        %v2612 = vand.u32 %v2611, 4294901760
        %v2613 = vsub.f32 %v2611, %v2612
        %v2614 = vand.u32 %v2613, 4294901760
        %2615 = vmatpush.msra.mxu0 %v2614
        %v2616 = vand.u32 %v539, 4294901760
        %v2617 = vsub.f32 %v539, %v2616
        %v2618 = vand.u32 %v2617, 4294901760
        %v2619 = vsub.f32 %v2617, %v2618
        %v2620 = vand.u32 %v2619, 4294901760
        %2621 = vmatpush.msra.mxu0 %v2620
        %v2622 = vand.u32 %v535, 4294901760
        %v2623 = vsub.f32 %v535, %v2622
        %v2624 = vand.u32 %v2623, 4294901760
        %v2625 = vsub.f32 %v2623, %v2624
        %v2626 = vand.u32 %v2625, 4294901760
        %2627 = vmatpush.msra.mxu0 %v2626
        %v2628 = vand.u32 %v183, 4294901760
        %2629 = vmatmul.f32.gmra.mxu0 %v2628
        %v2630 = vpop.f32.mrf.mxu0
        %v2631 = vadd.f32 %v2498, %v2630
        %v2632 = vand.u32 %v184, 4294901760
        %2633 = vmatmul.f32.gmra.mxu0 %v2632
        %v2634 = vpop.f32.mrf.mxu0
        %v2635 = vadd.f32 %v2506, %v2634
        %v2636 = vand.u32 %v185, 4294901760
        %2637 = vmatmul.f32.gmra.mxu0 %v2636
        %v2638 = vpop.f32.mrf.mxu0
        %v2639 = vadd.f32 %v2514, %v2638
        %v2640 = vand.u32 %v186, 4294901760
        %2641 = vmatmul.f32.gmra.mxu0 %v2640
        %v2642 = vpop.f32.mrf.mxu0
        %v2643 = vadd.f32 %v2522, %v2642
        %v2644 = vand.u32 %v187, 4294901760
        %2645 = vmatmul.f32.gmra.mxu0 %v2644
        %v2646 = vpop.f32.mrf.mxu0
        %v2647 = vadd.f32 %v2530, %v2646
        %2648 = vdwg.mxu0
        %v2649 = vand.u32 %v595, 4294901760
        %v2650 = vsub.f32 %v595, %v2649
        %2651 = vmatpush.msra.mxu0 %v2650
        %v2652 = vand.u32 %v591, 4294901760
        %v2653 = vsub.f32 %v591, %v2652
        %2654 = vmatpush.msra.mxu0 %v2653
        %v2655 = vand.u32 %v587, 4294901760
        %v2656 = vsub.f32 %v587, %v2655
        %2657 = vmatpush.msra.mxu0 %v2656
        %v2658 = vand.u32 %v583, 4294901760
        %v2659 = vsub.f32 %v583, %v2658
        %2660 = vmatpush.msra.mxu0 %v2659
        %v2661 = vand.u32 %v579, 4294901760
        %v2662 = vsub.f32 %v579, %v2661
        %2663 = vmatpush.msra.mxu0 %v2662
        %v2664 = vand.u32 %v575, 4294901760
        %v2665 = vsub.f32 %v575, %v2664
        %2666 = vmatpush.msra.mxu0 %v2665
        %v2667 = vand.u32 %v571, 4294901760
        %v2668 = vsub.f32 %v571, %v2667
        %2669 = vmatpush.msra.mxu0 %v2668
        %v2670 = vand.u32 %v567, 4294901760
        %v2671 = vsub.f32 %v567, %v2670
        %2672 = vmatpush.msra.mxu0 %v2671
        %v2673 = vand.u32 %v563, 4294901760
        %v2674 = vsub.f32 %v563, %v2673
        %2675 = vmatpush.msra.mxu0 %v2674
        %v2676 = vand.u32 %v559, 4294901760
        %v2677 = vsub.f32 %v559, %v2676
        %2678 = vmatpush.msra.mxu0 %v2677
        %v2679 = vand.u32 %v555, 4294901760
        %v2680 = vsub.f32 %v555, %v2679
        %2681 = vmatpush.msra.mxu0 %v2680
        %v2682 = vand.u32 %v551, 4294901760
        %v2683 = vsub.f32 %v551, %v2682
        %2684 = vmatpush.msra.mxu0 %v2683
        %v2685 = vand.u32 %v547, 4294901760
        %v2686 = vsub.f32 %v547, %v2685
        %2687 = vmatpush.msra.mxu0 %v2686
        %v2688 = vand.u32 %v543, 4294901760
        %v2689 = vsub.f32 %v543, %v2688
        %2690 = vmatpush.msra.mxu0 %v2689
        %v2691 = vand.u32 %v539, 4294901760
        %v2692 = vsub.f32 %v539, %v2691
        %2693 = vmatpush.msra.mxu0 %v2692
        %v2694 = vand.u32 %v535, 4294901760
        %v2695 = vsub.f32 %v535, %v2694
        %2696 = vmatpush.msra.mxu0 %v2695
        %v2697 = vand.u32 %v183, 4294901760
        %v2698 = vsub.f32 %v183, %v2697
        %2699 = vmatmul.f32.gmra.mxu0 %v2698
        %v2700 = vpop.f32.mrf.mxu0
        %v2701 = vadd.f32 %v2631, %v2700
        %v2702 = vand.u32 %v184, 4294901760
        %v2703 = vsub.f32 %v184, %v2702
        %2704 = vmatmul.f32.gmra.mxu0 %v2703
        %v2705 = vpop.f32.mrf.mxu0
        %v2706 = vadd.f32 %v2635, %v2705
        %v2707 = vand.u32 %v185, 4294901760
        %v2708 = vsub.f32 %v185, %v2707
        %2709 = vmatmul.f32.gmra.mxu0 %v2708
        %v2710 = vpop.f32.mrf.mxu0
        %v2711 = vadd.f32 %v2639, %v2710
        %v2712 = vand.u32 %v186, 4294901760
        %v2713 = vsub.f32 %v186, %v2712
        %2714 = vmatmul.f32.gmra.mxu0 %v2713
        %v2715 = vpop.f32.mrf.mxu0
        %v2716 = vadd.f32 %v2643, %v2715
        %v2717 = vand.u32 %v187, 4294901760
        %v2718 = vsub.f32 %v187, %v2717
        %2719 = vmatmul.f32.gmra.mxu0 %v2718
        %v2720 = vpop.f32.mrf.mxu0
        %v2721 = vadd.f32 %v2647, %v2720
        %2722 = vdwg.mxu0
        %v2723 = vand.u32 %v595, 4294901760
        %2724 = vmatpush.msra.mxu0 %v2723
        %v2725 = vand.u32 %v591, 4294901760
        %2726 = vmatpush.msra.mxu0 %v2725
        %v2727 = vand.u32 %v587, 4294901760
        %2728 = vmatpush.msra.mxu0 %v2727
        %v2729 = vand.u32 %v583, 4294901760
        %2730 = vmatpush.msra.mxu0 %v2729
        %v2731 = vand.u32 %v579, 4294901760
        %2732 = vmatpush.msra.mxu0 %v2731
        %v2733 = vand.u32 %v575, 4294901760
        %2734 = vmatpush.msra.mxu0 %v2733
        %v2735 = vand.u32 %v571, 4294901760
        %2736 = vmatpush.msra.mxu0 %v2735
        %v2737 = vand.u32 %v567, 4294901760
        %2738 = vmatpush.msra.mxu0 %v2737
        %v2739 = vand.u32 %v563, 4294901760
        %2740 = vmatpush.msra.mxu0 %v2739
        %v2741 = vand.u32 %v559, 4294901760
        %2742 = vmatpush.msra.mxu0 %v2741
        %v2743 = vand.u32 %v555, 4294901760
        %2744 = vmatpush.msra.mxu0 %v2743
        %v2745 = vand.u32 %v551, 4294901760
        %2746 = vmatpush.msra.mxu0 %v2745
        %v2747 = vand.u32 %v547, 4294901760
        %2748 = vmatpush.msra.mxu0 %v2747
        %v2749 = vand.u32 %v543, 4294901760
        %2750 = vmatpush.msra.mxu0 %v2749
        %v2751 = vand.u32 %v539, 4294901760
        %2752 = vmatpush.msra.mxu0 %v2751
        %v2753 = vand.u32 %v535, 4294901760
        %2754 = vmatpush.msra.mxu0 %v2753
        %v2755 = vand.u32 %v183, 4294901760
        %v2756 = vsub.f32 %v183, %v2755
        %v2757 = vand.u32 %v2756, 4294901760
        %2758 = vmatmul.f32.gmra.mxu0 %v2757
        %v2759 = vpop.f32.mrf.mxu0
        %v2760 = vadd.f32 %v2701, %v2759
        %v2761 = vand.u32 %v184, 4294901760
        %v2762 = vsub.f32 %v184, %v2761
        %v2763 = vand.u32 %v2762, 4294901760
        %2764 = vmatmul.f32.gmra.mxu0 %v2763
        %v2765 = vpop.f32.mrf.mxu0
        %v2766 = vadd.f32 %v2706, %v2765
        %v2767 = vand.u32 %v185, 4294901760
        %v2768 = vsub.f32 %v185, %v2767
        %v2769 = vand.u32 %v2768, 4294901760
        %2770 = vmatmul.f32.gmra.mxu0 %v2769
        %v2771 = vpop.f32.mrf.mxu0
        %v2772 = vadd.f32 %v2711, %v2771
        %v2773 = vand.u32 %v186, 4294901760
        %v2774 = vsub.f32 %v186, %v2773
        %v2775 = vand.u32 %v2774, 4294901760
        %2776 = vmatmul.f32.gmra.mxu0 %v2775
        %v2777 = vpop.f32.mrf.mxu0
        %v2778 = vadd.f32 %v2716, %v2777
        %v2779 = vand.u32 %v187, 4294901760
        %v2780 = vsub.f32 %v187, %v2779
        %v2781 = vand.u32 %v2780, 4294901760
        %2782 = vmatmul.f32.gmra.mxu0 %v2781
        %v2783 = vpop.f32.mrf.mxu0
        %v2784 = vadd.f32 %v2721, %v2783
        %2785 = vdwg.mxu0
        %v2786 = vand.u32 %v595, 4294901760
        %v2787 = vsub.f32 %v595, %v2786
        %v2788 = vand.u32 %v2787, 4294901760
        %2789 = vmatpush.msra.mxu0 %v2788
        %v2790 = vand.u32 %v591, 4294901760
        %v2791 = vsub.f32 %v591, %v2790
        %v2792 = vand.u32 %v2791, 4294901760
        %2793 = vmatpush.msra.mxu0 %v2792
        %v2794 = vand.u32 %v587, 4294901760
        %v2795 = vsub.f32 %v587, %v2794
        %v2796 = vand.u32 %v2795, 4294901760
        %2797 = vmatpush.msra.mxu0 %v2796
        %v2798 = vand.u32 %v583, 4294901760
        %v2799 = vsub.f32 %v583, %v2798
        %v2800 = vand.u32 %v2799, 4294901760
        %2801 = vmatpush.msra.mxu0 %v2800
        %v2802 = vand.u32 %v579, 4294901760
        %v2803 = vsub.f32 %v579, %v2802
        %v2804 = vand.u32 %v2803, 4294901760
        %2805 = vmatpush.msra.mxu0 %v2804
        %v2806 = vand.u32 %v575, 4294901760
        %v2807 = vsub.f32 %v575, %v2806
        %v2808 = vand.u32 %v2807, 4294901760
        %2809 = vmatpush.msra.mxu0 %v2808
        %v2810 = vand.u32 %v571, 4294901760
        %v2811 = vsub.f32 %v571, %v2810
        %v2812 = vand.u32 %v2811, 4294901760
        %2813 = vmatpush.msra.mxu0 %v2812
        %v2814 = vand.u32 %v567, 4294901760
        %v2815 = vsub.f32 %v567, %v2814
        %v2816 = vand.u32 %v2815, 4294901760
        %2817 = vmatpush.msra.mxu0 %v2816
        %v2818 = vand.u32 %v563, 4294901760
        %v2819 = vsub.f32 %v563, %v2818
        %v2820 = vand.u32 %v2819, 4294901760
        %2821 = vmatpush.msra.mxu0 %v2820
        %v2822 = vand.u32 %v559, 4294901760
        %v2823 = vsub.f32 %v559, %v2822
        %v2824 = vand.u32 %v2823, 4294901760
        %2825 = vmatpush.msra.mxu0 %v2824
        %v2826 = vand.u32 %v555, 4294901760
        %v2827 = vsub.f32 %v555, %v2826
        %v2828 = vand.u32 %v2827, 4294901760
        %2829 = vmatpush.msra.mxu0 %v2828
        %v2830 = vand.u32 %v551, 4294901760
        %v2831 = vsub.f32 %v551, %v2830
        %v2832 = vand.u32 %v2831, 4294901760
        %2833 = vmatpush.msra.mxu0 %v2832
        %v2834 = vand.u32 %v547, 4294901760
        %v2835 = vsub.f32 %v547, %v2834
        %v2836 = vand.u32 %v2835, 4294901760
        %2837 = vmatpush.msra.mxu0 %v2836
        %v2838 = vand.u32 %v543, 4294901760
        %v2839 = vsub.f32 %v543, %v2838
        %v2840 = vand.u32 %v2839, 4294901760
        %2841 = vmatpush.msra.mxu0 %v2840
        %v2842 = vand.u32 %v539, 4294901760
        %v2843 = vsub.f32 %v539, %v2842
        %v2844 = vand.u32 %v2843, 4294901760
        %2845 = vmatpush.msra.mxu0 %v2844
        %v2846 = vand.u32 %v535, 4294901760
        %v2847 = vsub.f32 %v535, %v2846
        %v2848 = vand.u32 %v2847, 4294901760
        %2849 = vmatpush.msra.mxu0 %v2848
        %v2850 = vand.u32 %v183, 4294901760
        %2851 = vmatmul.f32.gmra.mxu0 %v2850
        %v2852 = vpop.f32.mrf.mxu0
        %v2853 = vadd.f32 %v2760, %v2852
        %v2854 = vand.u32 %v184, 4294901760
        %2855 = vmatmul.f32.gmra.mxu0 %v2854
        %v2856 = vpop.f32.mrf.mxu0
        %v2857 = vadd.f32 %v2766, %v2856
        %v2858 = vand.u32 %v185, 4294901760
        %2859 = vmatmul.f32.gmra.mxu0 %v2858
        %v2860 = vpop.f32.mrf.mxu0
        %v2861 = vadd.f32 %v2772, %v2860
        %v2862 = vand.u32 %v186, 4294901760
        %2863 = vmatmul.f32.gmra.mxu0 %v2862
        %v2864 = vpop.f32.mrf.mxu0
        %v2865 = vadd.f32 %v2778, %v2864
        %v2866 = vand.u32 %v187, 4294901760
        %2867 = vmatmul.f32.gmra.mxu0 %v2866
        %v2868 = vpop.f32.mrf.mxu0
        %v2869 = vadd.f32 %v2784, %v2868
        %2870 = vdwg.mxu0
        %v2871 = vand.u32 %v595, 4294901760
        %2872 = vmatpush.msra.mxu0 %v2871
        %v2873 = vand.u32 %v591, 4294901760
        %2874 = vmatpush.msra.mxu0 %v2873
        %v2875 = vand.u32 %v587, 4294901760
        %2876 = vmatpush.msra.mxu0 %v2875
        %v2877 = vand.u32 %v583, 4294901760
        %2878 = vmatpush.msra.mxu0 %v2877
        %v2879 = vand.u32 %v579, 4294901760
        %2880 = vmatpush.msra.mxu0 %v2879
        %v2881 = vand.u32 %v575, 4294901760
        %2882 = vmatpush.msra.mxu0 %v2881
        %v2883 = vand.u32 %v571, 4294901760
        %2884 = vmatpush.msra.mxu0 %v2883
        %v2885 = vand.u32 %v567, 4294901760
        %2886 = vmatpush.msra.mxu0 %v2885
        %v2887 = vand.u32 %v563, 4294901760
        %2888 = vmatpush.msra.mxu0 %v2887
        %v2889 = vand.u32 %v559, 4294901760
        %2890 = vmatpush.msra.mxu0 %v2889
        %v2891 = vand.u32 %v555, 4294901760
        %2892 = vmatpush.msra.mxu0 %v2891
        %v2893 = vand.u32 %v551, 4294901760
        %2894 = vmatpush.msra.mxu0 %v2893
        %v2895 = vand.u32 %v547, 4294901760
        %2896 = vmatpush.msra.mxu0 %v2895
        %v2897 = vand.u32 %v543, 4294901760
        %2898 = vmatpush.msra.mxu0 %v2897
        %v2899 = vand.u32 %v539, 4294901760
        %2900 = vmatpush.msra.mxu0 %v2899
        %v2901 = vand.u32 %v535, 4294901760
        %2902 = vmatpush.msra.mxu0 %v2901
        %v2903 = vand.u32 %v183, 4294901760
        %2904 = vmatmul.f32.gmra.mxu0 %v2903
        %v2905 = vpop.f32.mrf.mxu0
        %v2906 = vadd.f32 %v2853, %v2905
        %v2907 = vand.u32 %v184, 4294901760
        %2908 = vmatmul.f32.gmra.mxu0 %v2907
        %v2909 = vpop.f32.mrf.mxu0
        %v2910 = vadd.f32 %v2857, %v2909
        %v2911 = vand.u32 %v185, 4294901760
        %2912 = vmatmul.f32.gmra.mxu0 %v2911
        %v2913 = vpop.f32.mrf.mxu0
        %v2914 = vadd.f32 %v2861, %v2913
        %v2915 = vand.u32 %v186, 4294901760
        %2916 = vmatmul.f32.gmra.mxu0 %v2915
        %v2917 = vpop.f32.mrf.mxu0
        %v2918 = vadd.f32 %v2865, %v2917
        %v2919 = vand.u32 %v187, 4294901760
        %2920 = vmatmul.f32.gmra.mxu0 %v2919
        %v2921 = vpop.f32.mrf.mxu0
        %v2922 = vadd.f32 %v2869, %v2921
        %2923 = vdwg.mxu0
        %v2924 = vand.u32 %v596, 4294901760
        %2925 = vmatpush.msra.mxu0 %v2924
        %v2926 = vand.u32 %v592, 4294901760
        %2927 = vmatpush.msra.mxu0 %v2926
        %v2928 = vand.u32 %v588, 4294901760
        %2929 = vmatpush.msra.mxu0 %v2928
        %v2930 = vand.u32 %v584, 4294901760
        %2931 = vmatpush.msra.mxu0 %v2930
        %v2932 = vand.u32 %v580, 4294901760
        %2933 = vmatpush.msra.mxu0 %v2932
        %v2934 = vand.u32 %v576, 4294901760
        %2935 = vmatpush.msra.mxu0 %v2934
        %v2936 = vand.u32 %v572, 4294901760
        %2937 = vmatpush.msra.mxu0 %v2936
        %v2938 = vand.u32 %v568, 4294901760
        %2939 = vmatpush.msra.mxu0 %v2938
        %v2940 = vand.u32 %v564, 4294901760
        %2941 = vmatpush.msra.mxu0 %v2940
        %v2942 = vand.u32 %v560, 4294901760
        %2943 = vmatpush.msra.mxu0 %v2942
        %v2944 = vand.u32 %v556, 4294901760
        %2945 = vmatpush.msra.mxu0 %v2944
        %v2946 = vand.u32 %v552, 4294901760
        %2947 = vmatpush.msra.mxu0 %v2946
        %v2948 = vand.u32 %v548, 4294901760
        %2949 = vmatpush.msra.mxu0 %v2948
        %v2950 = vand.u32 %v544, 4294901760
        %2951 = vmatpush.msra.mxu0 %v2950
        %v2952 = vand.u32 %v540, 4294901760
        %2953 = vmatpush.msra.mxu0 %v2952
        %v2954 = vand.u32 %v536, 4294901760
        %2955 = vmatpush.msra.mxu0 %v2954
        %v2956 = vand.u32 %v183, 4294901760
        %v2957 = vsub.f32 %v183, %v2956
        %v2958 = vand.u32 %v2957, 4294901760
        %v2959 = vsub.f32 %v2957, %v2958
        %v2960 = vand.u32 %v2959, 4294901760
        %2961 = vmatmul.f32.gmra.mxu0 %v2960
        %v2962 = vpop.f32.mrf.mxu0
        %v2963 = vadd.f32 0.0, %v2962
        %v2964 = vand.u32 %v184, 4294901760
        %v2965 = vsub.f32 %v184, %v2964
        %v2966 = vand.u32 %v2965, 4294901760
        %v2967 = vsub.f32 %v2965, %v2966
        %v2968 = vand.u32 %v2967, 4294901760
        %2969 = vmatmul.f32.gmra.mxu0 %v2968
        %v2970 = vpop.f32.mrf.mxu0
        %v2971 = vadd.f32 0.0, %v2970
        %v2972 = vand.u32 %v185, 4294901760
        %v2973 = vsub.f32 %v185, %v2972
        %v2974 = vand.u32 %v2973, 4294901760
        %v2975 = vsub.f32 %v2973, %v2974
        %v2976 = vand.u32 %v2975, 4294901760
        %2977 = vmatmul.f32.gmra.mxu0 %v2976
        %v2978 = vpop.f32.mrf.mxu0
        %v2979 = vadd.f32 0.0, %v2978
        %v2980 = vand.u32 %v186, 4294901760
        %v2981 = vsub.f32 %v186, %v2980
        %v2982 = vand.u32 %v2981, 4294901760
        %v2983 = vsub.f32 %v2981, %v2982
        %v2984 = vand.u32 %v2983, 4294901760
        %2985 = vmatmul.f32.gmra.mxu0 %v2984
        %v2986 = vpop.f32.mrf.mxu0
        %v2987 = vadd.f32 0.0, %v2986
        %v2988 = vand.u32 %v187, 4294901760
        %v2989 = vsub.f32 %v187, %v2988
        %v2990 = vand.u32 %v2989, 4294901760
        %v2991 = vsub.f32 %v2989, %v2990
        %v2992 = vand.u32 %v2991, 4294901760
        %2993 = vmatmul.f32.gmra.mxu0 %v2992
        %v2994 = vpop.f32.mrf.mxu0
        %v2995 = vadd.f32 0.0, %v2994
        %2996 = vdwg.mxu0
        %v2997 = vand.u32 %v596, 4294901760
        %v2998 = vsub.f32 %v596, %v2997
        %v2999 = vand.u32 %v2998, 4294901760
        %v3000 = vsub.f32 %v2998, %v2999
        %v3001 = vand.u32 %v3000, 4294901760
        %3002 = vmatpush.msra.mxu0 %v3001
        %v3003 = vand.u32 %v592, 4294901760
        %v3004 = vsub.f32 %v592, %v3003
        %v3005 = vand.u32 %v3004, 4294901760
        %v3006 = vsub.f32 %v3004, %v3005
        %v3007 = vand.u32 %v3006, 4294901760
        %3008 = vmatpush.msra.mxu0 %v3007
        %v3009 = vand.u32 %v588, 4294901760
        %v3010 = vsub.f32 %v588, %v3009
        %v3011 = vand.u32 %v3010, 4294901760
        %v3012 = vsub.f32 %v3010, %v3011
        %v3013 = vand.u32 %v3012, 4294901760
        %3014 = vmatpush.msra.mxu0 %v3013
        %v3015 = vand.u32 %v584, 4294901760
        %v3016 = vsub.f32 %v584, %v3015
        %v3017 = vand.u32 %v3016, 4294901760
        %v3018 = vsub.f32 %v3016, %v3017
        %v3019 = vand.u32 %v3018, 4294901760
        %3020 = vmatpush.msra.mxu0 %v3019
        %v3021 = vand.u32 %v580, 4294901760
        %v3022 = vsub.f32 %v580, %v3021
        %v3023 = vand.u32 %v3022, 4294901760
        %v3024 = vsub.f32 %v3022, %v3023
        %v3025 = vand.u32 %v3024, 4294901760
        %3026 = vmatpush.msra.mxu0 %v3025
        %v3027 = vand.u32 %v576, 4294901760
        %v3028 = vsub.f32 %v576, %v3027
        %v3029 = vand.u32 %v3028, 4294901760
        %v3030 = vsub.f32 %v3028, %v3029
        %v3031 = vand.u32 %v3030, 4294901760
        %3032 = vmatpush.msra.mxu0 %v3031
        %v3033 = vand.u32 %v572, 4294901760
        %v3034 = vsub.f32 %v572, %v3033
        %v3035 = vand.u32 %v3034, 4294901760
        %v3036 = vsub.f32 %v3034, %v3035
        %v3037 = vand.u32 %v3036, 4294901760
        %3038 = vmatpush.msra.mxu0 %v3037
        %v3039 = vand.u32 %v568, 4294901760
        %v3040 = vsub.f32 %v568, %v3039
        %v3041 = vand.u32 %v3040, 4294901760
        %v3042 = vsub.f32 %v3040, %v3041
        %v3043 = vand.u32 %v3042, 4294901760
        %3044 = vmatpush.msra.mxu0 %v3043
        %v3045 = vand.u32 %v564, 4294901760
        %v3046 = vsub.f32 %v564, %v3045
        %v3047 = vand.u32 %v3046, 4294901760
        %v3048 = vsub.f32 %v3046, %v3047
        %v3049 = vand.u32 %v3048, 4294901760
        %3050 = vmatpush.msra.mxu0 %v3049
        %v3051 = vand.u32 %v560, 4294901760
        %v3052 = vsub.f32 %v560, %v3051
        %v3053 = vand.u32 %v3052, 4294901760
        %v3054 = vsub.f32 %v3052, %v3053
        %v3055 = vand.u32 %v3054, 4294901760
        %3056 = vmatpush.msra.mxu0 %v3055
        %v3057 = vand.u32 %v556, 4294901760
        %v3058 = vsub.f32 %v556, %v3057
        %v3059 = vand.u32 %v3058, 4294901760
        %v3060 = vsub.f32 %v3058, %v3059
        %v3061 = vand.u32 %v3060, 4294901760
        %3062 = vmatpush.msra.mxu0 %v3061
        %v3063 = vand.u32 %v552, 4294901760
        %v3064 = vsub.f32 %v552, %v3063
        %v3065 = vand.u32 %v3064, 4294901760
        %v3066 = vsub.f32 %v3064, %v3065
        %v3067 = vand.u32 %v3066, 4294901760
        %3068 = vmatpush.msra.mxu0 %v3067
        %v3069 = vand.u32 %v548, 4294901760
        %v3070 = vsub.f32 %v548, %v3069
        %v3071 = vand.u32 %v3070, 4294901760
        %v3072 = vsub.f32 %v3070, %v3071
        %v3073 = vand.u32 %v3072, 4294901760
        %3074 = vmatpush.msra.mxu0 %v3073
        %v3075 = vand.u32 %v544, 4294901760
        %v3076 = vsub.f32 %v544, %v3075
        %v3077 = vand.u32 %v3076, 4294901760
        %v3078 = vsub.f32 %v3076, %v3077
        %v3079 = vand.u32 %v3078, 4294901760
        %3080 = vmatpush.msra.mxu0 %v3079
        %v3081 = vand.u32 %v540, 4294901760
        %v3082 = vsub.f32 %v540, %v3081
        %v3083 = vand.u32 %v3082, 4294901760
        %v3084 = vsub.f32 %v3082, %v3083
        %v3085 = vand.u32 %v3084, 4294901760
        %3086 = vmatpush.msra.mxu0 %v3085
        %v3087 = vand.u32 %v536, 4294901760
        %v3088 = vsub.f32 %v536, %v3087
        %v3089 = vand.u32 %v3088, 4294901760
        %v3090 = vsub.f32 %v3088, %v3089
        %v3091 = vand.u32 %v3090, 4294901760
        %3092 = vmatpush.msra.mxu0 %v3091
        %v3093 = vand.u32 %v183, 4294901760
        %3094 = vmatmul.f32.gmra.mxu0 %v3093
        %v3095 = vpop.f32.mrf.mxu0
        %v3096 = vadd.f32 %v2963, %v3095
        %v3097 = vand.u32 %v184, 4294901760
        %3098 = vmatmul.f32.gmra.mxu0 %v3097
        %v3099 = vpop.f32.mrf.mxu0
        %v3100 = vadd.f32 %v2971, %v3099
        %v3101 = vand.u32 %v185, 4294901760
        %3102 = vmatmul.f32.gmra.mxu0 %v3101
        %v3103 = vpop.f32.mrf.mxu0
        %v3104 = vadd.f32 %v2979, %v3103
        %v3105 = vand.u32 %v186, 4294901760
        %3106 = vmatmul.f32.gmra.mxu0 %v3105
        %v3107 = vpop.f32.mrf.mxu0
        %v3108 = vadd.f32 %v2987, %v3107
        %v3109 = vand.u32 %v187, 4294901760
        %3110 = vmatmul.f32.gmra.mxu0 %v3109
        %v3111 = vpop.f32.mrf.mxu0
        %v3112 = vadd.f32 %v2995, %v3111
        %3113 = vdwg.mxu0
        %v3114 = vand.u32 %v596, 4294901760
        %v3115 = vsub.f32 %v596, %v3114
        %3116 = vmatpush.msra.mxu0 %v3115
        %v3117 = vand.u32 %v592, 4294901760
        %v3118 = vsub.f32 %v592, %v3117
        %3119 = vmatpush.msra.mxu0 %v3118
        %v3120 = vand.u32 %v588, 4294901760
        %v3121 = vsub.f32 %v588, %v3120
        %3122 = vmatpush.msra.mxu0 %v3121
        %v3123 = vand.u32 %v584, 4294901760
        %v3124 = vsub.f32 %v584, %v3123
        %3125 = vmatpush.msra.mxu0 %v3124
        %v3126 = vand.u32 %v580, 4294901760
        %v3127 = vsub.f32 %v580, %v3126
        %3128 = vmatpush.msra.mxu0 %v3127
        %v3129 = vand.u32 %v576, 4294901760
        %v3130 = vsub.f32 %v576, %v3129
        %3131 = vmatpush.msra.mxu0 %v3130
        %v3132 = vand.u32 %v572, 4294901760
        %v3133 = vsub.f32 %v572, %v3132
        %3134 = vmatpush.msra.mxu0 %v3133
        %v3135 = vand.u32 %v568, 4294901760
        %v3136 = vsub.f32 %v568, %v3135
        %3137 = vmatpush.msra.mxu0 %v3136
        %v3138 = vand.u32 %v564, 4294901760
        %v3139 = vsub.f32 %v564, %v3138
        %3140 = vmatpush.msra.mxu0 %v3139
        %v3141 = vand.u32 %v560, 4294901760
        %v3142 = vsub.f32 %v560, %v3141
        %3143 = vmatpush.msra.mxu0 %v3142
        %v3144 = vand.u32 %v556, 4294901760
        %v3145 = vsub.f32 %v556, %v3144
        %3146 = vmatpush.msra.mxu0 %v3145
        %v3147 = vand.u32 %v552, 4294901760
        %v3148 = vsub.f32 %v552, %v3147
        %3149 = vmatpush.msra.mxu0 %v3148
        %v3150 = vand.u32 %v548, 4294901760
        %v3151 = vsub.f32 %v548, %v3150
        %3152 = vmatpush.msra.mxu0 %v3151
        %v3153 = vand.u32 %v544, 4294901760
        %v3154 = vsub.f32 %v544, %v3153
        %3155 = vmatpush.msra.mxu0 %v3154
        %v3156 = vand.u32 %v540, 4294901760
        %v3157 = vsub.f32 %v540, %v3156
        %3158 = vmatpush.msra.mxu0 %v3157
        %v3159 = vand.u32 %v536, 4294901760
        %v3160 = vsub.f32 %v536, %v3159
        %3161 = vmatpush.msra.mxu0 %v3160
        %v3162 = vand.u32 %v183, 4294901760
        %v3163 = vsub.f32 %v183, %v3162
        %3164 = vmatmul.f32.gmra.mxu0 %v3163
        %v3165 = vpop.f32.mrf.mxu0
        %v3166 = vadd.f32 %v3096, %v3165
        %v3167 = vand.u32 %v184, 4294901760
        %v3168 = vsub.f32 %v184, %v3167
        %3169 = vmatmul.f32.gmra.mxu0 %v3168
        %v3170 = vpop.f32.mrf.mxu0
        %v3171 = vadd.f32 %v3100, %v3170
        %v3172 = vand.u32 %v185, 4294901760
        %v3173 = vsub.f32 %v185, %v3172
        %3174 = vmatmul.f32.gmra.mxu0 %v3173
        %v3175 = vpop.f32.mrf.mxu0
        %v3176 = vadd.f32 %v3104, %v3175
        %v3177 = vand.u32 %v186, 4294901760
        %v3178 = vsub.f32 %v186, %v3177
        %3179 = vmatmul.f32.gmra.mxu0 %v3178
        %v3180 = vpop.f32.mrf.mxu0
        %v3181 = vadd.f32 %v3108, %v3180
        %v3182 = vand.u32 %v187, 4294901760
        %v3183 = vsub.f32 %v187, %v3182
        %3184 = vmatmul.f32.gmra.mxu0 %v3183
        %v3185 = vpop.f32.mrf.mxu0
        %v3186 = vadd.f32 %v3112, %v3185
        %3187 = vdwg.mxu0
        %v3188 = vand.u32 %v596, 4294901760
        %3189 = vmatpush.msra.mxu0 %v3188
        %v3190 = vand.u32 %v592, 4294901760
        %3191 = vmatpush.msra.mxu0 %v3190
        %v3192 = vand.u32 %v588, 4294901760
        %3193 = vmatpush.msra.mxu0 %v3192
        %v3194 = vand.u32 %v584, 4294901760
        %3195 = vmatpush.msra.mxu0 %v3194
        %v3196 = vand.u32 %v580, 4294901760
        %3197 = vmatpush.msra.mxu0 %v3196
        %v3198 = vand.u32 %v576, 4294901760
        %3199 = vmatpush.msra.mxu0 %v3198
        %v3200 = vand.u32 %v572, 4294901760
        %3201 = vmatpush.msra.mxu0 %v3200
        %v3202 = vand.u32 %v568, 4294901760
        %3203 = vmatpush.msra.mxu0 %v3202
        %v3204 = vand.u32 %v564, 4294901760
        %3205 = vmatpush.msra.mxu0 %v3204
        %v3206 = vand.u32 %v560, 4294901760
        %3207 = vmatpush.msra.mxu0 %v3206
        %v3208 = vand.u32 %v556, 4294901760
        %3209 = vmatpush.msra.mxu0 %v3208
        %v3210 = vand.u32 %v552, 4294901760
        %3211 = vmatpush.msra.mxu0 %v3210
        %v3212 = vand.u32 %v548, 4294901760
        %3213 = vmatpush.msra.mxu0 %v3212
        %v3214 = vand.u32 %v544, 4294901760
        %3215 = vmatpush.msra.mxu0 %v3214
        %v3216 = vand.u32 %v540, 4294901760
        %3217 = vmatpush.msra.mxu0 %v3216
        %v3218 = vand.u32 %v536, 4294901760
        %3219 = vmatpush.msra.mxu0 %v3218
        %v3220 = vand.u32 %v183, 4294901760
        %v3221 = vsub.f32 %v183, %v3220
        %v3222 = vand.u32 %v3221, 4294901760
        %3223 = vmatmul.f32.gmra.mxu0 %v3222
        %v3224 = vpop.f32.mrf.mxu0
        %v3225 = vadd.f32 %v3166, %v3224
        %v3226 = vand.u32 %v184, 4294901760
        %v3227 = vsub.f32 %v184, %v3226
        %v3228 = vand.u32 %v3227, 4294901760
        %3229 = vmatmul.f32.gmra.mxu0 %v3228
        %v3230 = vpop.f32.mrf.mxu0
        %v3231 = vadd.f32 %v3171, %v3230
        %v3232 = vand.u32 %v185, 4294901760
        %v3233 = vsub.f32 %v185, %v3232
        %v3234 = vand.u32 %v3233, 4294901760
        %3235 = vmatmul.f32.gmra.mxu0 %v3234
        %v3236 = vpop.f32.mrf.mxu0
        %v3237 = vadd.f32 %v3176, %v3236
        %v3238 = vand.u32 %v186, 4294901760
        %v3239 = vsub.f32 %v186, %v3238
        %v3240 = vand.u32 %v3239, 4294901760
        %3241 = vmatmul.f32.gmra.mxu0 %v3240
        %v3242 = vpop.f32.mrf.mxu0
        %v3243 = vadd.f32 %v3181, %v3242
        %v3244 = vand.u32 %v187, 4294901760
        %v3245 = vsub.f32 %v187, %v3244
        %v3246 = vand.u32 %v3245, 4294901760
        %3247 = vmatmul.f32.gmra.mxu0 %v3246
        %v3248 = vpop.f32.mrf.mxu0
        %v3249 = vadd.f32 %v3186, %v3248
        %3250 = vdwg.mxu0
        %v3251 = vand.u32 %v596, 4294901760
        %v3252 = vsub.f32 %v596, %v3251
        %v3253 = vand.u32 %v3252, 4294901760
        %3254 = vmatpush.msra.mxu0 %v3253
        %v3255 = vand.u32 %v592, 4294901760
        %v3256 = vsub.f32 %v592, %v3255
        %v3257 = vand.u32 %v3256, 4294901760
        %3258 = vmatpush.msra.mxu0 %v3257
        %v3259 = vand.u32 %v588, 4294901760
        %v3260 = vsub.f32 %v588, %v3259
        %v3261 = vand.u32 %v3260, 4294901760
        %3262 = vmatpush.msra.mxu0 %v3261
        %v3263 = vand.u32 %v584, 4294901760
        %v3264 = vsub.f32 %v584, %v3263
        %v3265 = vand.u32 %v3264, 4294901760
        %3266 = vmatpush.msra.mxu0 %v3265
        %v3267 = vand.u32 %v580, 4294901760
        %v3268 = vsub.f32 %v580, %v3267
        %v3269 = vand.u32 %v3268, 4294901760
        %3270 = vmatpush.msra.mxu0 %v3269
        %v3271 = vand.u32 %v576, 4294901760
        %v3272 = vsub.f32 %v576, %v3271
        %v3273 = vand.u32 %v3272, 4294901760
        %3274 = vmatpush.msra.mxu0 %v3273
        %v3275 = vand.u32 %v572, 4294901760
        %v3276 = vsub.f32 %v572, %v3275
        %v3277 = vand.u32 %v3276, 4294901760
        %3278 = vmatpush.msra.mxu0 %v3277
        %v3279 = vand.u32 %v568, 4294901760
        %v3280 = vsub.f32 %v568, %v3279
        %v3281 = vand.u32 %v3280, 4294901760
        %3282 = vmatpush.msra.mxu0 %v3281
        %v3283 = vand.u32 %v564, 4294901760
        %v3284 = vsub.f32 %v564, %v3283
        %v3285 = vand.u32 %v3284, 4294901760
        %3286 = vmatpush.msra.mxu0 %v3285
        %v3287 = vand.u32 %v560, 4294901760
        %v3288 = vsub.f32 %v560, %v3287
        %v3289 = vand.u32 %v3288, 4294901760
        %3290 = vmatpush.msra.mxu0 %v3289
        %v3291 = vand.u32 %v556, 4294901760
        %v3292 = vsub.f32 %v556, %v3291
        %v3293 = vand.u32 %v3292, 4294901760
        %3294 = vmatpush.msra.mxu0 %v3293
        %v3295 = vand.u32 %v552, 4294901760
        %v3296 = vsub.f32 %v552, %v3295
        %v3297 = vand.u32 %v3296, 4294901760
        %3298 = vmatpush.msra.mxu0 %v3297
        %v3299 = vand.u32 %v548, 4294901760
        %v3300 = vsub.f32 %v548, %v3299
        %v3301 = vand.u32 %v3300, 4294901760
        %3302 = vmatpush.msra.mxu0 %v3301
        %v3303 = vand.u32 %v544, 4294901760
        %v3304 = vsub.f32 %v544, %v3303
        %v3305 = vand.u32 %v3304, 4294901760
        %3306 = vmatpush.msra.mxu0 %v3305
        %v3307 = vand.u32 %v540, 4294901760
        %v3308 = vsub.f32 %v540, %v3307
        %v3309 = vand.u32 %v3308, 4294901760
        %3310 = vmatpush.msra.mxu0 %v3309
        %v3311 = vand.u32 %v536, 4294901760
        %v3312 = vsub.f32 %v536, %v3311
        %v3313 = vand.u32 %v3312, 4294901760
        %3314 = vmatpush.msra.mxu0 %v3313
        %v3315 = vand.u32 %v183, 4294901760
        %3316 = vmatmul.f32.gmra.mxu0 %v3315
        %v3317 = vpop.f32.mrf.mxu0
        %v3318 = vadd.f32 %v3225, %v3317
        %v3319 = vand.u32 %v184, 4294901760
        %3320 = vmatmul.f32.gmra.mxu0 %v3319
        %v3321 = vpop.f32.mrf.mxu0
        %v3322 = vadd.f32 %v3231, %v3321
        %v3323 = vand.u32 %v185, 4294901760
        %3324 = vmatmul.f32.gmra.mxu0 %v3323
        %v3325 = vpop.f32.mrf.mxu0
        %v3326 = vadd.f32 %v3237, %v3325
        %v3327 = vand.u32 %v186, 4294901760
        %3328 = vmatmul.f32.gmra.mxu0 %v3327
        %v3329 = vpop.f32.mrf.mxu0
        %v3330 = vadd.f32 %v3243, %v3329
        %v3331 = vand.u32 %v187, 4294901760
        %3332 = vmatmul.f32.gmra.mxu0 %v3331
        %v3333 = vpop.f32.mrf.mxu0
        %v3334 = vadd.f32 %v3249, %v3333
        %3335 = vdwg.mxu0
        %v3336 = vand.u32 %v596, 4294901760
        %3337 = vmatpush.msra.mxu0 %v3336
        %v3338 = vand.u32 %v592, 4294901760
        %3339 = vmatpush.msra.mxu0 %v3338
        %v3340 = vand.u32 %v588, 4294901760
        %3341 = vmatpush.msra.mxu0 %v3340
        %v3342 = vand.u32 %v584, 4294901760
        %3343 = vmatpush.msra.mxu0 %v3342
        %v3344 = vand.u32 %v580, 4294901760
        %3345 = vmatpush.msra.mxu0 %v3344
        %v3346 = vand.u32 %v576, 4294901760
        %3347 = vmatpush.msra.mxu0 %v3346
        %v3348 = vand.u32 %v572, 4294901760
        %3349 = vmatpush.msra.mxu0 %v3348
        %v3350 = vand.u32 %v568, 4294901760
        %3351 = vmatpush.msra.mxu0 %v3350
        %v3352 = vand.u32 %v564, 4294901760
        %3353 = vmatpush.msra.mxu0 %v3352
        %v3354 = vand.u32 %v560, 4294901760
        %3355 = vmatpush.msra.mxu0 %v3354
        %v3356 = vand.u32 %v556, 4294901760
        %3357 = vmatpush.msra.mxu0 %v3356
        %v3358 = vand.u32 %v552, 4294901760
        %3359 = vmatpush.msra.mxu0 %v3358
        %v3360 = vand.u32 %v548, 4294901760
        %3361 = vmatpush.msra.mxu0 %v3360
        %v3362 = vand.u32 %v544, 4294901760
        %3363 = vmatpush.msra.mxu0 %v3362
        %v3364 = vand.u32 %v540, 4294901760
        %3365 = vmatpush.msra.mxu0 %v3364
        %v3366 = vand.u32 %v536, 4294901760
        %3367 = vmatpush.msra.mxu0 %v3366
        %v3368 = vand.u32 %v183, 4294901760
        %3369 = vmatmul.f32.gmra.mxu0 %v3368
        %v3370 = vpop.f32.mrf.mxu0
        %v3371 = vadd.f32 %v3318, %v3370
        %v3372 = vand.u32 %v184, 4294901760
        %3373 = vmatmul.f32.gmra.mxu0 %v3372
        %v3374 = vpop.f32.mrf.mxu0
        %v3375 = vadd.f32 %v3322, %v3374
        %v3376 = vand.u32 %v185, 4294901760
        %3377 = vmatmul.f32.gmra.mxu0 %v3376
        %v3378 = vpop.f32.mrf.mxu0
        %v3379 = vadd.f32 %v3326, %v3378
        %v3380 = vand.u32 %v186, 4294901760
        %3381 = vmatmul.f32.gmra.mxu0 %v3380
        %v3382 = vpop.f32.mrf.mxu0
        %v3383 = vadd.f32 %v3330, %v3382
        %v3384 = vand.u32 %v187, 4294901760
        %3385 = vmatmul.f32.gmra.mxu0 %v3384
        %v3386 = vpop.f32.mrf.mxu0
        %v3387 = vadd.f32 %v3334, %v3386
        %3388 = vdwg.mxu0
        %v3389 = vand.u32 %v597, 4294901760
        %3390 = vmatpush.msra.mxu0 %v3389
        %v3391 = vand.u32 %v593, 4294901760
        %3392 = vmatpush.msra.mxu0 %v3391
        %v3393 = vand.u32 %v589, 4294901760
        %3394 = vmatpush.msra.mxu0 %v3393
        %v3395 = vand.u32 %v585, 4294901760
        %3396 = vmatpush.msra.mxu0 %v3395
        %v3397 = vand.u32 %v581, 4294901760
        %3398 = vmatpush.msra.mxu0 %v3397
        %v3399 = vand.u32 %v577, 4294901760
        %3400 = vmatpush.msra.mxu0 %v3399
        %v3401 = vand.u32 %v573, 4294901760
        %3402 = vmatpush.msra.mxu0 %v3401
        %v3403 = vand.u32 %v569, 4294901760
        %3404 = vmatpush.msra.mxu0 %v3403
        %v3405 = vand.u32 %v565, 4294901760
        %3406 = vmatpush.msra.mxu0 %v3405
        %v3407 = vand.u32 %v561, 4294901760
        %3408 = vmatpush.msra.mxu0 %v3407
        %v3409 = vand.u32 %v557, 4294901760
        %3410 = vmatpush.msra.mxu0 %v3409
        %v3411 = vand.u32 %v553, 4294901760
        %3412 = vmatpush.msra.mxu0 %v3411
        %v3413 = vand.u32 %v549, 4294901760
        %3414 = vmatpush.msra.mxu0 %v3413
        %v3415 = vand.u32 %v545, 4294901760
        %3416 = vmatpush.msra.mxu0 %v3415
        %v3417 = vand.u32 %v541, 4294901760
        %3418 = vmatpush.msra.mxu0 %v3417
        %v3419 = vand.u32 %v537, 4294901760
        %3420 = vmatpush.msra.mxu0 %v3419
        %v3421 = vand.u32 %v183, 4294901760
        %v3422 = vsub.f32 %v183, %v3421
        %v3423 = vand.u32 %v3422, 4294901760
        %v3424 = vsub.f32 %v3422, %v3423
        %v3425 = vand.u32 %v3424, 4294901760
        %3426 = vmatmul.f32.gmra.mxu0 %v3425
        %v3427 = vpop.f32.mrf.mxu0
        %v3428 = vadd.f32 0.0, %v3427
        %v3429 = vand.u32 %v184, 4294901760
        %v3430 = vsub.f32 %v184, %v3429
        %v3431 = vand.u32 %v3430, 4294901760
        %v3432 = vsub.f32 %v3430, %v3431
        %v3433 = vand.u32 %v3432, 4294901760
        %3434 = vmatmul.f32.gmra.mxu0 %v3433
        %v3435 = vpop.f32.mrf.mxu0
        %v3436 = vadd.f32 0.0, %v3435
        %v3437 = vand.u32 %v185, 4294901760
        %v3438 = vsub.f32 %v185, %v3437
        %v3439 = vand.u32 %v3438, 4294901760
        %v3440 = vsub.f32 %v3438, %v3439
        %v3441 = vand.u32 %v3440, 4294901760
        %3442 = vmatmul.f32.gmra.mxu0 %v3441
        %v3443 = vpop.f32.mrf.mxu0
        %v3444 = vadd.f32 0.0, %v3443
        %v3445 = vand.u32 %v186, 4294901760
        %v3446 = vsub.f32 %v186, %v3445
        %v3447 = vand.u32 %v3446, 4294901760
        %v3448 = vsub.f32 %v3446, %v3447
        %v3449 = vand.u32 %v3448, 4294901760
        %3450 = vmatmul.f32.gmra.mxu0 %v3449
        %v3451 = vpop.f32.mrf.mxu0
        %v3452 = vadd.f32 0.0, %v3451
        %v3453 = vand.u32 %v187, 4294901760
        %v3454 = vsub.f32 %v187, %v3453
        %v3455 = vand.u32 %v3454, 4294901760
        %v3456 = vsub.f32 %v3454, %v3455
        %v3457 = vand.u32 %v3456, 4294901760
        %3458 = vmatmul.f32.gmra.mxu0 %v3457
        %v3459 = vpop.f32.mrf.mxu0
        %v3460 = vadd.f32 0.0, %v3459
        %3461 = vdwg.mxu0
        %v3462 = vand.u32 %v597, 4294901760
        %v3463 = vsub.f32 %v597, %v3462
        %v3464 = vand.u32 %v3463, 4294901760
        %v3465 = vsub.f32 %v3463, %v3464
        %v3466 = vand.u32 %v3465, 4294901760
        %3467 = vmatpush.msra.mxu0 %v3466
        %v3468 = vand.u32 %v593, 4294901760
        %v3469 = vsub.f32 %v593, %v3468
        %v3470 = vand.u32 %v3469, 4294901760
        %v3471 = vsub.f32 %v3469, %v3470
        %v3472 = vand.u32 %v3471, 4294901760
        %3473 = vmatpush.msra.mxu0 %v3472
        %v3474 = vand.u32 %v589, 4294901760
        %v3475 = vsub.f32 %v589, %v3474
        %v3476 = vand.u32 %v3475, 4294901760
        %v3477 = vsub.f32 %v3475, %v3476
        %v3478 = vand.u32 %v3477, 4294901760
        %3479 = vmatpush.msra.mxu0 %v3478
        %v3480 = vand.u32 %v585, 4294901760
        %v3481 = vsub.f32 %v585, %v3480
        %v3482 = vand.u32 %v3481, 4294901760
        %v3483 = vsub.f32 %v3481, %v3482
        %v3484 = vand.u32 %v3483, 4294901760
        %3485 = vmatpush.msra.mxu0 %v3484
        %v3486 = vand.u32 %v581, 4294901760
        %v3487 = vsub.f32 %v581, %v3486
        %v3488 = vand.u32 %v3487, 4294901760
        %v3489 = vsub.f32 %v3487, %v3488
        %v3490 = vand.u32 %v3489, 4294901760
        %3491 = vmatpush.msra.mxu0 %v3490
        %v3492 = vand.u32 %v577, 4294901760
        %v3493 = vsub.f32 %v577, %v3492
        %v3494 = vand.u32 %v3493, 4294901760
        %v3495 = vsub.f32 %v3493, %v3494
        %v3496 = vand.u32 %v3495, 4294901760
        %3497 = vmatpush.msra.mxu0 %v3496
        %v3498 = vand.u32 %v573, 4294901760
        %v3499 = vsub.f32 %v573, %v3498
        %v3500 = vand.u32 %v3499, 4294901760
        %v3501 = vsub.f32 %v3499, %v3500
        %v3502 = vand.u32 %v3501, 4294901760
        %3503 = vmatpush.msra.mxu0 %v3502
        %v3504 = vand.u32 %v569, 4294901760
        %v3505 = vsub.f32 %v569, %v3504
        %v3506 = vand.u32 %v3505, 4294901760
        %v3507 = vsub.f32 %v3505, %v3506
        %v3508 = vand.u32 %v3507, 4294901760
        %3509 = vmatpush.msra.mxu0 %v3508
        %v3510 = vand.u32 %v565, 4294901760
        %v3511 = vsub.f32 %v565, %v3510
        %v3512 = vand.u32 %v3511, 4294901760
        %v3513 = vsub.f32 %v3511, %v3512
        %v3514 = vand.u32 %v3513, 4294901760
        %3515 = vmatpush.msra.mxu0 %v3514
        %v3516 = vand.u32 %v561, 4294901760
        %v3517 = vsub.f32 %v561, %v3516
        %v3518 = vand.u32 %v3517, 4294901760
        %v3519 = vsub.f32 %v3517, %v3518
        %v3520 = vand.u32 %v3519, 4294901760
        %3521 = vmatpush.msra.mxu0 %v3520
        %v3522 = vand.u32 %v557, 4294901760
        %v3523 = vsub.f32 %v557, %v3522
        %v3524 = vand.u32 %v3523, 4294901760
        %v3525 = vsub.f32 %v3523, %v3524
        %v3526 = vand.u32 %v3525, 4294901760
        %3527 = vmatpush.msra.mxu0 %v3526
        %v3528 = vand.u32 %v553, 4294901760
        %v3529 = vsub.f32 %v553, %v3528
        %v3530 = vand.u32 %v3529, 4294901760
        %v3531 = vsub.f32 %v3529, %v3530
        %v3532 = vand.u32 %v3531, 4294901760
        %3533 = vmatpush.msra.mxu0 %v3532
        %v3534 = vand.u32 %v549, 4294901760
        %v3535 = vsub.f32 %v549, %v3534
        %v3536 = vand.u32 %v3535, 4294901760
        %v3537 = vsub.f32 %v3535, %v3536
        %v3538 = vand.u32 %v3537, 4294901760
        %3539 = vmatpush.msra.mxu0 %v3538
        %v3540 = vand.u32 %v545, 4294901760
        %v3541 = vsub.f32 %v545, %v3540
        %v3542 = vand.u32 %v3541, 4294901760
        %v3543 = vsub.f32 %v3541, %v3542
        %v3544 = vand.u32 %v3543, 4294901760
        %3545 = vmatpush.msra.mxu0 %v3544
        %v3546 = vand.u32 %v541, 4294901760
        %v3547 = vsub.f32 %v541, %v3546
        %v3548 = vand.u32 %v3547, 4294901760
        %v3549 = vsub.f32 %v3547, %v3548
        %v3550 = vand.u32 %v3549, 4294901760
        %3551 = vmatpush.msra.mxu0 %v3550
        %v3552 = vand.u32 %v537, 4294901760
        %v3553 = vsub.f32 %v537, %v3552
        %v3554 = vand.u32 %v3553, 4294901760
        %v3555 = vsub.f32 %v3553, %v3554
        %v3556 = vand.u32 %v3555, 4294901760
        %3557 = vmatpush.msra.mxu0 %v3556
        %v3558 = vand.u32 %v183, 4294901760
        %3559 = vmatmul.f32.gmra.mxu0 %v3558
        %v3560 = vpop.f32.mrf.mxu0
        %v3561 = vadd.f32 %v3428, %v3560
        %v3562 = vand.u32 %v184, 4294901760
        %3563 = vmatmul.f32.gmra.mxu0 %v3562
        %v3564 = vpop.f32.mrf.mxu0
        %v3565 = vadd.f32 %v3436, %v3564
        %v3566 = vand.u32 %v185, 4294901760
        %3567 = vmatmul.f32.gmra.mxu0 %v3566
        %v3568 = vpop.f32.mrf.mxu0
        %v3569 = vadd.f32 %v3444, %v3568
        %v3570 = vand.u32 %v186, 4294901760
        %3571 = vmatmul.f32.gmra.mxu0 %v3570
        %v3572 = vpop.f32.mrf.mxu0
        %v3573 = vadd.f32 %v3452, %v3572
        %v3574 = vand.u32 %v187, 4294901760
        %3575 = vmatmul.f32.gmra.mxu0 %v3574
        %v3576 = vpop.f32.mrf.mxu0
        %v3577 = vadd.f32 %v3460, %v3576
        %3578 = vdwg.mxu0
        %v3579 = vand.u32 %v597, 4294901760
        %v3580 = vsub.f32 %v597, %v3579
        %3581 = vmatpush.msra.mxu0 %v3580
        %v3582 = vand.u32 %v593, 4294901760
        %v3583 = vsub.f32 %v593, %v3582
        %3584 = vmatpush.msra.mxu0 %v3583
        %v3585 = vand.u32 %v589, 4294901760
        %v3586 = vsub.f32 %v589, %v3585
        %3587 = vmatpush.msra.mxu0 %v3586
        %v3588 = vand.u32 %v585, 4294901760
        %v3589 = vsub.f32 %v585, %v3588
        %3590 = vmatpush.msra.mxu0 %v3589
        %v3591 = vand.u32 %v581, 4294901760
        %v3592 = vsub.f32 %v581, %v3591
        %3593 = vmatpush.msra.mxu0 %v3592
        %v3594 = vand.u32 %v577, 4294901760
        %v3595 = vsub.f32 %v577, %v3594
        %3596 = vmatpush.msra.mxu0 %v3595
        %v3597 = vand.u32 %v573, 4294901760
        %v3598 = vsub.f32 %v573, %v3597
        %3599 = vmatpush.msra.mxu0 %v3598
        %v3600 = vand.u32 %v569, 4294901760
        %v3601 = vsub.f32 %v569, %v3600
        %3602 = vmatpush.msra.mxu0 %v3601
        %v3603 = vand.u32 %v565, 4294901760
        %v3604 = vsub.f32 %v565, %v3603
        %3605 = vmatpush.msra.mxu0 %v3604
        %v3606 = vand.u32 %v561, 4294901760
        %v3607 = vsub.f32 %v561, %v3606
        %3608 = vmatpush.msra.mxu0 %v3607
        %v3609 = vand.u32 %v557, 4294901760
        %v3610 = vsub.f32 %v557, %v3609
        %3611 = vmatpush.msra.mxu0 %v3610
        %v3612 = vand.u32 %v553, 4294901760
        %v3613 = vsub.f32 %v553, %v3612
        %3614 = vmatpush.msra.mxu0 %v3613
        %v3615 = vand.u32 %v549, 4294901760
        %v3616 = vsub.f32 %v549, %v3615
        %3617 = vmatpush.msra.mxu0 %v3616
        %v3618 = vand.u32 %v545, 4294901760
        %v3619 = vsub.f32 %v545, %v3618
        %3620 = vmatpush.msra.mxu0 %v3619
        %v3621 = vand.u32 %v541, 4294901760
        %v3622 = vsub.f32 %v541, %v3621
        %3623 = vmatpush.msra.mxu0 %v3622
        %v3624 = vand.u32 %v537, 4294901760
        %v3625 = vsub.f32 %v537, %v3624
        %3626 = vmatpush.msra.mxu0 %v3625
        %v3627 = vand.u32 %v183, 4294901760
        %v3628 = vsub.f32 %v183, %v3627
        %3629 = vmatmul.f32.gmra.mxu0 %v3628
        %v3630 = vpop.f32.mrf.mxu0
        %v3631 = vadd.f32 %v3561, %v3630
        %v3632 = vand.u32 %v184, 4294901760
        %v3633 = vsub.f32 %v184, %v3632
        %3634 = vmatmul.f32.gmra.mxu0 %v3633
        %v3635 = vpop.f32.mrf.mxu0
        %v3636 = vadd.f32 %v3565, %v3635
        %v3637 = vand.u32 %v185, 4294901760
        %v3638 = vsub.f32 %v185, %v3637
        %3639 = vmatmul.f32.gmra.mxu0 %v3638
        %v3640 = vpop.f32.mrf.mxu0
        %v3641 = vadd.f32 %v3569, %v3640
        %v3642 = vand.u32 %v186, 4294901760
        %v3643 = vsub.f32 %v186, %v3642
        %3644 = vmatmul.f32.gmra.mxu0 %v3643
        %v3645 = vpop.f32.mrf.mxu0
        %v3646 = vadd.f32 %v3573, %v3645
        %v3647 = vand.u32 %v187, 4294901760
        %v3648 = vsub.f32 %v187, %v3647
        %3649 = vmatmul.f32.gmra.mxu0 %v3648
        %v3650 = vpop.f32.mrf.mxu0
        %v3651 = vadd.f32 %v3577, %v3650
        %3652 = vdwg.mxu0
        %v3653 = vand.u32 %v597, 4294901760
        %3654 = vmatpush.msra.mxu0 %v3653
        %v3655 = vand.u32 %v593, 4294901760
        %3656 = vmatpush.msra.mxu0 %v3655
        %v3657 = vand.u32 %v589, 4294901760
        %3658 = vmatpush.msra.mxu0 %v3657
        %v3659 = vand.u32 %v585, 4294901760
        %3660 = vmatpush.msra.mxu0 %v3659
        %v3661 = vand.u32 %v581, 4294901760
        %3662 = vmatpush.msra.mxu0 %v3661
        %v3663 = vand.u32 %v577, 4294901760
        %3664 = vmatpush.msra.mxu0 %v3663
        %v3665 = vand.u32 %v573, 4294901760
        %3666 = vmatpush.msra.mxu0 %v3665
        %v3667 = vand.u32 %v569, 4294901760
        %3668 = vmatpush.msra.mxu0 %v3667
        %v3669 = vand.u32 %v565, 4294901760
        %3670 = vmatpush.msra.mxu0 %v3669
        %v3671 = vand.u32 %v561, 4294901760
        %3672 = vmatpush.msra.mxu0 %v3671
        %v3673 = vand.u32 %v557, 4294901760
        %3674 = vmatpush.msra.mxu0 %v3673
        %v3675 = vand.u32 %v553, 4294901760
        %3676 = vmatpush.msra.mxu0 %v3675
        %v3677 = vand.u32 %v549, 4294901760
        %3678 = vmatpush.msra.mxu0 %v3677
        %v3679 = vand.u32 %v545, 4294901760
        %3680 = vmatpush.msra.mxu0 %v3679
        %v3681 = vand.u32 %v541, 4294901760
        %3682 = vmatpush.msra.mxu0 %v3681
        %v3683 = vand.u32 %v537, 4294901760
        %3684 = vmatpush.msra.mxu0 %v3683
        %v3685 = vand.u32 %v183, 4294901760
        %v3686 = vsub.f32 %v183, %v3685
        %v3687 = vand.u32 %v3686, 4294901760
        %3688 = vmatmul.f32.gmra.mxu0 %v3687
        %v3689 = vpop.f32.mrf.mxu0
        %v3690 = vadd.f32 %v3631, %v3689
        %v3691 = vand.u32 %v184, 4294901760
        %v3692 = vsub.f32 %v184, %v3691
        %v3693 = vand.u32 %v3692, 4294901760
        %3694 = vmatmul.f32.gmra.mxu0 %v3693
        %v3695 = vpop.f32.mrf.mxu0
        %v3696 = vadd.f32 %v3636, %v3695
        %v3697 = vand.u32 %v185, 4294901760
        %v3698 = vsub.f32 %v185, %v3697
        %v3699 = vand.u32 %v3698, 4294901760
        %3700 = vmatmul.f32.gmra.mxu0 %v3699
        %v3701 = vpop.f32.mrf.mxu0
        %v3702 = vadd.f32 %v3641, %v3701
        %v3703 = vand.u32 %v186, 4294901760
        %v3704 = vsub.f32 %v186, %v3703
        %v3705 = vand.u32 %v3704, 4294901760
        %3706 = vmatmul.f32.gmra.mxu0 %v3705
        %v3707 = vpop.f32.mrf.mxu0
        %v3708 = vadd.f32 %v3646, %v3707
        %v3709 = vand.u32 %v187, 4294901760
        %v3710 = vsub.f32 %v187, %v3709
        %v3711 = vand.u32 %v3710, 4294901760
        %3712 = vmatmul.f32.gmra.mxu0 %v3711
        %v3713 = vpop.f32.mrf.mxu0
        %v3714 = vadd.f32 %v3651, %v3713
        %3715 = vdwg.mxu0
        %v3716 = vand.u32 %v597, 4294901760
        %v3717 = vsub.f32 %v597, %v3716
        %v3718 = vand.u32 %v3717, 4294901760
        %3719 = vmatpush.msra.mxu0 %v3718
        %v3720 = vand.u32 %v593, 4294901760
        %v3721 = vsub.f32 %v593, %v3720
        %v3722 = vand.u32 %v3721, 4294901760
        %3723 = vmatpush.msra.mxu0 %v3722
        %v3724 = vand.u32 %v589, 4294901760
        %v3725 = vsub.f32 %v589, %v3724
        %v3726 = vand.u32 %v3725, 4294901760
        %3727 = vmatpush.msra.mxu0 %v3726
        %v3728 = vand.u32 %v585, 4294901760
        %v3729 = vsub.f32 %v585, %v3728
        %v3730 = vand.u32 %v3729, 4294901760
        %3731 = vmatpush.msra.mxu0 %v3730
        %v3732 = vand.u32 %v581, 4294901760
        %v3733 = vsub.f32 %v581, %v3732
        %v3734 = vand.u32 %v3733, 4294901760
        %3735 = vmatpush.msra.mxu0 %v3734
        %v3736 = vand.u32 %v577, 4294901760
        %v3737 = vsub.f32 %v577, %v3736
        %v3738 = vand.u32 %v3737, 4294901760
        %3739 = vmatpush.msra.mxu0 %v3738
        %v3740 = vand.u32 %v573, 4294901760
        %v3741 = vsub.f32 %v573, %v3740
        %v3742 = vand.u32 %v3741, 4294901760
        %3743 = vmatpush.msra.mxu0 %v3742
        %v3744 = vand.u32 %v569, 4294901760
        %v3745 = vsub.f32 %v569, %v3744
        %v3746 = vand.u32 %v3745, 4294901760
        %3747 = vmatpush.msra.mxu0 %v3746
        %v3748 = vand.u32 %v565, 4294901760
        %v3749 = vsub.f32 %v565, %v3748
        %v3750 = vand.u32 %v3749, 4294901760
        %3751 = vmatpush.msra.mxu0 %v3750
        %v3752 = vand.u32 %v561, 4294901760
        %v3753 = vsub.f32 %v561, %v3752
        %v3754 = vand.u32 %v3753, 4294901760
        %3755 = vmatpush.msra.mxu0 %v3754
        %v3756 = vand.u32 %v557, 4294901760
        %v3757 = vsub.f32 %v557, %v3756
        %v3758 = vand.u32 %v3757, 4294901760
        %3759 = vmatpush.msra.mxu0 %v3758
        %v3760 = vand.u32 %v553, 4294901760
        %v3761 = vsub.f32 %v553, %v3760
        %v3762 = vand.u32 %v3761, 4294901760
        %3763 = vmatpush.msra.mxu0 %v3762
        %v3764 = vand.u32 %v549, 4294901760
        %v3765 = vsub.f32 %v549, %v3764
        %v3766 = vand.u32 %v3765, 4294901760
        %3767 = vmatpush.msra.mxu0 %v3766
        %v3768 = vand.u32 %v545, 4294901760
        %v3769 = vsub.f32 %v545, %v3768
        %v3770 = vand.u32 %v3769, 4294901760
        %3771 = vmatpush.msra.mxu0 %v3770
        %v3772 = vand.u32 %v541, 4294901760
        %v3773 = vsub.f32 %v541, %v3772
        %v3774 = vand.u32 %v3773, 4294901760
        %3775 = vmatpush.msra.mxu0 %v3774
        %v3776 = vand.u32 %v537, 4294901760
        %v3777 = vsub.f32 %v537, %v3776
        %v3778 = vand.u32 %v3777, 4294901760
        %3779 = vmatpush.msra.mxu0 %v3778
        %v3780 = vand.u32 %v183, 4294901760
        %3781 = vmatmul.f32.gmra.mxu0 %v3780
        %v3782 = vpop.f32.mrf.mxu0
        %v3783 = vadd.f32 %v3690, %v3782
        %v3784 = vand.u32 %v184, 4294901760
        %3785 = vmatmul.f32.gmra.mxu0 %v3784
        %v3786 = vpop.f32.mrf.mxu0
        %v3787 = vadd.f32 %v3696, %v3786
        %v3788 = vand.u32 %v185, 4294901760
        %3789 = vmatmul.f32.gmra.mxu0 %v3788
        %v3790 = vpop.f32.mrf.mxu0
        %v3791 = vadd.f32 %v3702, %v3790
        %v3792 = vand.u32 %v186, 4294901760
        %3793 = vmatmul.f32.gmra.mxu0 %v3792
        %v3794 = vpop.f32.mrf.mxu0
        %v3795 = vadd.f32 %v3708, %v3794
        %v3796 = vand.u32 %v187, 4294901760
        %3797 = vmatmul.f32.gmra.mxu0 %v3796
        %v3798 = vpop.f32.mrf.mxu0
        %v3799 = vadd.f32 %v3714, %v3798
        %3800 = vdwg.mxu0
        %v3801 = vand.u32 %v597, 4294901760
        %3802 = vmatpush.msra.mxu0 %v3801
        %v3803 = vand.u32 %v593, 4294901760
        %3804 = vmatpush.msra.mxu0 %v3803
        %v3805 = vand.u32 %v589, 4294901760
        %3806 = vmatpush.msra.mxu0 %v3805
        %v3807 = vand.u32 %v585, 4294901760
        %3808 = vmatpush.msra.mxu0 %v3807
        %v3809 = vand.u32 %v581, 4294901760
        %3810 = vmatpush.msra.mxu0 %v3809
        %v3811 = vand.u32 %v577, 4294901760
        %3812 = vmatpush.msra.mxu0 %v3811
        %v3813 = vand.u32 %v573, 4294901760
        %3814 = vmatpush.msra.mxu0 %v3813
        %v3815 = vand.u32 %v569, 4294901760
        %3816 = vmatpush.msra.mxu0 %v3815
        %v3817 = vand.u32 %v565, 4294901760
        %3818 = vmatpush.msra.mxu0 %v3817
        %v3819 = vand.u32 %v561, 4294901760
        %3820 = vmatpush.msra.mxu0 %v3819
        %v3821 = vand.u32 %v557, 4294901760
        %3822 = vmatpush.msra.mxu0 %v3821
        %v3823 = vand.u32 %v553, 4294901760
        %3824 = vmatpush.msra.mxu0 %v3823
        %v3825 = vand.u32 %v549, 4294901760
        %3826 = vmatpush.msra.mxu0 %v3825
        %v3827 = vand.u32 %v545, 4294901760
        %3828 = vmatpush.msra.mxu0 %v3827
        %v3829 = vand.u32 %v541, 4294901760
        %3830 = vmatpush.msra.mxu0 %v3829
        %v3831 = vand.u32 %v537, 4294901760
        %3832 = vmatpush.msra.mxu0 %v3831
        %v3833 = vand.u32 %v183, 4294901760
        %3834 = vmatmul.f32.gmra.mxu0 %v3833
        %v3835 = vpop.f32.mrf.mxu0
        %v3836 = vadd.f32 %v3783, %v3835
        %v3837 = vand.u32 %v184, 4294901760
        %3838 = vmatmul.f32.gmra.mxu0 %v3837
        %v3839 = vpop.f32.mrf.mxu0
        %v3840 = vadd.f32 %v3787, %v3839
        %v3841 = vand.u32 %v185, 4294901760
        %3842 = vmatmul.f32.gmra.mxu0 %v3841
        %v3843 = vpop.f32.mrf.mxu0
        %v3844 = vadd.f32 %v3791, %v3843
        %v3845 = vand.u32 %v186, 4294901760
        %3846 = vmatmul.f32.gmra.mxu0 %v3845
        %v3847 = vpop.f32.mrf.mxu0
        %v3848 = vadd.f32 %v3795, %v3847
        %v3849 = vand.u32 %v187, 4294901760
        %3850 = vmatmul.f32.gmra.mxu0 %v3849
        %v3851 = vpop.f32.mrf.mxu0
        %v3852 = vadd.f32 %v3799, %v3851
        %3853 = vdwg.mxu0
        %v3854 = vand.u32 %v598, 4294901760
        %3855 = vmatpush.msra.mxu0 %v3854
        %v3856 = vand.u32 %v594, 4294901760
        %3857 = vmatpush.msra.mxu0 %v3856
        %v3858 = vand.u32 %v590, 4294901760
        %3859 = vmatpush.msra.mxu0 %v3858
        %v3860 = vand.u32 %v586, 4294901760
        %3861 = vmatpush.msra.mxu0 %v3860
        %v3862 = vand.u32 %v582, 4294901760
        %3863 = vmatpush.msra.mxu0 %v3862
        %v3864 = vand.u32 %v578, 4294901760
        %3865 = vmatpush.msra.mxu0 %v3864
        %v3866 = vand.u32 %v574, 4294901760
        %3867 = vmatpush.msra.mxu0 %v3866
        %v3868 = vand.u32 %v570, 4294901760
        %3869 = vmatpush.msra.mxu0 %v3868
        %v3870 = vand.u32 %v566, 4294901760
        %3871 = vmatpush.msra.mxu0 %v3870
        %v3872 = vand.u32 %v562, 4294901760
        %3873 = vmatpush.msra.mxu0 %v3872
        %v3874 = vand.u32 %v558, 4294901760
        %3875 = vmatpush.msra.mxu0 %v3874
        %v3876 = vand.u32 %v554, 4294901760
        %3877 = vmatpush.msra.mxu0 %v3876
        %v3878 = vand.u32 %v550, 4294901760
        %3879 = vmatpush.msra.mxu0 %v3878
        %v3880 = vand.u32 %v546, 4294901760
        %3881 = vmatpush.msra.mxu0 %v3880
        %v3882 = vand.u32 %v542, 4294901760
        %3883 = vmatpush.msra.mxu0 %v3882
        %v3884 = vand.u32 %v538, 4294901760
        %3885 = vmatpush.msra.mxu0 %v3884
        %v3886 = vand.u32 %v183, 4294901760
        %v3887 = vsub.f32 %v183, %v3886
        %v3888 = vand.u32 %v3887, 4294901760
        %v3889 = vsub.f32 %v3887, %v3888
        %v3890 = vand.u32 %v3889, 4294901760
        %3891 = vmatmul.f32.gmra.mxu0 %v3890
        %v3892 = vpop.f32.mrf.mxu0
        %v3893 = vadd.f32 0.0, %v3892
        %v3894 = vand.u32 %v184, 4294901760
        %v3895 = vsub.f32 %v184, %v3894
        %v3896 = vand.u32 %v3895, 4294901760
        %v3897 = vsub.f32 %v3895, %v3896
        %v3898 = vand.u32 %v3897, 4294901760
        %3899 = vmatmul.f32.gmra.mxu0 %v3898
        %v3900 = vpop.f32.mrf.mxu0
        %v3901 = vadd.f32 0.0, %v3900
        %v3902 = vand.u32 %v185, 4294901760
        %v3903 = vsub.f32 %v185, %v3902
        %v3904 = vand.u32 %v3903, 4294901760
        %v3905 = vsub.f32 %v3903, %v3904
        %v3906 = vand.u32 %v3905, 4294901760
        %3907 = vmatmul.f32.gmra.mxu0 %v3906
        %v3908 = vpop.f32.mrf.mxu0
        %v3909 = vadd.f32 0.0, %v3908
        %v3910 = vand.u32 %v186, 4294901760
        %v3911 = vsub.f32 %v186, %v3910
        %v3912 = vand.u32 %v3911, 4294901760
        %v3913 = vsub.f32 %v3911, %v3912
        %v3914 = vand.u32 %v3913, 4294901760
        %3915 = vmatmul.f32.gmra.mxu0 %v3914
        %v3916 = vpop.f32.mrf.mxu0
        %v3917 = vadd.f32 0.0, %v3916
        %v3918 = vand.u32 %v187, 4294901760
        %v3919 = vsub.f32 %v187, %v3918
        %v3920 = vand.u32 %v3919, 4294901760
        %v3921 = vsub.f32 %v3919, %v3920
        %v3922 = vand.u32 %v3921, 4294901760
        %3923 = vmatmul.f32.gmra.mxu0 %v3922
        %v3924 = vpop.f32.mrf.mxu0
        %v3925 = vadd.f32 0.0, %v3924
        %3926 = vdwg.mxu0
        %v3927 = vand.u32 %v598, 4294901760
        %v3928 = vsub.f32 %v598, %v3927
        %v3929 = vand.u32 %v3928, 4294901760
        %v3930 = vsub.f32 %v3928, %v3929
        %v3931 = vand.u32 %v3930, 4294901760
        %3932 = vmatpush.msra.mxu0 %v3931
        %v3933 = vand.u32 %v594, 4294901760
        %v3934 = vsub.f32 %v594, %v3933
        %v3935 = vand.u32 %v3934, 4294901760
        %v3936 = vsub.f32 %v3934, %v3935
        %v3937 = vand.u32 %v3936, 4294901760
        %3938 = vmatpush.msra.mxu0 %v3937
        %v3939 = vand.u32 %v590, 4294901760
        %v3940 = vsub.f32 %v590, %v3939
        %v3941 = vand.u32 %v3940, 4294901760
        %v3942 = vsub.f32 %v3940, %v3941
        %v3943 = vand.u32 %v3942, 4294901760
        %3944 = vmatpush.msra.mxu0 %v3943
        %v3945 = vand.u32 %v586, 4294901760
        %v3946 = vsub.f32 %v586, %v3945
        %v3947 = vand.u32 %v3946, 4294901760
        %v3948 = vsub.f32 %v3946, %v3947
        %v3949 = vand.u32 %v3948, 4294901760
        %3950 = vmatpush.msra.mxu0 %v3949
        %v3951 = vand.u32 %v582, 4294901760
        %v3952 = vsub.f32 %v582, %v3951
        %v3953 = vand.u32 %v3952, 4294901760
        %v3954 = vsub.f32 %v3952, %v3953
        %v3955 = vand.u32 %v3954, 4294901760
        %3956 = vmatpush.msra.mxu0 %v3955
        %v3957 = vand.u32 %v578, 4294901760
        %v3958 = vsub.f32 %v578, %v3957
        %v3959 = vand.u32 %v3958, 4294901760
        %v3960 = vsub.f32 %v3958, %v3959
        %v3961 = vand.u32 %v3960, 4294901760
        %3962 = vmatpush.msra.mxu0 %v3961
        %v3963 = vand.u32 %v574, 4294901760
        %v3964 = vsub.f32 %v574, %v3963
        %v3965 = vand.u32 %v3964, 4294901760
        %v3966 = vsub.f32 %v3964, %v3965
        %v3967 = vand.u32 %v3966, 4294901760
        %3968 = vmatpush.msra.mxu0 %v3967
        %v3969 = vand.u32 %v570, 4294901760
        %v3970 = vsub.f32 %v570, %v3969
        %v3971 = vand.u32 %v3970, 4294901760
        %v3972 = vsub.f32 %v3970, %v3971
        %v3973 = vand.u32 %v3972, 4294901760
        %3974 = vmatpush.msra.mxu0 %v3973
        %v3975 = vand.u32 %v566, 4294901760
        %v3976 = vsub.f32 %v566, %v3975
        %v3977 = vand.u32 %v3976, 4294901760
        %v3978 = vsub.f32 %v3976, %v3977
        %v3979 = vand.u32 %v3978, 4294901760
        %3980 = vmatpush.msra.mxu0 %v3979
        %v3981 = vand.u32 %v562, 4294901760
        %v3982 = vsub.f32 %v562, %v3981
        %v3983 = vand.u32 %v3982, 4294901760
        %v3984 = vsub.f32 %v3982, %v3983
        %v3985 = vand.u32 %v3984, 4294901760
        %3986 = vmatpush.msra.mxu0 %v3985
        %v3987 = vand.u32 %v558, 4294901760
        %v3988 = vsub.f32 %v558, %v3987
        %v3989 = vand.u32 %v3988, 4294901760
        %v3990 = vsub.f32 %v3988, %v3989
        %v3991 = vand.u32 %v3990, 4294901760
        %3992 = vmatpush.msra.mxu0 %v3991
        %v3993 = vand.u32 %v554, 4294901760
        %v3994 = vsub.f32 %v554, %v3993
        %v3995 = vand.u32 %v3994, 4294901760
        %v3996 = vsub.f32 %v3994, %v3995
        %v3997 = vand.u32 %v3996, 4294901760
        %3998 = vmatpush.msra.mxu0 %v3997
        %v3999 = vand.u32 %v550, 4294901760
        %v4000 = vsub.f32 %v550, %v3999
        %v4001 = vand.u32 %v4000, 4294901760
        %v4002 = vsub.f32 %v4000, %v4001
        %v4003 = vand.u32 %v4002, 4294901760
        %4004 = vmatpush.msra.mxu0 %v4003
        %v4005 = vand.u32 %v546, 4294901760
        %v4006 = vsub.f32 %v546, %v4005
        %v4007 = vand.u32 %v4006, 4294901760
        %v4008 = vsub.f32 %v4006, %v4007
        %v4009 = vand.u32 %v4008, 4294901760
        %4010 = vmatpush.msra.mxu0 %v4009
        %v4011 = vand.u32 %v542, 4294901760
        %v4012 = vsub.f32 %v542, %v4011
        %v4013 = vand.u32 %v4012, 4294901760
        %v4014 = vsub.f32 %v4012, %v4013
        %v4015 = vand.u32 %v4014, 4294901760
        %4016 = vmatpush.msra.mxu0 %v4015
        %v4017 = vand.u32 %v538, 4294901760
        %v4018 = vsub.f32 %v538, %v4017
        %v4019 = vand.u32 %v4018, 4294901760
        %v4020 = vsub.f32 %v4018, %v4019
        %v4021 = vand.u32 %v4020, 4294901760
        %4022 = vmatpush.msra.mxu0 %v4021
        %v4023 = vand.u32 %v183, 4294901760
        %4024 = vmatmul.f32.gmra.mxu0 %v4023
        %v4025 = vpop.f32.mrf.mxu0
        %v4026 = vadd.f32 %v3893, %v4025
        %v4027 = vand.u32 %v184, 4294901760
        %4028 = vmatmul.f32.gmra.mxu0 %v4027
        %v4029 = vpop.f32.mrf.mxu0
        %v4030 = vadd.f32 %v3901, %v4029
        %v4031 = vand.u32 %v185, 4294901760
        %4032 = vmatmul.f32.gmra.mxu0 %v4031
        %v4033 = vpop.f32.mrf.mxu0
        %v4034 = vadd.f32 %v3909, %v4033
        %v4035 = vand.u32 %v186, 4294901760
        %4036 = vmatmul.f32.gmra.mxu0 %v4035
        %v4037 = vpop.f32.mrf.mxu0
        %v4038 = vadd.f32 %v3917, %v4037
        %v4039 = vand.u32 %v187, 4294901760
        %4040 = vmatmul.f32.gmra.mxu0 %v4039
        %v4041 = vpop.f32.mrf.mxu0
        %v4042 = vadd.f32 %v3925, %v4041
        %4043 = vdwg.mxu0
        %v4044 = vand.u32 %v598, 4294901760
        %v4045 = vsub.f32 %v598, %v4044
        %4046 = vmatpush.msra.mxu0 %v4045
        %v4047 = vand.u32 %v594, 4294901760
        %v4048 = vsub.f32 %v594, %v4047
        %4049 = vmatpush.msra.mxu0 %v4048
        %v4050 = vand.u32 %v590, 4294901760
        %v4051 = vsub.f32 %v590, %v4050
        %4052 = vmatpush.msra.mxu0 %v4051
        %v4053 = vand.u32 %v586, 4294901760
        %v4054 = vsub.f32 %v586, %v4053
        %4055 = vmatpush.msra.mxu0 %v4054
        %v4056 = vand.u32 %v582, 4294901760
        %v4057 = vsub.f32 %v582, %v4056
        %4058 = vmatpush.msra.mxu0 %v4057
        %v4059 = vand.u32 %v578, 4294901760
        %v4060 = vsub.f32 %v578, %v4059
        %4061 = vmatpush.msra.mxu0 %v4060
        %v4062 = vand.u32 %v574, 4294901760
        %v4063 = vsub.f32 %v574, %v4062
        %4064 = vmatpush.msra.mxu0 %v4063
        %v4065 = vand.u32 %v570, 4294901760
        %v4066 = vsub.f32 %v570, %v4065
        %4067 = vmatpush.msra.mxu0 %v4066
        %v4068 = vand.u32 %v566, 4294901760
        %v4069 = vsub.f32 %v566, %v4068
        %4070 = vmatpush.msra.mxu0 %v4069
        %v4071 = vand.u32 %v562, 4294901760
        %v4072 = vsub.f32 %v562, %v4071
        %4073 = vmatpush.msra.mxu0 %v4072
        %v4074 = vand.u32 %v558, 4294901760
        %v4075 = vsub.f32 %v558, %v4074
        %4076 = vmatpush.msra.mxu0 %v4075
        %v4077 = vand.u32 %v554, 4294901760
        %v4078 = vsub.f32 %v554, %v4077
        %4079 = vmatpush.msra.mxu0 %v4078
        %v4080 = vand.u32 %v550, 4294901760
        %v4081 = vsub.f32 %v550, %v4080
        %4082 = vmatpush.msra.mxu0 %v4081
        %v4083 = vand.u32 %v546, 4294901760
        %v4084 = vsub.f32 %v546, %v4083
        %4085 = vmatpush.msra.mxu0 %v4084
        %v4086 = vand.u32 %v542, 4294901760
        %v4087 = vsub.f32 %v542, %v4086
        %4088 = vmatpush.msra.mxu0 %v4087
        %v4089 = vand.u32 %v538, 4294901760
        %v4090 = vsub.f32 %v538, %v4089
        %4091 = vmatpush.msra.mxu0 %v4090
        %v4092 = vand.u32 %v183, 4294901760
        %v4093 = vsub.f32 %v183, %v4092
        %4094 = vmatmul.f32.gmra.mxu0 %v4093
        %v4095 = vpop.f32.mrf.mxu0
        %v4096 = vadd.f32 %v4026, %v4095
        %v4097 = vand.u32 %v184, 4294901760
        %v4098 = vsub.f32 %v184, %v4097
        %4099 = vmatmul.f32.gmra.mxu0 %v4098
        %v4100 = vpop.f32.mrf.mxu0
        %v4101 = vadd.f32 %v4030, %v4100
        %v4102 = vand.u32 %v185, 4294901760
        %v4103 = vsub.f32 %v185, %v4102
        %4104 = vmatmul.f32.gmra.mxu0 %v4103
        %v4105 = vpop.f32.mrf.mxu0
        %v4106 = vadd.f32 %v4034, %v4105
        %v4107 = vand.u32 %v186, 4294901760
        %v4108 = vsub.f32 %v186, %v4107
        %4109 = vmatmul.f32.gmra.mxu0 %v4108
        %v4110 = vpop.f32.mrf.mxu0
        %v4111 = vadd.f32 %v4038, %v4110
        %v4112 = vand.u32 %v187, 4294901760
        %v4113 = vsub.f32 %v187, %v4112
        %4114 = vmatmul.f32.gmra.mxu0 %v4113
        %v4115 = vpop.f32.mrf.mxu0
        %v4116 = vadd.f32 %v4042, %v4115
        %4117 = vdwg.mxu0
        %v4118 = vand.u32 %v598, 4294901760
        %4119 = vmatpush.msra.mxu0 %v4118
        %v4120 = vand.u32 %v594, 4294901760
        %4121 = vmatpush.msra.mxu0 %v4120
        %v4122 = vand.u32 %v590, 4294901760
        %4123 = vmatpush.msra.mxu0 %v4122
        %v4124 = vand.u32 %v586, 4294901760
        %4125 = vmatpush.msra.mxu0 %v4124
        %v4126 = vand.u32 %v582, 4294901760
        %4127 = vmatpush.msra.mxu0 %v4126
        %v4128 = vand.u32 %v578, 4294901760
        %4129 = vmatpush.msra.mxu0 %v4128
        %v4130 = vand.u32 %v574, 4294901760
        %4131 = vmatpush.msra.mxu0 %v4130
        %v4132 = vand.u32 %v570, 4294901760
        %4133 = vmatpush.msra.mxu0 %v4132
        %v4134 = vand.u32 %v566, 4294901760
        %4135 = vmatpush.msra.mxu0 %v4134
        %v4136 = vand.u32 %v562, 4294901760
        %4137 = vmatpush.msra.mxu0 %v4136
        %v4138 = vand.u32 %v558, 4294901760
        %4139 = vmatpush.msra.mxu0 %v4138
        %v4140 = vand.u32 %v554, 4294901760
        %4141 = vmatpush.msra.mxu0 %v4140
        %v4142 = vand.u32 %v550, 4294901760
        %4143 = vmatpush.msra.mxu0 %v4142
        %v4144 = vand.u32 %v546, 4294901760
        %4145 = vmatpush.msra.mxu0 %v4144
        %v4146 = vand.u32 %v542, 4294901760
        %4147 = vmatpush.msra.mxu0 %v4146
        %v4148 = vand.u32 %v538, 4294901760
        %4149 = vmatpush.msra.mxu0 %v4148
        %v4150 = vand.u32 %v183, 4294901760
        %v4151 = vsub.f32 %v183, %v4150
        %v4152 = vand.u32 %v4151, 4294901760
        %4153 = vmatmul.f32.gmra.mxu0 %v4152
        %v4154 = vpop.f32.mrf.mxu0
        %v4155 = vadd.f32 %v4096, %v4154
        %v4156 = vand.u32 %v184, 4294901760
        %v4157 = vsub.f32 %v184, %v4156
        %v4158 = vand.u32 %v4157, 4294901760
        %4159 = vmatmul.f32.gmra.mxu0 %v4158
        %v4160 = vpop.f32.mrf.mxu0
        %v4161 = vadd.f32 %v4101, %v4160
        %v4162 = vand.u32 %v185, 4294901760
        %v4163 = vsub.f32 %v185, %v4162
        %v4164 = vand.u32 %v4163, 4294901760
        %4165 = vmatmul.f32.gmra.mxu0 %v4164
        %v4166 = vpop.f32.mrf.mxu0
        %v4167 = vadd.f32 %v4106, %v4166
        %v4168 = vand.u32 %v186, 4294901760
        %v4169 = vsub.f32 %v186, %v4168
        %v4170 = vand.u32 %v4169, 4294901760
        %4171 = vmatmul.f32.gmra.mxu0 %v4170
        %v4172 = vpop.f32.mrf.mxu0
        %v4173 = vadd.f32 %v4111, %v4172
        %v4174 = vand.u32 %v187, 4294901760
        %v4175 = vsub.f32 %v187, %v4174
        %v4176 = vand.u32 %v4175, 4294901760
        %4177 = vmatmul.f32.gmra.mxu0 %v4176
        %v4178 = vpop.f32.mrf.mxu0
        %v4179 = vadd.f32 %v4116, %v4178
        %4180 = vdwg.mxu0
        %v4181 = vand.u32 %v598, 4294901760
        %v4182 = vsub.f32 %v598, %v4181
        %v4183 = vand.u32 %v4182, 4294901760
        %4184 = vmatpush.msra.mxu0 %v4183
        %v4185 = vand.u32 %v594, 4294901760
        %v4186 = vsub.f32 %v594, %v4185
        %v4187 = vand.u32 %v4186, 4294901760
        %4188 = vmatpush.msra.mxu0 %v4187
        %v4189 = vand.u32 %v590, 4294901760
        %v4190 = vsub.f32 %v590, %v4189
        %v4191 = vand.u32 %v4190, 4294901760
        %4192 = vmatpush.msra.mxu0 %v4191
        %v4193 = vand.u32 %v586, 4294901760
        %v4194 = vsub.f32 %v586, %v4193
        %v4195 = vand.u32 %v4194, 4294901760
        %4196 = vmatpush.msra.mxu0 %v4195
        %v4197 = vand.u32 %v582, 4294901760
        %v4198 = vsub.f32 %v582, %v4197
        %v4199 = vand.u32 %v4198, 4294901760
        %4200 = vmatpush.msra.mxu0 %v4199
        %v4201 = vand.u32 %v578, 4294901760
        %v4202 = vsub.f32 %v578, %v4201
        %v4203 = vand.u32 %v4202, 4294901760
        %4204 = vmatpush.msra.mxu0 %v4203
        %v4205 = vand.u32 %v574, 4294901760
        %v4206 = vsub.f32 %v574, %v4205
        %v4207 = vand.u32 %v4206, 4294901760
        %4208 = vmatpush.msra.mxu0 %v4207
        %v4209 = vand.u32 %v570, 4294901760
        %v4210 = vsub.f32 %v570, %v4209
        %v4211 = vand.u32 %v4210, 4294901760
        %4212 = vmatpush.msra.mxu0 %v4211
        %v4213 = vand.u32 %v566, 4294901760
        %v4214 = vsub.f32 %v566, %v4213
        %v4215 = vand.u32 %v4214, 4294901760
        %4216 = vmatpush.msra.mxu0 %v4215
        %v4217 = vand.u32 %v562, 4294901760
        %v4218 = vsub.f32 %v562, %v4217
        %v4219 = vand.u32 %v4218, 4294901760
        %4220 = vmatpush.msra.mxu0 %v4219
        %v4221 = vand.u32 %v558, 4294901760
        %v4222 = vsub.f32 %v558, %v4221
        %v4223 = vand.u32 %v4222, 4294901760
        %4224 = vmatpush.msra.mxu0 %v4223
        %v4225 = vand.u32 %v554, 4294901760
        %v4226 = vsub.f32 %v554, %v4225
        %v4227 = vand.u32 %v4226, 4294901760
        %4228 = vmatpush.msra.mxu0 %v4227
        %v4229 = vand.u32 %v550, 4294901760
        %v4230 = vsub.f32 %v550, %v4229
        %v4231 = vand.u32 %v4230, 4294901760
        %4232 = vmatpush.msra.mxu0 %v4231
        %v4233 = vand.u32 %v546, 4294901760
        %v4234 = vsub.f32 %v546, %v4233
        %v4235 = vand.u32 %v4234, 4294901760
        %4236 = vmatpush.msra.mxu0 %v4235
        %v4237 = vand.u32 %v542, 4294901760
        %v4238 = vsub.f32 %v542, %v4237
        %v4239 = vand.u32 %v4238, 4294901760
        %4240 = vmatpush.msra.mxu0 %v4239
        %v4241 = vand.u32 %v538, 4294901760
        %v4242 = vsub.f32 %v538, %v4241
        %v4243 = vand.u32 %v4242, 4294901760
        %4244 = vmatpush.msra.mxu0 %v4243
        %v4245 = vand.u32 %v183, 4294901760
        %4246 = vmatmul.f32.gmra.mxu0 %v4245
        %v4247 = vpop.f32.mrf.mxu0
        %v4248 = vadd.f32 %v4155, %v4247
        %v4249 = vand.u32 %v184, 4294901760
        %4250 = vmatmul.f32.gmra.mxu0 %v4249
        %v4251 = vpop.f32.mrf.mxu0
        %v4252 = vadd.f32 %v4161, %v4251
        %v4253 = vand.u32 %v185, 4294901760
        %4254 = vmatmul.f32.gmra.mxu0 %v4253
        %v4255 = vpop.f32.mrf.mxu0
        %v4256 = vadd.f32 %v4167, %v4255
        %v4257 = vand.u32 %v186, 4294901760
        %4258 = vmatmul.f32.gmra.mxu0 %v4257
        %v4259 = vpop.f32.mrf.mxu0
        %v4260 = vadd.f32 %v4173, %v4259
        %v4261 = vand.u32 %v187, 4294901760
        %4262 = vmatmul.f32.gmra.mxu0 %v4261
        %v4263 = vpop.f32.mrf.mxu0
        %v4264 = vadd.f32 %v4179, %v4263
        %4265 = vdwg.mxu0
        %v4266 = vand.u32 %v598, 4294901760
        %4267 = vmatpush.msra.mxu0 %v4266
        %v4268 = vand.u32 %v594, 4294901760
        %4269 = vmatpush.msra.mxu0 %v4268
        %v4270 = vand.u32 %v590, 4294901760
        %4271 = vmatpush.msra.mxu0 %v4270
        %v4272 = vand.u32 %v586, 4294901760
        %4273 = vmatpush.msra.mxu0 %v4272
        %v4274 = vand.u32 %v582, 4294901760
        %4275 = vmatpush.msra.mxu0 %v4274
        %v4276 = vand.u32 %v578, 4294901760
        %4277 = vmatpush.msra.mxu0 %v4276
        %v4278 = vand.u32 %v574, 4294901760
        %4279 = vmatpush.msra.mxu0 %v4278
        %v4280 = vand.u32 %v570, 4294901760
        %4281 = vmatpush.msra.mxu0 %v4280
        %v4282 = vand.u32 %v566, 4294901760
        %4283 = vmatpush.msra.mxu0 %v4282
        %v4284 = vand.u32 %v562, 4294901760
        %4285 = vmatpush.msra.mxu0 %v4284
        %v4286 = vand.u32 %v558, 4294901760
        %4287 = vmatpush.msra.mxu0 %v4286
        %v4288 = vand.u32 %v554, 4294901760
        %4289 = vmatpush.msra.mxu0 %v4288
        %v4290 = vand.u32 %v550, 4294901760
        %4291 = vmatpush.msra.mxu0 %v4290
        %v4292 = vand.u32 %v546, 4294901760
        %4293 = vmatpush.msra.mxu0 %v4292
        %v4294 = vand.u32 %v542, 4294901760
        %4295 = vmatpush.msra.mxu0 %v4294
        %v4296 = vand.u32 %v538, 4294901760
        %4297 = vmatpush.msra.mxu0 %v4296
        %v4298 = vand.u32 %v183, 4294901760
        %4299 = vmatmul.f32.gmra.mxu0 %v4298
        %v4300 = vpop.f32.mrf.mxu0
        %v4301 = vadd.f32 %v4248, %v4300
        %v4302 = vand.u32 %v184, 4294901760
        %4303 = vmatmul.f32.gmra.mxu0 %v4302
        %v4304 = vpop.f32.mrf.mxu0
        %v4305 = vadd.f32 %v4252, %v4304
        %v4306 = vand.u32 %v185, 4294901760
        %4307 = vmatmul.f32.gmra.mxu0 %v4306
        %v4308 = vpop.f32.mrf.mxu0
        %v4309 = vadd.f32 %v4256, %v4308
        %v4310 = vand.u32 %v186, 4294901760
        %4311 = vmatmul.f32.gmra.mxu0 %v4310
        %v4312 = vpop.f32.mrf.mxu0
        %v4313 = vadd.f32 %v4260, %v4312
        %v4314 = vand.u32 %v187, 4294901760
        %4315 = vmatmul.f32.gmra.mxu0 %v4314
        %v4316 = vpop.f32.mrf.mxu0
        %v4317 = vadd.f32 %v4264, %v4316
        %4318 = vdwg.mxu0
        %v4319 = vmul.f32 %v1046, %v2906
        %v4320 = vmul.f32 %v1511, %v3371
        %v4321 = vmul.f32 %v1976, %v3836
        %v4322 = vmul.f32 %v2441, %v4301
        %v4323 = vmul.f32 %v1050, %v2910
        %v4324 = vmul.f32 %v1515, %v3375
        %v4325 = vmul.f32 %v1980, %v3840
        %v4326 = vmul.f32 %v2445, %v4305
        %v4327 = vmul.f32 %v1054, %v2914
        %v4328 = vmul.f32 %v1519, %v3379
        %v4329 = vmul.f32 %v1984, %v3844
        %v4330 = vmul.f32 %v2449, %v4309
        %v4331 = vmul.f32 %v1058, %v2918
        %v4332 = vmul.f32 %v1523, %v3383
        %v4333 = vmul.f32 %v1988, %v3848
        %v4334 = vmul.f32 %v2453, %v4313
        %v4335 = vmul.f32 %v1062, %v2922
        %v4336 = vmul.f32 %v1527, %v3387
        %v4337 = vmul.f32 %v1992, %v3852
        %v4338 = vmul.f32 %v2457, %v4317
        %v4339 = vadd.f32 %v4319, %v4323
        %v4340 = vadd.f32 %v4339, %v4327
        %v4341 = vadd.f32 %v4340, %v4331
        %v4342 = vadd.f32 %v4341, %v4335
        %v4343 = vrot.slane %v4342, 4
        %v4344 = vadd.f32 %v4342, %v4343
        %v4345 = vrot.slane %v4344, 2
        %v4346 = vadd.f32 %v4344, %v4345
        %v4347 = vrot.slane %v4346, 1
        %v4348 = vadd.f32 %v4346, %v4347
        %v4349 = vadd.f32 %v4320, %v4324
        %v4350 = vadd.f32 %v4349, %v4328
        %v4351 = vadd.f32 %v4350, %v4332
        %v4352 = vadd.f32 %v4351, %v4336
        %v4353 = vrot.slane %v4352, 4
        %v4354 = vadd.f32 %v4352, %v4353
        %v4355 = vrot.slane %v4354, 2
        %v4356 = vadd.f32 %v4354, %v4355
        %v4357 = vrot.slane %v4356, 1
        %v4358 = vadd.f32 %v4356, %v4357
        %v4359 = vadd.f32 %v4321, %v4325
        %v4360 = vadd.f32 %v4359, %v4329
        %v4361 = vadd.f32 %v4360, %v4333
        %v4362 = vadd.f32 %v4361, %v4337
        %v4363 = vrot.slane %v4362, 4
        %v4364 = vadd.f32 %v4362, %v4363
        %v4365 = vrot.slane %v4364, 2
        %v4366 = vadd.f32 %v4364, %v4365
        %v4367 = vrot.slane %v4366, 1
        %v4368 = vadd.f32 %v4366, %v4367
        %v4369 = vadd.f32 %v4322, %v4326
        %v4370 = vadd.f32 %v4369, %v4330
        %v4371 = vadd.f32 %v4370, %v4334
        %v4372 = vadd.f32 %v4371, %v4338
        %v4373 = vrot.slane %v4372, 4
        %v4374 = vadd.f32 %v4372, %v4373
        %v4375 = vrot.slane %v4374, 2
        %v4376 = vadd.f32 %v4374, %v4375
        %v4377 = vrot.slane %v4376, 1
        %v4378 = vadd.f32 %v4376, %v4377
        %v4379 = vsub.f32 %v4348, %v4335
        %v4380 = vsub.f32 %v4358, %v4336
        %v4381 = vsub.f32 %v4368, %v4337
        %v4382 = vsub.f32 %v4378, %v4338
        %v4383 = vadd.f32 %v4379, %v1062
        %v4384 = vadd.f32 %v4380, %v1527
        %v4385 = vadd.f32 %v4381, %v1992
        %v4386 = vadd.f32 %v4382, %v2457
        %v4387 = vadd.f32 %v4383, %v2922
        %v4388 = vadd.f32 %v4384, %v3387
        %v4389 = vadd.f32 %v4385, %v3852
        %v4390 = vadd.f32 %v4386, %v4317
        %v4395 = vrot.slane %v4388, 7
        %v4396 = vrot.slane %v4389, 6
        %v4397 = vrot.slane %v4390, 5
        %vm4398 = vcmask 1040384
        %v4399 = vsel %vm4398, %v4387, %v4395
        %vm4400 = vcmask 1042434
        %v4401 = vsel %vm4400, %v4396, %v4397
        %vm4402 = vcmask 1041408
        %v4403 = vsel %vm4402, %v4399, %v4401
        %v4405 = vlaneseq
        %vm4406 = vcmp.ge.s32.totalorder %v4405, 0
        %vm4407 = vcmp.lt.s32.totalorder %v4405, 512
        %vm4408 = vmand %vm4406, %vm4407
        %4409 = vst.msk [vmem:[%s174] sm:$0xf] %vm4408, %v4403
        %s4410 = sand.u32 %s98, 1
        %s4411 = scalar_lea.sflag [#allocation3], %s4410
        %s4412 = sand.u32 %s98, 1
        %s4413 = smul.addr %s4412, 4
        %s4414 = scalar_lea.vmem [#allocation2], %s4413
        // Predicated region
        $region33: #{item_to_item_score.1} parent=31 // pred_check
          %p4415 = pneg %p108
        $region34: #{item_to_item_score.1} parent=31 // pred_check_branch
          %4417 = sbr.rel (%p4415) target = $region36
        $region35: #{item_to_item_score.1} parent=31 // pred_region
          %4419 = vsyncadd %s4411, 0
          %s4420 = smul.addr %s17, 4
          %s4421 = scalar_lea.hbm %s3, %s4420
          %s4423 = sshll.u32 %s4414, 4
          %s4424 = int_to_ptr.vmem [resolvable:$true] %s4423
          %s4425 = sshll.u32 %s4421, 4
          %s4426 = int_to_ptr.hbm [resolvable:$true] %s4425
          %4428 = dma.vmem_to_hbm [thread:$0]  %s4424, 64, %s4426, %s4411
        $region36: #{item_to_item_score.1} parent=31 // pred_fallthru
          _
      $region32: #{item_to_item_score.1} parent=5 // pred_fallthru
        _
      %p4429 = scmp.le.s32.totalorder 2, %s12
      // Predicated region
      $region37: #{item_to_item_score.1} parent=5 // pred_check
        %p4430 = pneg %p4429
      $region38: #{item_to_item_score.1} parent=5 // pred_check_branch
        %4432 = sbr.rel (%p4430) target = $region40
      $region39: #{item_to_item_score.1} parent=5 // pred_region
        %s4433 = ssub.s32 %s12, 2
        // Predicated region
        $region41: #{item_to_item_score.1} parent=39 // pred_check
          %p4434 = pneg %p114
        $region42: #{item_to_item_score.1} parent=39 // pred_check_branch
          %4436 = sbr.rel (%p4434) target = $region44
        $region43: #{item_to_item_score.1} parent=39 // pred_region
          %s4437 = sand.u32 %s99, 1
          %s4438 = scalar_lea.sflag [#allocation3], %s4437
          %s4439 = sand.u32 %s99, 1
          %s4440 = smul.addr %s4439, 4
          %s4441 = scalar_lea.vmem [#allocation2], %s4440
          %4443 = dma.done %s4438, 64
        $region44: #{item_to_item_score.1} parent=39 // pred_fallthru
          _
      $region40: #{item_to_item_score.1} parent=5 // pred_fallthru
        _
    $region6: #{item_to_item_score.1} parent=1 // loop_footer
      %s16 = sadd.s32 1, %s12
    $region7: #{item_to_item_score.1} parent=1 // loop_footer_branch
      %11 = sbr.rel target = $region3
    $region8: #{item_to_item_score.1} parent=1 // loop_exit
      _
    %4444 = vsyncpa [#allocation3], 1
    %s4445 = scalar_lea.sflag [#allocation3], 1
    %4446 = vsyncpa %s4445, 1

</llo_original>
